<compile_context>
chip_gen: v6e
topology: v6e:2x2x1
jax: 0.10.0
libtpu: 0.0.40
codegen_flags: <defaults>
</compile_context>

<pallas_src>
import math

import jax
import jax.numpy as jnp
from jax import lax
from jax.experimental import pallas as pl
from jax.experimental.pallas import tpu as pltpu


# ----------------------------- static layout --------------------------------
# Consolidated conv-weight buffer `wconv` (104, 256): (row0, row1, col0, col1)
_W1C = (0, 16, 0, 32)       # conv1t, dense Cin=1 im2col layout   (16, 32)
_W1S = (0, 16, 32, 48)      # conv1s 1x1                          (16, 16)
_W2C = (16, 40, 0, 240)     # conv2t im2col layout                (24, 240)
_W2S = (40, 64, 0, 24)      # conv2s 1x1                          (24, 24)
_W3C = (64, 104, 0, 120)    # conv3t im2col layout (padded to 40) (40, 120)
_W3S = (64, 104, 128, 168)  # conv3s 1x1 (padded to 40x40)        (40, 40)
_WCONV_SHAPE = (104, 256)
# Consolidated bias buffer `wbias` (40, 8): one bias vector per column.
_BCOL = dict(b1t=0, b1s=1, b2t=2, b2s=3, b3t=4, b3s=5, blin=6)

_K1, _K2, _K3 = 30, 15, 5   # temporal kernel sizes of conv1t/conv2t/conv3t


def _conv1_plan(K):
    """Plan the dense Cin=1 im2col for conv1t.

    Taps are packed 8 per sublane-group; group g is produced by ONE strided
    roll whose per-row roll amount is base_g + r (r = sublane index).  Bases
    are chosen so every per-row amount is a non-negative residue < W and no
    group wraps past W.  Returns (signed bases, column -> tap map, -1 meaning
    unused / zero-weight column).  The same plan drives both the in-kernel
    rolls and the host-side weight packing, so they cannot drift apart.
    """
    lp = (K - 1) // 2

    def runs(lo, hi):                       # cover [lo, hi] with runs of 8
        out, b = [], lo
        while True:
            b = min(b, hi - 7)
            out.append(b)
            if b + 7 >= hi:
                return out
            b += 8

    bases = []
    for lo, hi in ((0, lp), (lp - K + 1, -1)):   # non-negative / negative amts
        if lo <= hi:
            bases.extend(runs(lo, hi))
    col_tap, seen = [], set()
    for b in bases:
        for r in range(8):
            j = lp - (b + r)                # roll amount (b + r) supplies tap j
            if 0 <= j < K and j not in seen:
                seen.add(j)
                col_tap.append(j)
            else:
                col_tap.append(-1)          # duplicate/out-of-range -> zero wgt
    assert len(seen) == K
    return bases, col_tap


def _leaky(v):
    # nn.LeakyReLU default negative_slope = 0.01
    return jnp.where(v > 0, v, jnp.float32(0.01) * v)


# --------------------------------- kernel ------------------------------------

def _build_kernel(B, L, LP):
    W = B * LP
    bases1, _ = _conv1_plan(_K1)
    roll_bases1 = [b % W for b in bases1]
    G1 = len(roll_bases1)                   # 4 groups of 8 taps for K=30
    lp2, lp3 = (_K2 - 1) // 2, (_K3 - 1) // 2

    def slc(ref, spec):
        r0, r1, c0, c1 = spec
        return ref[r0:r1, c0:c1]

    def kernel(x_ref, bn_ref, wconv_ref, wbias_ref, wl_ref, y_ref, col_ref):
        f32 = jnp.float32
        scale = bn_ref[0]
        shift = bn_ref[1]

        # valid-lane mask: lanes [b*LP, b*LP + L) of each per-sample block.
        lane = lax.broadcasted_iota(jnp.int32, (1, W), 1)
        lmask = ((lane % LP) < L).astype(f32)                    # (1, W)

        # BatchNorm1d(1), eval mode.  Masking the shift keeps each block's
        # tail lanes exactly zero: those lanes are the 'same'-padding halo the
        # rolls below rely on (so BN cannot be folded into the conv weights).
        x0 = x_ref[...] * scale + shift * lmask                  # (8, W)

        # ---- block 1: conv1t (1->10, K=30).  Cin=1 => dense im2col: each
        # strided roll hands a different tap to each of the 8 sublanes.
        for g, base in enumerate(roll_bases1):
            col_ref[8 * g:8 * (g + 1), :] = pltpu.roll(
                x0, base, axis=1, stride=1, stride_axis=0)
        x1 = _leaky(jnp.dot(slc(wconv_ref, _W1C), col_ref[0:8 * G1, :],
                            preferred_element_type=f32)
                    + wbias_ref[0:16, 0:1])                      # (16, W)
        x1 = x1 * lmask                      # re-zero halo for conv2t rolls
        f1 = _leaky(jnp.dot(slc(wconv_ref, _W1S), x1,
                            preferred_element_type=f32)
                    + wbias_ref[0:16, 1:2])                      # (16, W)

        # ---- block 2: conv2t (10->20, K=15): taps streamed into VMEM scratch
        for j in range(_K2):
            sh = (lp2 - j) % W
            tap = x1 if sh == 0 else pltpu.roll(x1, sh, axis=1)
            col_ref[j * 16:(j + 1) * 16, :] = tap
        x2 = _leaky(jnp.dot(slc(wconv_ref, _W2C), col_ref[0:_K2 * 16, :],
                            preferred_element_type=f32)
                    + wbias_ref[0:24, 2:3])                      # (24, W)
        x2 = x2 * lmask                      # re-zero halo for conv3t rolls
        f2 = _leaky(jnp.dot(slc(wconv_ref, _W2S), x2,
                            preferred_element_type=f32)
                    + wbias_ref[0:24, 3:4])                      # (24, W)

        # ---- block 3: conv3t (20->34, rows padded to 40, K=5)
        for j in range(_K3):
            sh = (lp3 - j) % W
            tap = x2 if sh == 0 else pltpu.roll(x2, sh, axis=1)
            col_ref[j * 24:(j + 1) * 24, :] = tap
        x3 = _leaky(jnp.dot(slc(wconv_ref, _W3C), col_ref[0:_K3 * 24, :],
                            preferred_element_type=f32)
                    + wbias_ref[0:40, 4:5])                      # (40, W)
        f3 = _leaky(jnp.dot(slc(wconv_ref, _W3S), x3,
                            preferred_element_type=f32)
                    + wbias_ref[0:40, 5:6])                      # (40, W)

        # TODO(synk): nn.Dropout(0.5) is identity in eval mode; train-mode RNG
        #             dropout is not implemented.

        # ---- fused Linear(12800, 4) + Softmax(dim=1) ----
        # wl (4, 80, LP) is NOT tiled over the batch; the same block is reused
        # for every per-sample lane slice.  Processed in 8-channel chunks read
        # straight from the ref so no (4, 80, W) intermediate is ever live.
        # wl's zero rows / zero tail lanes neutralize padded-row and tail-lane
        # garbage in f1/f2/f3.
        accs = [jnp.zeros((4, LP), f32) for _ in range(B)]
        for fg, r0, C in ((f1, 0, 16), (f2, 16, 24), (f3, 40, 40)):
            for c0 in range(0, C, 8):
                wg = wl_ref[:, r0 + c0:r0 + c0 + 8, :]           # (4, 8, LP)
                for b in range(B):
                    fb = fg[c0:c0 + 8, b * LP:(b + 1) * LP]      # (8, LP)
                    accs[b] = accs[b] + jnp.sum(wg * fb[None, :, :], axis=1)
        logits = jnp.concatenate(
            [jnp.sum(a, axis=1, keepdims=True) for a in accs], axis=1)
        logits = logits + wbias_ref[0:4, 6:7]                    # (4, B)

        # Softmax over the 4 classes (sublane axis); output stays (4, B) so no
        # sublane->lane relayout is needed (wrapper transposes).
        m = jnp.max(logits, axis=0, keepdims=True)
        e = jnp.exp(logits - m)
        y_ref[...] = e / jnp.sum(e, axis=0, keepdims=True)

    return kernel


# ------------------------- wrapper-side weight packing ----------------------

def pack_params(p, L, LP):
    """One-time host-side packing of the PyTorch-layout parameters into the
    consolidated TPU-layout buffers the kernel consumes.  Call ONCE, outside
    the jitted per-call path."""
    f32 = jnp.float32

    def pack_temporal(w, cout_pad, cin_pad):
        # (Cout, Cin, K) -> (Cout_pad, K*Cin_pad); column j*Cin_pad + r holds
        # w[o, r, j], matching im2col rows j*Cin_pad + r = roll(x, lp - j)[r].
        cout, cin, K = w.shape
        wt = jnp.transpose(w, (0, 2, 1))
        wt = jnp.pad(wt, ((0, cout_pad - cout), (0, 0), (0, cin_pad - cin)))
        return wt.reshape(cout_pad, K * cin_pad).astype(f32)

    # conv1t: dense Cin=1 packing; column layout driven by _conv1_plan.
    _, col_tap = _conv1_plan(_K1)
    w1c = jnp.zeros((16, len(col_tap)), f32)
    for col, j in enumerate(col_tap):
        if j >= 0:
            w1c = w1c.at[0:10, col].set(p["w1t"][:, 0, j])

    w2c = pack_temporal(p["w2t"], 24, 16)        # (24, 240)
    w3c = pack_temporal(p["w3t"], 40, 24)        # (40, 120)

    def pad2(a, r, c):
        return jnp.pad(a, ((0, r - a.shape[0]), (0, c - a.shape[1]))).astype(f32)

    w1s = pad2(p["w1s"][:, :, 0], 16, 16)
    w2s = pad2(p["w2s"][:, :, 0], 24, 24)
    w3s = pad2(p["w3s"][:, :, 0], 40, 40)

    wconv = jnp.zeros(_WCONV_SHAPE, f32)
    for spec, w in ((_W1C, w1c), (_W1S, w1s), (_W2C, w2c),
                    (_W2S, w2s), (_W3C, w3c), (_W3S, w3s)):
        r0, r1, c0, c1 = spec
        wconv = wconv.at[r0:r1, c0:c1].set(w)

    wbias = jnp.zeros((40, 8), f32)
    for name in ("b1t", "b1s", "b2t", "b2s", "b3t", "b3s", "blin"):
        vec = p[name][:, 0]
        wbias = wbias.at[0:vec.shape[0], _BCOL[name]].set(vec)

    # Final linear: (4, 12800) -> (4, 80, LP); feature groups at 8-aligned row
    # offsets 0/16/40, zero lane tail L:LP, NOT tiled over the batch.
    Wr = p["Wlin"].reshape(4, 64, L)
    wl = jnp.zeros((4, 80, LP), f32)
    wl = wl.at[:, 0:10, :L].set(Wr[:, 0:10, :])
    wl = wl.at[:, 16:36, :L].set(Wr[:, 10:30, :])
    wl = wl.at[:, 40:74, :L].set(Wr[:, 30:64, :])

    return dict(wconv=wconv, wbias=wbias, wl=wl, bn=p["bn_ss"].astype(f32))


def feature_extractor3_pallas(x, packed, *, L=200, LP=256):
    """x: (B, 1, L) f32, packed: output of pack_params.  Returns (B, 4)."""
    B = x.shape[0]
    assert x.shape[1] == 1 and x.shape[2] == L
    assert LP % 128 == 0 and LP - L >= 16    # >= conv1 halo reach (15 lanes)
    W = B * LP

    # sample b -> lanes [b*LP, b*LP + L), zero tail; 8 identical rows so the
    # block-1 strided rolls can hand a different tap to every sublane.
    xr = jnp.pad(x[:, 0, :], ((0, 0), (0, LP - L))).reshape(1, W)
    xk = jnp.broadcast_to(xr, (8, W))

    vmem = pl.BlockSpec(memory_space=pltpu.MemorySpace.VMEM)
    smem = pl.BlockSpec(memory_space=pltpu.MemorySpace.SMEM)

    y = pl.pallas_call(
        _build_kernel(B, L, LP),
        out_shape=jax.ShapeDtypeStruct((4, B), jnp.float32),
        in_specs=[vmem, smem, vmem, vmem, vmem],
        out_specs=vmem,
        scratch_shapes=[pltpu.VMEM((_K2 * 16, W), jnp.float32)],  # im2col scratch
    )(xk, packed["bn"], packed["wconv"], packed["wbias"], packed["wl"])
    return y.T                               # (B, 4); tiny wrapper transpose


# ---------------- pure-JAX reference (for correctness check) ----------------

def _ref_conv_same(z, w, b):
    K = w.shape[2]
    lp = (K - 1) // 2
    rp = (K - 1) - lp
    zp = jnp.pad(z, ((0, 0), (0, 0), (lp, rp)))
    y = lax.conv_general_dilated(zp, w, (1,), 'VALID',
                                 dimension_numbers=('NCH', 'OIH', 'NCH'))
    return y + b.reshape(1, -1, 1)


def feature_extractor3_ref(x, p):
    leaky = lambda v: jnp.where(v > 0, v, 0.01 * v)
    xb = x * p["bn_ss"][0] + p["bn_ss"][1]
    x1 = leaky(_ref_conv_same(xb, p["w1t"], p["b1t"][:, 0]))
    f1 = leaky(_ref_conv_same(x1, p["w1s"], p["b1s"][:, 0]))
    x2 = leaky(_ref_conv_same(x1, p["w2t"], p["b2t"][:, 0]))
    f2 = leaky(_ref_conv_same(x2, p["w2s"], p["b2s"][:, 0]))
    x3 = leaky(_ref_conv_same(x2, p["w3t"], p["b3t"][:, 0]))
    f3 = leaky(_ref_conv_same(x3, p["w3s"], p["b3s"][:, 0]))
    feat = jnp.concatenate([f1, f2, f3], axis=1)               # (B, 64, L)
    flat = feat.reshape(feat.shape[0], -1)                     # (B, 12800)
    logits = flat @ p["Wlin"].T + p["blin"][:, 0]
    logits = logits - logits.max(axis=1, keepdims=True)
    e = jnp.exp(logits)
    return e / e.sum(axis=1, keepdims=True)


# ---------------------------- parameter init --------------------------------

def init_params(key, L):
    ks = jax.random.split(key, 16)

    def conv_init(kw, kb, cout, cin, k):
        bound = 1.0 / math.sqrt(cin * k)
        w = jax.random.uniform(kw, (cout, cin, k), jnp.float32, -bound, bound)
        b = jax.random.uniform(kb, (cout, 1), jnp.float32, -bound, bound)
        return w, b

    w1t, b1t = conv_init(ks[0], ks[1], 10, 1, 30)
    w1s, b1s = conv_init(ks[2], ks[3], 10, 10, 1)
    w2t, b2t = conv_init(ks[4], ks[5], 20, 10, 15)
    w2s, b2s = conv_init(ks[6], ks[7], 20, 20, 1)
    w3t, b3t = conv_init(ks[8], ks[9], 34, 20, 5)
    w3s, b3s = conv_init(ks[10], ks[11], 34, 34, 1)

    in_feat = 64 * L  # = 12800 for L = 200
    bound = 1.0 / math.sqrt(in_feat)
    Wlin = jax.random.uniform(ks[12], (4, in_feat), jnp.float32, -bound, bound)
    blin = jax.random.uniform(ks[13], (4, 1), jnp.float32, -bound, bound)

    # BatchNorm1d(1), eval mode: y = (x - mean) / sqrt(var + eps) * gamma + beta
    gamma = jax.random.uniform(ks[14], (), jnp.float32, 0.5, 1.5)
    beta = jax.random.uniform(ks[15], (), jnp.float32, -0.5, 0.5)
    running_mean = jnp.float32(0.1)
    running_var = jnp.float32(0.9)
    eps = jnp.float32(1e-5)
    scale = gamma / jnp.sqrt(running_var + eps)
    shift = beta - running_mean * scale
    bn_ss = jnp.stack([scale, shift]).astype(jnp.float32)       # (2,) -> SMEM

    return dict(
        w1t=w1t, b1t=b1t, w1s=w1s, b1s=b1s,
        w2t=w2t, b2t=b2t, w2s=w2s, b2s=b2s,
        w3t=w3t, b3t=b3t, w3s=w3s, b3s=b3s,
        Wlin=Wlin, blin=blin, bn_ss=bn_ss,
    )


if __name__ == "__main__":
    key = jax.random.PRNGKey(0)
    kx, kp = jax.random.split(key)

    # Linear(12800, 4) implies 64 channels * L = 12800  =>  L = 200
    B, L, LP = 2, 200, 256
    x = jax.random.normal(kx, (B, 1, L), jnp.float32)
    params = init_params(kp, L)

    # One-time weight packing, hoisted OUT of the jitted inference call.
    packed = pack_params(params, L, LP)

    fe3 = jax.jit(lambda xx, pk: feature_extractor3_pallas(xx, pk, L=L, LP=LP))
    y = fe3(x, packed)
    y = jax.block_until_ready(y)

    y_ref = feature_extractor3_ref(x, params)
    assert y.shape == (B, 4)
    assert bool(jnp.allclose(jnp.sum(y, axis=1), 1.0, atol=1e-4))
    assert bool(jnp.allclose(y, y_ref, atol=2e-4, rtol=1e-3))

    print("KERNEL_OK")
</pallas_src>

<mosaic_0001>
module attributes {stable_mosaic.version = 11 : i64} {
  func.func @kernel(%arg0: memref<8x512xf32, #tpu.memory_space<vmem>>, %arg1: memref<2xf32, #tpu.memory_space<smem>>, %arg2: memref<104x256xf32, #tpu.memory_space<vmem>>, %arg3: memref<40x8xf32, #tpu.memory_space<vmem>>, %arg4: memref<4x80x256xf32, #tpu.memory_space<vmem>>, %arg5: memref<4x2xf32, #tpu.memory_space<vmem>>, %arg6: memref<240x512xf32, #tpu.memory_space<vmem>>) attributes {dimension_semantics = [], scalar_prefetch = 0 : i64, scratch_operands = 1 : i64, tpu.core_type = #tpu.core_type<tc>} {
    %c0 = arith.constant 0 : index
    %0 = memref.load %arg1[%c0] : memref<2xf32, #tpu.memory_space<smem>>
    %c1 = arith.constant 1 : index
    %1 = memref.load %arg1[%c1] : memref<2xf32, #tpu.memory_space<smem>>
    %2 = tpu.iota {dimensions = array<i32: 1>} : vector<1x512xi32>
    %c256_i32 = arith.constant 256 : i32
    %c0_i32 = arith.constant 0 : i32
    %3 = arith.cmpi eq, %c256_i32, %c0_i32 : i32
    %c1_i32 = arith.constant 1 : i32
    %4 = arith.select %3, %c1_i32, %c256_i32 : i32
    %5 = vector.broadcast %4 : i32 to vector<1x512xi32>
    %6 = arith.remsi %2, %5 : vector<1x512xi32>
    %c0_i32_0 = arith.constant 0 : i32
    %7 = vector.broadcast %c0_i32_0 : i32 to vector<1x512xi32>
    %8 = arith.cmpi ne, %6, %7 : vector<1x512xi32>
    %c0_i32_1 = arith.constant 0 : i32
    %9 = vector.broadcast %c0_i32_1 : i32 to vector<1x512xi32>
    %10 = arith.cmpi slt, %6, %9 : vector<1x512xi32>
    %c0_i32_2 = arith.constant 0 : i32
    %11 = arith.cmpi slt, %4, %c0_i32_2 : i32
    %12 = vector.broadcast %11 : i1 to vector<1x512xi1>
    %13 = vector.broadcast %12 : vector<1x512xi1> to vector<1x512xi1>
    %14 = arith.xori %10, %13 : vector<1x512xi1>
    %15 = arith.andi %14, %8 : vector<1x512xi1>
    %16 = vector.broadcast %4 : i32 to vector<1x512xi32>
    %17 = arith.addi %6, %16 : vector<1x512xi32>
    %18 = arith.select %15, %17, %6 : vector<1x512xi1>, vector<1x512xi32>
    %c200_i32 = arith.constant 200 : i32
    %19 = vector.broadcast %c200_i32 : i32 to vector<1x512xi32>
    %20 = arith.cmpi slt, %18, %19 : vector<1x512xi32>
    %21 = arith.extui %20 : vector<1x512xi1> to vector<1x512xi32>
    %22 = arith.sitofp %21 : vector<1x512xi32> to vector<1x512xf32>
    %c0_3 = arith.constant 0 : index
    %c0_4 = arith.constant 0 : index
    %23 = vector.load %arg0[%c0_3, %c0_4] : memref<8x512xf32, #tpu.memory_space<vmem>>, vector<8x512xf32>
    %24 = vector.broadcast %0 : f32 to vector<8x512xf32>
    %25 = arith.mulf %23, %24 : vector<8x512xf32>
    %26 = vector.broadcast %1 : f32 to vector<1x512xf32>
    %27 = arith.mulf %26, %22 : vector<1x512xf32>
    %28 = vector.broadcast %27 : vector<1x512xf32> to vector<8x512xf32>
    %29 = arith.addf %25, %28 : vector<8x512xf32>
    %c0_i32_5 = arith.constant 0 : i32
    %30 = tpu.dynamic_rotate %29 by %c0_i32_5 dim 1 {stride = 1 : si32, stride_dimension = 0 : si32} : vector<8x512xf32>, i32 -> vector<8x512xf32>
    %c0_6 = arith.constant 0 : index
    %c0_7 = arith.constant 0 : index
    %31 = vector.load %arg6[%c0_6, %c0_7] : memref<240x512xf32, #tpu.memory_space<vmem>>, vector<8x512xf32>
    tpu.vector_store %arg6[%c0_6, %c0_7], %30 {strides = array<i32>} : memref<240x512xf32, #tpu.memory_space<vmem>>, vector<8x512xf32>,
    %c7_i32 = arith.constant 7 : i32
    %32 = tpu.dynamic_rotate %29 by %c7_i32 dim 1 {stride = 1 : si32, stride_dimension = 0 : si32} : vector<8x512xf32>, i32 -> vector<8x512xf32>
    %c8 = arith.constant 8 : index
    %c0_8 = arith.constant 0 : index
    %33 = vector.load %arg6[%c8, %c0_8] : memref<240x512xf32, #tpu.memory_space<vmem>>, vector<8x512xf32>
    tpu.vector_store %arg6[%c8, %c0_8], %32 {strides = array<i32>} : memref<240x512xf32, #tpu.memory_space<vmem>>, vector<8x512xf32>,
    %c497_i32 = arith.constant 497 : i32
    %34 = tpu.dynamic_rotate %29 by %c497_i32 dim 1 {stride = 1 : si32, stride_dimension = 0 : si32} : vector<8x512xf32>, i32 -> vector<8x512xf32>
    %c16 = arith.constant 16 : index
    %c0_9 = arith.constant 0 : index
    %35 = vector.load %arg6[%c16, %c0_9] : memref<240x512xf32, #tpu.memory_space<vmem>>, vector<8x512xf32>
    tpu.vector_store %arg6[%c16, %c0_9], %34 {strides = array<i32>} : memref<240x512xf32, #tpu.memory_space<vmem>>, vector<8x512xf32>,
    %c504_i32 = arith.constant 504 : i32
    %36 = tpu.dynamic_rotate %29 by %c504_i32 dim 1 {stride = 1 : si32, stride_dimension = 0 : si32} : vector<8x512xf32>, i32 -> vector<8x512xf32>
    %c24 = arith.constant 24 : index
    %c0_10 = arith.constant 0 : index
    %37 = vector.load %arg6[%c24, %c0_10] : memref<240x512xf32, #tpu.memory_space<vmem>>, vector<8x512xf32>
    tpu.vector_store %arg6[%c24, %c0_10], %36 {strides = array<i32>} : memref<240x512xf32, #tpu.memory_space<vmem>>, vector<8x512xf32>,
    %c0_11 = arith.constant 0 : index
    %c0_12 = arith.constant 0 : index
    %38 = vector.load %arg2[%c0_11, %c0_12] : memref<104x256xf32, #tpu.memory_space<vmem>>, vector<16x32xf32>
    %c0_13 = arith.constant 0 : index
    %c0_14 = arith.constant 0 : index
    %39 = vector.load %arg6[%c0_13, %c0_14] : memref<240x512xf32, #tpu.memory_space<vmem>>, vector<32x512xf32>
    %cst = arith.constant dense<0.000000e+00> : vector<16x512xf32>
    %40 = tpu.matmul %38, %39, %cst {dimension_numbers = #tpu.dot_dimension_numbers<[1], [0], [0], [1], [0, 0, 1, 1], [], []>} : vector<16x32xf32>, vector<32x512xf32>, vector<16x512xf32> -> vector<16x512xf32>
    %c0_15 = arith.constant 0 : index
    %c0_16 = arith.constant 0 : index
    %41 = vector.load %arg3[%c0_15, %c0_16] : memref<40x8xf32, #tpu.memory_space<vmem>>, vector<16x1xf32>
    %42 = vector.broadcast %41 : vector<16x1xf32> to vector<16x512xf32>
    %43 = arith.addf %40, %42 : vector<16x512xf32>
    %cst_17 = arith.constant 0.000000e+00 : f32
    %44 = vector.broadcast %cst_17 : f32 to vector<16x512xf32>
    %45 = arith.cmpf ogt, %43, %44 : vector<16x512xf32>
    %cst_18 = arith.constant 0.00999999977 : f32
    %46 = vector.broadcast %cst_18 : f32 to vector<16x512xf32>
    %47 = arith.mulf %46, %43 : vector<16x512xf32>
    %48 = arith.select %45, %43, %47 : vector<16x512xi1>, vector<16x512xf32>
    %49 = vector.broadcast %22 : vector<1x512xf32> to vector<16x512xf32>
    %50 = arith.mulf %48, %49 : vector<16x512xf32>
    %c0_19 = arith.constant 0 : index
    %c32 = arith.constant 32 : index
    %51 = vector.load %arg2[%c0_19, %c32] : memref<104x256xf32, #tpu.memory_space<vmem>>, vector<16x16xf32>
    %cst_20 = arith.constant dense<0.000000e+00> : vector<16x512xf32>
    %52 = tpu.matmul %51, %50, %cst_20 {dimension_numbers = #tpu.dot_dimension_numbers<[1], [0], [0], [1], [0, 0, 1, 1], [], []>} : vector<16x16xf32>, vector<16x512xf32>, vector<16x512xf32> -> vector<16x512xf32>
    %c0_21 = arith.constant 0 : index
    %c1_22 = arith.constant 1 : index
    %53 = vector.load %arg3[%c0_21, %c1_22] : memref<40x8xf32, #tpu.memory_space<vmem>>, vector<16x1xf32>
    %54 = vector.broadcast %53 : vector<16x1xf32> to vector<16x512xf32>
    %55 = arith.addf %52, %54 : vector<16x512xf32>
    %cst_23 = arith.constant 0.000000e+00 : f32
    %56 = vector.broadcast %cst_23 : f32 to vector<16x512xf32>
    %57 = arith.cmpf ogt, %55, %56 : vector<16x512xf32>
    %cst_24 = arith.constant 0.00999999977 : f32
    %58 = vector.broadcast %cst_24 : f32 to vector<16x512xf32>
    %59 = arith.mulf %58, %55 : vector<16x512xf32>
    %60 = arith.select %57, %55, %59 : vector<16x512xi1>, vector<16x512xf32>
    %c7_i32_25 = arith.constant 7 : i32
    %61 = tpu.dynamic_rotate %50 by %c7_i32_25 dim 1 : vector<16x512xf32>, i32 -> vector<16x512xf32>
    %c0_26 = arith.constant 0 : index
    %c0_27 = arith.constant 0 : index
    %62 = vector.load %arg6[%c0_26, %c0_27] : memref<240x512xf32, #tpu.memory_space<vmem>>, vector<16x512xf32>
    tpu.vector_store %arg6[%c0_26, %c0_27], %61 {strides = array<i32>} : memref<240x512xf32, #tpu.memory_space<vmem>>, vector<16x512xf32>,
    %c6_i32 = arith.constant 6 : i32
    %63 = tpu.dynamic_rotate %50 by %c6_i32 dim 1 : vector<16x512xf32>, i32 -> vector<16x512xf32>
    %c16_28 = arith.constant 16 : index
    %c0_29 = arith.constant 0 : index
    %64 = vector.load %arg6[%c16_28, %c0_29] : memref<240x512xf32, #tpu.memory_space<vmem>>, vector<16x512xf32>
    tpu.vector_store %arg6[%c16_28, %c0_29], %63 {strides = array<i32>} : memref<240x512xf32, #tpu.memory_space<vmem>>, vector<16x512xf32>,
    %c5_i32 = arith.constant 5 : i32
    %65 = tpu.dynamic_rotate %50 by %c5_i32 dim 1 : vector<16x512xf32>, i32 -> vector<16x512xf32>
    %c32_30 = arith.constant 32 : index
    %c0_31 = arith.constant 0 : index
    %66 = vector.load %arg6[%c32_30, %c0_31] : memref<240x512xf32, #tpu.memory_space<vmem>>, vector<16x512xf32>
    tpu.vector_store %arg6[%c32_30, %c0_31], %65 {strides = array<i32>} : memref<240x512xf32, #tpu.memory_space<vmem>>, vector<16x512xf32>,
    %c4_i32 = arith.constant 4 : i32
    %67 = tpu.dynamic_rotate %50 by %c4_i32 dim 1 : vector<16x512xf32>, i32 -> vector<16x512xf32>
    %c48 = arith.constant 48 : index
    %c0_32 = arith.constant 0 : index
    %68 = vector.load %arg6[%c48, %c0_32] : memref<240x512xf32, #tpu.memory_space<vmem>>, vector<16x512xf32>
    tpu.vector_store %arg6[%c48, %c0_32], %67 {strides = array<i32>} : memref<240x512xf32, #tpu.memory_space<vmem>>, vector<16x512xf32>,
    %c3_i32 = arith.constant 3 : i32
    %69 = tpu.dynamic_rotate %50 by %c3_i32 dim 1 : vector<16x512xf32>, i32 -> vector<16x512xf32>
    %c64 = arith.constant 64 : index
    %c0_33 = arith.constant 0 : index
    %70 = vector.load %arg6[%c64, %c0_33] : memref<240x512xf32, #tpu.memory_space<vmem>>, vector<16x512xf32>
    tpu.vector_store %arg6[%c64, %c0_33], %69 {strides = array<i32>} : memref<240x512xf32, #tpu.memory_space<vmem>>, vector<16x512xf32>,
    %c2_i32 = arith.constant 2 : i32
    %71 = tpu.dynamic_rotate %50 by %c2_i32 dim 1 : vector<16x512xf32>, i32 -> vector<16x512xf32>
    %c80 = arith.constant 80 : index
    %c0_34 = arith.constant 0 : index
    %72 = vector.load %arg6[%c80, %c0_34] : memref<240x512xf32, #tpu.memory_space<vmem>>, vector<16x512xf32>
    tpu.vector_store %arg6[%c80, %c0_34], %71 {strides = array<i32>} : memref<240x512xf32, #tpu.memory_space<vmem>>, vector<16x512xf32>,
    %c1_i32_35 = arith.constant 1 : i32
    %73 = tpu.dynamic_rotate %50 by %c1_i32_35 dim 1 : vector<16x512xf32>, i32 -> vector<16x512xf32>
    %c96 = arith.constant 96 : index
    %c0_36 = arith.constant 0 : index
    %74 = vector.load %arg6[%c96, %c0_36] : memref<240x512xf32, #tpu.memory_space<vmem>>, vector<16x512xf32>
    tpu.vector_store %arg6[%c96, %c0_36], %73 {strides = array<i32>} : memref<240x512xf32, #tpu.memory_space<vmem>>, vector<16x512xf32>,
    %c112 = arith.constant 112 : index
    %c0_37 = arith.constant 0 : index
    %75 = vector.load %arg6[%c112, %c0_37] : memref<240x512xf32, #tpu.memory_space<vmem>>, vector<16x512xf32>
    tpu.vector_store %arg6[%c112, %c0_37], %50 {strides = array<i32>} : memref<240x512xf32, #tpu.memory_space<vmem>>, vector<16x512xf32>,
    %c511_i32 = arith.constant 511 : i32
    %76 = tpu.dynamic_rotate %50 by %c511_i32 dim 1 : vector<16x512xf32>, i32 -> vector<16x512xf32>
    %c128 = arith.constant 128 : index
    %c0_38 = arith.constant 0 : index
    %77 = vector.load %arg6[%c128, %c0_38] : memref<240x512xf32, #tpu.memory_space<vmem>>, vector<16x512xf32>
    tpu.vector_store %arg6[%c128, %c0_38], %76 {strides = array<i32>} : memref<240x512xf32, #tpu.memory_space<vmem>>, vector<16x512xf32>,
    %c510_i32 = arith.constant 510 : i32
    %78 = tpu.dynamic_rotate %50 by %c510_i32 dim 1 : vector<16x512xf32>, i32 -> vector<16x512xf32>
    %c144 = arith.constant 144 : index
    %c0_39 = arith.constant 0 : index
    %79 = vector.load %arg6[%c144, %c0_39] : memref<240x512xf32, #tpu.memory_space<vmem>>, vector<16x512xf32>
    tpu.vector_store %arg6[%c144, %c0_39], %78 {strides = array<i32>} : memref<240x512xf32, #tpu.memory_space<vmem>>, vector<16x512xf32>,
    %c509_i32 = arith.constant 509 : i32
    %80 = tpu.dynamic_rotate %50 by %c509_i32 dim 1 : vector<16x512xf32>, i32 -> vector<16x512xf32>
    %c160 = arith.constant 160 : index
    %c0_40 = arith.constant 0 : index
    %81 = vector.load %arg6[%c160, %c0_40] : memref<240x512xf32, #tpu.memory_space<vmem>>, vector<16x512xf32>
    tpu.vector_store %arg6[%c160, %c0_40], %80 {strides = array<i32>} : memref<240x512xf32, #tpu.memory_space<vmem>>, vector<16x512xf32>,
    %c508_i32 = arith.constant 508 : i32
    %82 = tpu.dynamic_rotate %50 by %c508_i32 dim 1 : vector<16x512xf32>, i32 -> vector<16x512xf32>
    %c176 = arith.constant 176 : index
    %c0_41 = arith.constant 0 : index
    %83 = vector.load %arg6[%c176, %c0_41] : memref<240x512xf32, #tpu.memory_space<vmem>>, vector<16x512xf32>
    tpu.vector_store %arg6[%c176, %c0_41], %82 {strides = array<i32>} : memref<240x512xf32, #tpu.memory_space<vmem>>, vector<16x512xf32>,
    %c507_i32 = arith.constant 507 : i32
    %84 = tpu.dynamic_rotate %50 by %c507_i32 dim 1 : vector<16x512xf32>, i32 -> vector<16x512xf32>
    %c192 = arith.constant 192 : index
    %c0_42 = arith.constant 0 : index
    %85 = vector.load %arg6[%c192, %c0_42] : memref<240x512xf32, #tpu.memory_space<vmem>>, vector<16x512xf32>
    tpu.vector_store %arg6[%c192, %c0_42], %84 {strides = array<i32>} : memref<240x512xf32, #tpu.memory_space<vmem>>, vector<16x512xf32>,
    %c506_i32 = arith.constant 506 : i32
    %86 = tpu.dynamic_rotate %50 by %c506_i32 dim 1 : vector<16x512xf32>, i32 -> vector<16x512xf32>
    %c208 = arith.constant 208 : index
    %c0_43 = arith.constant 0 : index
    %87 = vector.load %arg6[%c208, %c0_43] : memref<240x512xf32, #tpu.memory_space<vmem>>, vector<16x512xf32>
    tpu.vector_store %arg6[%c208, %c0_43], %86 {strides = array<i32>} : memref<240x512xf32, #tpu.memory_space<vmem>>, vector<16x512xf32>,
    %c505_i32 = arith.constant 505 : i32
    %88 = tpu.dynamic_rotate %50 by %c505_i32 dim 1 : vector<16x512xf32>, i32 -> vector<16x512xf32>
    %c224 = arith.constant 224 : index
    %c0_44 = arith.constant 0 : index
    %89 = vector.load %arg6[%c224, %c0_44] : memref<240x512xf32, #tpu.memory_space<vmem>>, vector<16x512xf32>
    tpu.vector_store %arg6[%c224, %c0_44], %88 {strides = array<i32>} : memref<240x512xf32, #tpu.memory_space<vmem>>, vector<16x512xf32>,
    %c16_45 = arith.constant 16 : index
    %c0_46 = arith.constant 0 : index
    %90 = vector.load %arg2[%c16_45, %c0_46] : memref<104x256xf32, #tpu.memory_space<vmem>>, vector<24x240xf32>
    %c0_47 = arith.constant 0 : index
    %c0_48 = arith.constant 0 : index
    %91 = vector.load %arg6[%c0_47, %c0_48] : memref<240x512xf32, #tpu.memory_space<vmem>>, vector<240x512xf32>
    %cst_49 = arith.constant dense<0.000000e+00> : vector<24x512xf32>
    %92 = tpu.matmul %90, %91, %cst_49 {dimension_numbers = #tpu.dot_dimension_numbers<[1], [0], [0], [1], [0, 0, 1, 1], [], []>} : vector<24x240xf32>, vector<240x512xf32>, vector<24x512xf32> -> vector<24x512xf32>
    %c0_50 = arith.constant 0 : index
    %c2 = arith.constant 2 : index
    %93 = vector.load %arg3[%c0_50, %c2] : memref<40x8xf32, #tpu.memory_space<vmem>>, vector<24x1xf32>
    %94 = vector.broadcast %93 : vector<24x1xf32> to vector<24x512xf32>
    %95 = arith.addf %92, %94 : vector<24x512xf32>
    %cst_51 = arith.constant 0.000000e+00 : f32
    %96 = vector.broadcast %cst_51 : f32 to vector<24x512xf32>
    %97 = arith.cmpf ogt, %95, %96 : vector<24x512xf32>
    %cst_52 = arith.constant 0.00999999977 : f32
    %98 = vector.broadcast %cst_52 : f32 to vector<24x512xf32>
    %99 = arith.mulf %98, %95 : vector<24x512xf32>
    %100 = arith.select %97, %95, %99 : vector<24x512xi1>, vector<24x512xf32>
    %101 = vector.broadcast %22 : vector<1x512xf32> to vector<24x512xf32>
    %102 = arith.mulf %100, %101 : vector<24x512xf32>
    %c40 = arith.constant 40 : index
    %c0_53 = arith.constant 0 : index
    %103 = vector.load %arg2[%c40, %c0_53] : memref<104x256xf32, #tpu.memory_space<vmem>>, vector<24x24xf32>
    %cst_54 = arith.constant dense<0.000000e+00> : vector<24x512xf32>
    %104 = tpu.matmul %103, %102, %cst_54 {dimension_numbers = #tpu.dot_dimension_numbers<[1], [0], [0], [1], [0, 0, 1, 1], [], []>} : vector<24x24xf32>, vector<24x512xf32>, vector<24x512xf32> -> vector<24x512xf32>
    %c0_55 = arith.constant 0 : index
    %c3 = arith.constant 3 : index
    %105 = vector.load %arg3[%c0_55, %c3] : memref<40x8xf32, #tpu.memory_space<vmem>>, vector<24x1xf32>
    %106 = vector.broadcast %105 : vector<24x1xf32> to vector<24x512xf32>
    %107 = arith.addf %104, %106 : vector<24x512xf32>
    %cst_56 = arith.constant 0.000000e+00 : f32
    %108 = vector.broadcast %cst_56 : f32 to vector<24x512xf32>
    %109 = arith.cmpf ogt, %107, %108 : vector<24x512xf32>
    %cst_57 = arith.constant 0.00999999977 : f32
    %110 = vector.broadcast %cst_57 : f32 to vector<24x512xf32>
    %111 = arith.mulf %110, %107 : vector<24x512xf32>
    %112 = arith.select %109, %107, %111 : vector<24x512xi1>, vector<24x512xf32>
    %c2_i32_58 = arith.constant 2 : i32
    %113 = tpu.dynamic_rotate %102 by %c2_i32_58 dim 1 : vector<24x512xf32>, i32 -> vector<24x512xf32>
    %c0_59 = arith.constant 0 : index
    %c0_60 = arith.constant 0 : index
    %114 = vector.load %arg6[%c0_59, %c0_60] : memref<240x512xf32, #tpu.memory_space<vmem>>, vector<24x512xf32>
    tpu.vector_store %arg6[%c0_59, %c0_60], %113 {strides = array<i32>} : memref<240x512xf32, #tpu.memory_space<vmem>>, vector<24x512xf32>,
    %c1_i32_61 = arith.constant 1 : i32
    %115 = tpu.dynamic_rotate %102 by %c1_i32_61 dim 1 : vector<24x512xf32>, i32 -> vector<24x512xf32>
    %c24_62 = arith.constant 24 : index
    %c0_63 = arith.constant 0 : index
    %116 = vector.load %arg6[%c24_62, %c0_63] : memref<240x512xf32, #tpu.memory_space<vmem>>, vector<24x512xf32>
    tpu.vector_store %arg6[%c24_62, %c0_63], %115 {strides = array<i32>} : memref<240x512xf32, #tpu.memory_space<vmem>>, vector<24x512xf32>,
    %c48_64 = arith.constant 48 : index
    %c0_65 = arith.constant 0 : index
    %117 = vector.load %arg6[%c48_64, %c0_65] : memref<240x512xf32, #tpu.memory_space<vmem>>, vector<24x512xf32>
    tpu.vector_store %arg6[%c48_64, %c0_65], %102 {strides = array<i32>} : memref<240x512xf32, #tpu.memory_space<vmem>>, vector<24x512xf32>,
    %c511_i32_66 = arith.constant 511 : i32
    %118 = tpu.dynamic_rotate %102 by %c511_i32_66 dim 1 : vector<24x512xf32>, i32 -> vector<24x512xf32>
    %c72 = arith.constant 72 : index
    %c0_67 = arith.constant 0 : index
    %119 = vector.load %arg6[%c72, %c0_67] : memref<240x512xf32, #tpu.memory_space<vmem>>, vector<24x512xf32>
    tpu.vector_store %arg6[%c72, %c0_67], %118 {strides = array<i32>} : memref<240x512xf32, #tpu.memory_space<vmem>>, vector<24x512xf32>,
    %c510_i32_68 = arith.constant 510 : i32
    %120 = tpu.dynamic_rotate %102 by %c510_i32_68 dim 1 : vector<24x512xf32>, i32 -> vector<24x512xf32>
    %c96_69 = arith.constant 96 : index
    %c0_70 = arith.constant 0 : index
    %121 = vector.load %arg6[%c96_69, %c0_70] : memref<240x512xf32, #tpu.memory_space<vmem>>, vector<24x512xf32>
    tpu.vector_store %arg6[%c96_69, %c0_70], %120 {strides = array<i32>} : memref<240x512xf32, #tpu.memory_space<vmem>>, vector<24x512xf32>,
    %c64_71 = arith.constant 64 : index
    %c0_72 = arith.constant 0 : index
    %122 = vector.load %arg2[%c64_71, %c0_72] : memref<104x256xf32, #tpu.memory_space<vmem>>, vector<40x120xf32>
    %c0_73 = arith.constant 0 : index
    %c0_74 = arith.constant 0 : index
    %123 = vector.load %arg6[%c0_73, %c0_74] : memref<240x512xf32, #tpu.memory_space<vmem>>, vector<120x512xf32>
    %cst_75 = arith.constant dense<0.000000e+00> : vector<40x512xf32>
    %124 = tpu.matmul %122, %123, %cst_75 {dimension_numbers = #tpu.dot_dimension_numbers<[1], [0], [0], [1], [0, 0, 1, 1], [], []>} : vector<40x120xf32>, vector<120x512xf32>, vector<40x512xf32> -> vector<40x512xf32>
    %c0_76 = arith.constant 0 : index
    %c4 = arith.constant 4 : index
    %125 = vector.load %arg3[%c0_76, %c4] : memref<40x8xf32, #tpu.memory_space<vmem>>, vector<40x1xf32>
    %126 = vector.broadcast %125 : vector<40x1xf32> to vector<40x512xf32>
    %127 = arith.addf %124, %126 : vector<40x512xf32>
    %cst_77 = arith.constant 0.000000e+00 : f32
    %128 = vector.broadcast %cst_77 : f32 to vector<40x512xf32>
    %129 = arith.cmpf ogt, %127, %128 : vector<40x512xf32>
    %cst_78 = arith.constant 0.00999999977 : f32
    %130 = vector.broadcast %cst_78 : f32 to vector<40x512xf32>
    %131 = arith.mulf %130, %127 : vector<40x512xf32>
    %132 = arith.select %129, %127, %131 : vector<40x512xi1>, vector<40x512xf32>
    %c64_79 = arith.constant 64 : index
    %c128_80 = arith.constant 128 : index
    %133 = vector.load %arg2[%c64_79, %c128_80] : memref<104x256xf32, #tpu.memory_space<vmem>>, vector<40x40xf32>
    %cst_81 = arith.constant dense<0.000000e+00> : vector<40x512xf32>
    %134 = tpu.matmul %133, %132, %cst_81 {dimension_numbers = #tpu.dot_dimension_numbers<[1], [0], [0], [1], [0, 0, 1, 1], [], []>} : vector<40x40xf32>, vector<40x512xf32>, vector<40x512xf32> -> vector<40x512xf32>
    %c0_82 = arith.constant 0 : index
    %c5 = arith.constant 5 : index
    %135 = vector.load %arg3[%c0_82, %c5] : memref<40x8xf32, #tpu.memory_space<vmem>>, vector<40x1xf32>
    %136 = vector.broadcast %135 : vector<40x1xf32> to vector<40x512xf32>
    %137 = arith.addf %134, %136 : vector<40x512xf32>
    %cst_83 = arith.constant 0.000000e+00 : f32
    %138 = vector.broadcast %cst_83 : f32 to vector<40x512xf32>
    %139 = arith.cmpf ogt, %137, %138 : vector<40x512xf32>
    %cst_84 = arith.constant 0.00999999977 : f32
    %140 = vector.broadcast %cst_84 : f32 to vector<40x512xf32>
    %141 = arith.mulf %140, %137 : vector<40x512xf32>
    %142 = arith.select %139, %137, %141 : vector<40x512xi1>, vector<40x512xf32>
    %cst_85 = arith.constant 0.000000e+00 : f32
    %143 = vector.broadcast %cst_85 : f32 to vector<4x256xf32>
    %cst_86 = arith.constant 0.000000e+00 : f32
    %144 = vector.broadcast %cst_86 : f32 to vector<4x256xf32>
    %c0_87 = arith.constant 0 : index
    %c0_88 = arith.constant 0 : index
    %c0_89 = arith.constant 0 : index
    %145 = vector.load %arg4[%c0_87, %c0_88, %c0_89] : memref<4x80x256xf32, #tpu.memory_space<vmem>>, vector<4x8x256xf32>
    %146 = vector.extract_strided_slice %60 {offsets = [0, 0], sizes = [8, 256], strides = [1, 1]} : vector<16x512xf32> to vector<8x256xf32>
    %147 = vector.shape_cast %146 : vector<8x256xf32> to vector<1x8x256xf32>
    %148 = vector.broadcast %147 : vector<1x8x256xf32> to vector<4x8x256xf32>
    %149 = arith.mulf %145, %148 : vector<4x8x256xf32>
    %cst_90 = arith.constant dense<0.000000e+00> : vector<4x256xf32>
    %150 = vector.multi_reduction <add>, %149, %cst_90 [1] : vector<4x8x256xf32> to vector<4x256xf32>
    %151 = arith.addf %143, %150 : vector<4x256xf32>
    %152 = vector.extract_strided_slice %60 {offsets = [0, 256], sizes = [8, 256], strides = [1, 1]} : vector<16x512xf32> to vector<8x256xf32>
    %153 = vector.shape_cast %152 : vector<8x256xf32> to vector<1x8x256xf32>
    %154 = vector.broadcast %153 : vector<1x8x256xf32> to vector<4x8x256xf32>
    %155 = arith.mulf %145, %154 : vector<4x8x256xf32>
    %cst_91 = arith.constant dense<0.000000e+00> : vector<4x256xf32>
    %156 = vector.multi_reduction <add>, %155, %cst_91 [1] : vector<4x8x256xf32> to vector<4x256xf32>
    %157 = arith.addf %144, %156 : vector<4x256xf32>
    %c0_92 = arith.constant 0 : index
    %c8_93 = arith.constant 8 : index
    %c0_94 = arith.constant 0 : index
    %158 = vector.load %arg4[%c0_92, %c8_93, %c0_94] : memref<4x80x256xf32, #tpu.memory_space<vmem>>, vector<4x8x256xf32>
    %159 = vector.extract_strided_slice %60 {offsets = [8, 0], sizes = [8, 256], strides = [1, 1]} : vector<16x512xf32> to vector<8x256xf32>
    %160 = vector.shape_cast %159 : vector<8x256xf32> to vector<1x8x256xf32>
    %161 = vector.broadcast %160 : vector<1x8x256xf32> to vector<4x8x256xf32>
    %162 = arith.mulf %158, %161 : vector<4x8x256xf32>
    %cst_95 = arith.constant dense<0.000000e+00> : vector<4x256xf32>
    %163 = vector.multi_reduction <add>, %162, %cst_95 [1] : vector<4x8x256xf32> to vector<4x256xf32>
    %164 = arith.addf %151, %163 : vector<4x256xf32>
    %165 = vector.extract_strided_slice %60 {offsets = [8, 256], sizes = [8, 256], strides = [1, 1]} : vector<16x512xf32> to vector<8x256xf32>
    %166 = vector.shape_cast %165 : vector<8x256xf32> to vector<1x8x256xf32>
    %167 = vector.broadcast %166 : vector<1x8x256xf32> to vector<4x8x256xf32>
    %168 = arith.mulf %158, %167 : vector<4x8x256xf32>
    %cst_96 = arith.constant dense<0.000000e+00> : vector<4x256xf32>
    %169 = vector.multi_reduction <add>, %168, %cst_96 [1] : vector<4x8x256xf32> to vector<4x256xf32>
    %170 = arith.addf %157, %169 : vector<4x256xf32>
    %c0_97 = arith.constant 0 : index
    %c16_98 = arith.constant 16 : index
    %c0_99 = arith.constant 0 : index
    %171 = vector.load %arg4[%c0_97, %c16_98, %c0_99] : memref<4x80x256xf32, #tpu.memory_space<vmem>>, vector<4x8x256xf32>
    %172 = vector.extract_strided_slice %112 {offsets = [0, 0], sizes = [8, 256], strides = [1, 1]} : vector<24x512xf32> to vector<8x256xf32>
    %173 = vector.shape_cast %172 : vector<8x256xf32> to vector<1x8x256xf32>
    %174 = vector.broadcast %173 : vector<1x8x256xf32> to vector<4x8x256xf32>
    %175 = arith.mulf %171, %174 : vector<4x8x256xf32>
    %cst_100 = arith.constant dense<0.000000e+00> : vector<4x256xf32>
    %176 = vector.multi_reduction <add>, %175, %cst_100 [1] : vector<4x8x256xf32> to vector<4x256xf32>
    %177 = arith.addf %164, %176 : vector<4x256xf32>
    %178 = vector.extract_strided_slice %112 {offsets = [0, 256], sizes = [8, 256], strides = [1, 1]} : vector<24x512xf32> to vector<8x256xf32>
    %179 = vector.shape_cast %178 : vector<8x256xf32> to vector<1x8x256xf32>
    %180 = vector.broadcast %179 : vector<1x8x256xf32> to vector<4x8x256xf32>
    %181 = arith.mulf %171, %180 : vector<4x8x256xf32>
    %cst_101 = arith.constant dense<0.000000e+00> : vector<4x256xf32>
    %182 = vector.multi_reduction <add>, %181, %cst_101 [1] : vector<4x8x256xf32> to vector<4x256xf32>
    %183 = arith.addf %170, %182 : vector<4x256xf32>
    %c0_102 = arith.constant 0 : index
    %c24_103 = arith.constant 24 : index
    %c0_104 = arith.constant 0 : index
    %184 = vector.load %arg4[%c0_102, %c24_103, %c0_104] : memref<4x80x256xf32, #tpu.memory_space<vmem>>, vector<4x8x256xf32>
    %185 = vector.extract_strided_slice %112 {offsets = [8, 0], sizes = [8, 256], strides = [1, 1]} : vector<24x512xf32> to vector<8x256xf32>
    %186 = vector.shape_cast %185 : vector<8x256xf32> to vector<1x8x256xf32>
    %187 = vector.broadcast %186 : vector<1x8x256xf32> to vector<4x8x256xf32>
    %188 = arith.mulf %184, %187 : vector<4x8x256xf32>
    %cst_105 = arith.constant dense<0.000000e+00> : vector<4x256xf32>
    %189 = vector.multi_reduction <add>, %188, %cst_105 [1] : vector<4x8x256xf32> to vector<4x256xf32>
    %190 = arith.addf %177, %189 : vector<4x256xf32>
    %191 = vector.extract_strided_slice %112 {offsets = [8, 256], sizes = [8, 256], strides = [1, 1]} : vector<24x512xf32> to vector<8x256xf32>
    %192 = vector.shape_cast %191 : vector<8x256xf32> to vector<1x8x256xf32>
    %193 = vector.broadcast %192 : vector<1x8x256xf32> to vector<4x8x256xf32>
    %194 = arith.mulf %184, %193 : vector<4x8x256xf32>
    %cst_106 = arith.constant dense<0.000000e+00> : vector<4x256xf32>
    %195 = vector.multi_reduction <add>, %194, %cst_106 [1] : vector<4x8x256xf32> to vector<4x256xf32>
    %196 = arith.addf %183, %195 : vector<4x256xf32>
    %c0_107 = arith.constant 0 : index
    %c32_108 = arith.constant 32 : index
    %c0_109 = arith.constant 0 : index
    %197 = vector.load %arg4[%c0_107, %c32_108, %c0_109] : memref<4x80x256xf32, #tpu.memory_space<vmem>>, vector<4x8x256xf32>
    %198 = vector.extract_strided_slice %112 {offsets = [16, 0], sizes = [8, 256], strides = [1, 1]} : vector<24x512xf32> to vector<8x256xf32>
    %199 = vector.shape_cast %198 : vector<8x256xf32> to vector<1x8x256xf32>
    %200 = vector.broadcast %199 : vector<1x8x256xf32> to vector<4x8x256xf32>
    %201 = arith.mulf %197, %200 : vector<4x8x256xf32>
    %cst_110 = arith.constant dense<0.000000e+00> : vector<4x256xf32>
    %202 = vector.multi_reduction <add>, %201, %cst_110 [1] : vector<4x8x256xf32> to vector<4x256xf32>
    %203 = arith.addf %190, %202 : vector<4x256xf32>
    %204 = vector.extract_strided_slice %112 {offsets = [16, 256], sizes = [8, 256], strides = [1, 1]} : vector<24x512xf32> to vector<8x256xf32>
    %205 = vector.shape_cast %204 : vector<8x256xf32> to vector<1x8x256xf32>
    %206 = vector.broadcast %205 : vector<1x8x256xf32> to vector<4x8x256xf32>
    %207 = arith.mulf %197, %206 : vector<4x8x256xf32>
    %cst_111 = arith.constant dense<0.000000e+00> : vector<4x256xf32>
    %208 = vector.multi_reduction <add>, %207, %cst_111 [1] : vector<4x8x256xf32> to vector<4x256xf32>
    %209 = arith.addf %196, %208 : vector<4x256xf32>
    %c0_112 = arith.constant 0 : index
    %c40_113 = arith.constant 40 : index
    %c0_114 = arith.constant 0 : index
    %210 = vector.load %arg4[%c0_112, %c40_113, %c0_114] : memref<4x80x256xf32, #tpu.memory_space<vmem>>, vector<4x8x256xf32>
    %211 = vector.extract_strided_slice %142 {offsets = [0, 0], sizes = [8, 256], strides = [1, 1]} : vector<40x512xf32> to vector<8x256xf32>
    %212 = vector.shape_cast %211 : vector<8x256xf32> to vector<1x8x256xf32>
    %213 = vector.broadcast %212 : vector<1x8x256xf32> to vector<4x8x256xf32>
    %214 = arith.mulf %210, %213 : vector<4x8x256xf32>
    %cst_115 = arith.constant dense<0.000000e+00> : vector<4x256xf32>
    %215 = vector.multi_reduction <add>, %214, %cst_115 [1] : vector<4x8x256xf32> to vector<4x256xf32>
    %216 = arith.addf %203, %215 : vector<4x256xf32>
    %217 = vector.extract_strided_slice %142 {offsets = [0, 256], sizes = [8, 256], strides = [1, 1]} : vector<40x512xf32> to vector<8x256xf32>
    %218 = vector.shape_cast %217 : vector<8x256xf32> to vector<1x8x256xf32>
    %219 = vector.broadcast %218 : vector<1x8x256xf32> to vector<4x8x256xf32>
    %220 = arith.mulf %210, %219 : vector<4x8x256xf32>
    %cst_116 = arith.constant dense<0.000000e+00> : vector<4x256xf32>
    %221 = vector.multi_reduction <add>, %220, %cst_116 [1] : vector<4x8x256xf32> to vector<4x256xf32>
    %222 = arith.addf %209, %221 : vector<4x256xf32>
    %c0_117 = arith.constant 0 : index
    %c48_118 = arith.constant 48 : index
    %c0_119 = arith.constant 0 : index
    %223 = vector.load %arg4[%c0_117, %c48_118, %c0_119] : memref<4x80x256xf32, #tpu.memory_space<vmem>>, vector<4x8x256xf32>
    %224 = vector.extract_strided_slice %142 {offsets = [8, 0], sizes = [8, 256], strides = [1, 1]} : vector<40x512xf32> to vector<8x256xf32>
    %225 = vector.shape_cast %224 : vector<8x256xf32> to vector<1x8x256xf32>
    %226 = vector.broadcast %225 : vector<1x8x256xf32> to vector<4x8x256xf32>
    %227 = arith.mulf %223, %226 : vector<4x8x256xf32>
    %cst_120 = arith.constant dense<0.000000e+00> : vector<4x256xf32>
    %228 = vector.multi_reduction <add>, %227, %cst_120 [1] : vector<4x8x256xf32> to vector<4x256xf32>
    %229 = arith.addf %216, %228 : vector<4x256xf32>
    %230 = vector.extract_strided_slice %142 {offsets = [8, 256], sizes = [8, 256], strides = [1, 1]} : vector<40x512xf32> to vector<8x256xf32>
    %231 = vector.shape_cast %230 : vector<8x256xf32> to vector<1x8x256xf32>
    %232 = vector.broadcast %231 : vector<1x8x256xf32> to vector<4x8x256xf32>
    %233 = arith.mulf %223, %232 : vector<4x8x256xf32>
    %cst_121 = arith.constant dense<0.000000e+00> : vector<4x256xf32>
    %234 = vector.multi_reduction <add>, %233, %cst_121 [1] : vector<4x8x256xf32> to vector<4x256xf32>
    %235 = arith.addf %222, %234 : vector<4x256xf32>
    %c0_122 = arith.constant 0 : index
    %c56 = arith.constant 56 : index
    %c0_123 = arith.constant 0 : index
    %236 = vector.load %arg4[%c0_122, %c56, %c0_123] : memref<4x80x256xf32, #tpu.memory_space<vmem>>, vector<4x8x256xf32>
    %237 = vector.extract_strided_slice %142 {offsets = [16, 0], sizes = [8, 256], strides = [1, 1]} : vector<40x512xf32> to vector<8x256xf32>
    %238 = vector.shape_cast %237 : vector<8x256xf32> to vector<1x8x256xf32>
    %239 = vector.broadcast %238 : vector<1x8x256xf32> to vector<4x8x256xf32>
    %240 = arith.mulf %236, %239 : vector<4x8x256xf32>
    %cst_124 = arith.constant dense<0.000000e+00> : vector<4x256xf32>
    %241 = vector.multi_reduction <add>, %240, %cst_124 [1] : vector<4x8x256xf32> to vector<4x256xf32>
    %242 = arith.addf %229, %241 : vector<4x256xf32>
    %243 = vector.extract_strided_slice %142 {offsets = [16, 256], sizes = [8, 256], strides = [1, 1]} : vector<40x512xf32> to vector<8x256xf32>
    %244 = vector.shape_cast %243 : vector<8x256xf32> to vector<1x8x256xf32>
    %245 = vector.broadcast %244 : vector<1x8x256xf32> to vector<4x8x256xf32>
    %246 = arith.mulf %236, %245 : vector<4x8x256xf32>
    %cst_125 = arith.constant dense<0.000000e+00> : vector<4x256xf32>
    %247 = vector.multi_reduction <add>, %246, %cst_125 [1] : vector<4x8x256xf32> to vector<4x256xf32>
    %248 = arith.addf %235, %247 : vector<4x256xf32>
    %c0_126 = arith.constant 0 : index
    %c64_127 = arith.constant 64 : index
    %c0_128 = arith.constant 0 : index
    %249 = vector.load %arg4[%c0_126, %c64_127, %c0_128] : memref<4x80x256xf32, #tpu.memory_space<vmem>>, vector<4x8x256xf32>
    %250 = vector.extract_strided_slice %142 {offsets = [24, 0], sizes = [8, 256], strides = [1, 1]} : vector<40x512xf32> to vector<8x256xf32>
    %251 = vector.shape_cast %250 : vector<8x256xf32> to vector<1x8x256xf32>
    %252 = vector.broadcast %251 : vector<1x8x256xf32> to vector<4x8x256xf32>
    %253 = arith.mulf %249, %252 : vector<4x8x256xf32>
    %cst_129 = arith.constant dense<0.000000e+00> : vector<4x256xf32>
    %254 = vector.multi_reduction <add>, %253, %cst_129 [1] : vector<4x8x256xf32> to vector<4x256xf32>
    %255 = arith.addf %242, %254 : vector<4x256xf32>
    %256 = vector.extract_strided_slice %142 {offsets = [24, 256], sizes = [8, 256], strides = [1, 1]} : vector<40x512xf32> to vector<8x256xf32>
    %257 = vector.shape_cast %256 : vector<8x256xf32> to vector<1x8x256xf32>
    %258 = vector.broadcast %257 : vector<1x8x256xf32> to vector<4x8x256xf32>
    %259 = arith.mulf %249, %258 : vector<4x8x256xf32>
    %cst_130 = arith.constant dense<0.000000e+00> : vector<4x256xf32>
    %260 = vector.multi_reduction <add>, %259, %cst_130 [1] : vector<4x8x256xf32> to vector<4x256xf32>
    %261 = arith.addf %248, %260 : vector<4x256xf32>
    %c0_131 = arith.constant 0 : index
    %c72_132 = arith.constant 72 : index
    %c0_133 = arith.constant 0 : index
    %262 = vector.load %arg4[%c0_131, %c72_132, %c0_133] : memref<4x80x256xf32, #tpu.memory_space<vmem>>, vector<4x8x256xf32>
    %263 = vector.extract_strided_slice %142 {offsets = [32, 0], sizes = [8, 256], strides = [1, 1]} : vector<40x512xf32> to vector<8x256xf32>
    %264 = vector.shape_cast %263 : vector<8x256xf32> to vector<1x8x256xf32>
    %265 = vector.broadcast %264 : vector<1x8x256xf32> to vector<4x8x256xf32>
    %266 = arith.mulf %262, %265 : vector<4x8x256xf32>
    %cst_134 = arith.constant dense<0.000000e+00> : vector<4x256xf32>
    %267 = vector.multi_reduction <add>, %266, %cst_134 [1] : vector<4x8x256xf32> to vector<4x256xf32>
    %268 = arith.addf %255, %267 : vector<4x256xf32>
    %269 = vector.extract_strided_slice %142 {offsets = [32, 256], sizes = [8, 256], strides = [1, 1]} : vector<40x512xf32> to vector<8x256xf32>
    %270 = vector.shape_cast %269 : vector<8x256xf32> to vector<1x8x256xf32>
    %271 = vector.broadcast %270 : vector<1x8x256xf32> to vector<4x8x256xf32>
    %272 = arith.mulf %262, %271 : vector<4x8x256xf32>
    %cst_135 = arith.constant dense<0.000000e+00> : vector<4x256xf32>
    %273 = vector.multi_reduction <add>, %272, %cst_135 [1] : vector<4x8x256xf32> to vector<4x256xf32>
    %274 = arith.addf %261, %273 : vector<4x256xf32>
    %cst_136 = arith.constant dense<0.000000e+00> : vector<4xf32>
    %275 = vector.multi_reduction <add>, %268, %cst_136 [1] : vector<4x256xf32> to vector<4xf32>
    %276 = vector.shape_cast %275 : vector<4xf32> to vector<4x1xf32>
    %cst_137 = arith.constant dense<0.000000e+00> : vector<4xf32>
    %277 = vector.multi_reduction <add>, %274, %cst_137 [1] : vector<4x256xf32> to vector<4xf32>
    %278 = vector.shape_cast %277 : vector<4xf32> to vector<4x1xf32>
    %279 = tpu.concatenate %276, %278 in 1 : vector<4x1xf32>, vector<4x1xf32> -> vector<4x2xf32>
    %c0_138 = arith.constant 0 : index
    %c6 = arith.constant 6 : index
    %280 = vector.load %arg3[%c0_138, %c6] : memref<40x8xf32, #tpu.memory_space<vmem>>, vector<4x1xf32>
    %281 = vector.broadcast %280 : vector<4x1xf32> to vector<4x2xf32>
    %282 = arith.addf %279, %281 : vector<4x2xf32>
    %cst_139 = arith.constant dense<0xFF800000> : vector<2xf32>
    %283 = vector.multi_reduction <maximumf>, %282, %cst_139 [0] : vector<4x2xf32> to vector<2xf32>
    %284 = vector.shape_cast %283 : vector<2xf32> to vector<1x2xf32>
    %285 = vector.broadcast %284 : vector<1x2xf32> to vector<4x2xf32>
    %286 = arith.subf %282, %285 : vector<4x2xf32>
    %287 = math.exp %286 : vector<4x2xf32>
    %cst_140 = arith.constant dense<0.000000e+00> : vector<2xf32>
    %288 = vector.multi_reduction <add>, %287, %cst_140 [0] : vector<4x2xf32> to vector<2xf32>
    %289 = vector.shape_cast %288 : vector<2xf32> to vector<1x2xf32>
    %290 = vector.broadcast %289 : vector<1x2xf32> to vector<4x2xf32>
    %291 = arith.divf %287, %290 : vector<4x2xf32>
    %c0_141 = arith.constant 0 : index
    %c0_142 = arith.constant 0 : index
    %292 = vector.load %arg5[%c0_141, %c0_142] : memref<4x2xf32, #tpu.memory_space<vmem>>, vector<4x2xf32>
    tpu.vector_store %arg5[%c0_141, %c0_142], %291 {strides = array<i32>} : memref<4x2xf32, #tpu.memory_space<vmem>>, vector<4x2xf32>,
    return
  }
}

</mosaic_0001>

<llo_original>
// kernel: _lambda_.1
$region0: #{_lambda_.1}
  #allocation0 [shape = 'u32[]', space=smem, size = 0x4, offset = 0x4, fixed_abs, tag = 'smem constant byte address 0x4 - core index']
  #allocation1 [shape = 'u32[144,128]{1,0:T(1,128)}', space=vmem, size = 0x12000, scoped, tag = 'internal scratch']
  #allocation2 [shape = 'f32[240,512]{1,0:T(8,128)}', space=vmem, size = 0x78000, scoped, tag = 'scratch operand']
  %s0 = inlined_call_operand.vmem [shape: f32[8,512], index: 0, kind: input, shape index: {}]
  %s1 = inlined_call_operand.vmem [shape: f32[2], index: 1, kind: input, shape index: {}]
  %s2 = inlined_call_operand.hbm [shape: f32[104,256], index: 2, kind: input, shape index: {}]
  %s3 = inlined_call_operand.vmem [shape: f32[40,8], index: 3, kind: input, shape index: {}]
  %s4 = inlined_call_operand.hbm [shape: f32[4,80,256], index: 4, kind: input, shape index: {}]
  %s5 = inlined_call_operand.vmem [shape: f32[4,2], index: 5, kind: output, shape index: {}]
  %s6 = sld [smem:[#allocation0]]
  $region42: #{_lambda_.1} parent=0
    _
  %s8 = ssub.s32 1, %s6
  %s9 = scalar_select 0, %s8, %s6
  $region1: #{_lambda_.1} parent=0
    #allocation3 [shape = 'u8[512]{0}', space=smem, size = 0x200, scoped, tag = 'input window, operand 1, single buffered']
    #allocation4 [shape = 's32[1]{0}', space=sflag, size = 0x4, scoped, tag = 'scoped memory for _lambda_.1']
    #allocation5 [shape = 's32[1]{0}', space=sflag, size = 0x4, scoped, tag = 'scoped memory for _lambda_.1']
    #allocation6 [shape = 'u8[106496]{0}', space=vmem, size = 0x1a000, scoped, tag = 'input window, operand 2, single buffered']
    #allocation7 [shape = 'u8[327680]{0}', space=vmem, size = 0x50000, scoped, tag = 'input window, operand 4, single buffered']
    #allocation8 [shape = 's32[1]{0}', space=sflag, size = 0x4, scoped, tag = 'scoped memory for _lambda_.1']
    %10 = vsyncpa [#allocation5], 0
    %11 = vsyncpa [#allocation4], 0
    %12 = vsyncpa [#allocation8], 0
    // Predicated region
    $region2: #{_lambda_.1} parent=1 // pred_check
      _
    $region3: #{_lambda_.1} parent=1 // pred_check_branch
      %14 = sbr.rel (0) target = $region5
    $region4: #{_lambda_.1} parent=1 // pred_region
      _
    $region5: #{_lambda_.1} parent=1 // pred_fallthru
      _
    // Predicated region
    $region6: #{_lambda_.1} parent=1 // pred_check
      _
    $region7: #{_lambda_.1} parent=1 // pred_check_branch
      %16 = sbr.rel (0) target = $region9
    $region8: #{_lambda_.1} parent=1 // pred_region
      %s18 = ssub.s32 16, 16
      %19 = vsyncadd [#allocation5], %s18
      %s21 = sshll.u32 %s1, 4
      %s22 = int_to_ptr.vmem [resolvable:$true] %s21
      %24 = dma.vmem_to_smem %s22, 16, [#allocation3], [#allocation5]
    $region9: #{_lambda_.1} parent=1 // pred_fallthru
      _
    // Predicated region
    $region10: #{_lambda_.1} parent=1 // pred_check
      _
    $region11: #{_lambda_.1} parent=1 // pred_check_branch
      %26 = sbr.rel (0) target = $region13
    $region12: #{_lambda_.1} parent=1 // pred_region
      %s28 = ssub.s32 3328, 3328
      %29 = vsyncadd [#allocation4], %s28
      %s30 = sshll.u32 [#allocation6], 4
      %s31 = int_to_ptr.vmem [resolvable:$true] %s30
      %36 = dma.hbm_to_vmem [thread:$0]  %s2, 3328, %s31, [#allocation4], 256, 256, 16
    $region13: #{_lambda_.1} parent=1 // pred_fallthru
      _
    // Predicated region
    $region14: #{_lambda_.1} parent=1 // pred_check
      _
    $region15: #{_lambda_.1} parent=1 // pred_check_branch
      %38 = sbr.rel (0) target = $region17
    $region16: #{_lambda_.1} parent=1 // pred_region
      _
    $region17: #{_lambda_.1} parent=1 // pred_fallthru
      _
    // Predicated region
    $region18: #{_lambda_.1} parent=1 // pred_check
      _
    $region19: #{_lambda_.1} parent=1 // pred_check_branch
      %40 = sbr.rel (0) target = $region21
    $region20: #{_lambda_.1} parent=1 // pred_region
      %s42 = ssub.s32 10240, 10240
      %43 = vsyncadd [#allocation8], %s42
      %s44 = sshll.u32 [#allocation7], 4
      %s45 = int_to_ptr.vmem [resolvable:$true] %s44
      %50 = dma.hbm_to_vmem [thread:$0]  %s4, 10240, %s45, [#allocation8], 256, 256, 16
    $region21: #{_lambda_.1} parent=1 // pred_fallthru
      _
    // Predicated region
    $region22: #{_lambda_.1} parent=1 // pred_check
      _
    $region23: #{_lambda_.1} parent=1 // pred_check_branch
      %52 = sbr.rel (0) target = $region25
    $region24: #{_lambda_.1} parent=1 // pred_region
      %53 = dma.done [#allocation5], 16
    $region25: #{_lambda_.1} parent=1 // pred_fallthru
      _
    // Predicated region
    $region26: #{_lambda_.1} parent=1 // pred_check
      _
    $region27: #{_lambda_.1} parent=1 // pred_check_branch
      %55 = sbr.rel (0) target = $region29
    $region28: #{_lambda_.1} parent=1 // pred_region
      %56 = dma.done [#allocation4], 3328
    $region29: #{_lambda_.1} parent=1 // pred_fallthru
      _
    // Predicated region
    $region30: #{_lambda_.1} parent=1 // pred_check
      _
    $region31: #{_lambda_.1} parent=1 // pred_check_branch
      %58 = sbr.rel (0) target = $region33
    $region32: #{_lambda_.1} parent=1 // pred_region
      %59 = dma.done [#allocation8], 10240
    $region33: #{_lambda_.1} parent=1 // pred_fallthru
      _
    %60 = sfence
    %s61 = sld [smem:[#allocation3]]
    %s62 = sld [smem:[#allocation3 + $0x1]]
    %v63 = vlaneseq
    %v64 = vand.u32 %v63, 127
    %v65 = vadd.s32 %v64, 128
    %v66 = vadd.s32 %v64, 256
    %v67 = vadd.s32 %v64, 384
    %vm68 = vcmp.lt.s32.totalorder %v64, 0
    %v69 = vsub.s32 0, %v64
    %v70 = vsel %vm68, %v69, %v64
    %v71 = vshrl.u32 %v70, 8
    %v72 = vand.u32 %v70, 255
    %v73 = vsub.s32 0, %v72
    %v74 = vsel %vm68, %v73, %v72
    %vm75 = vcmp.lt.s32.totalorder %v65, 0
    %v76 = vsub.s32 0, %v65
    %v77 = vsel %vm75, %v76, %v65
    %v78 = vshrl.u32 %v77, 8
    %v79 = vand.u32 %v77, 255
    %v80 = vsub.s32 0, %v79
    %v81 = vsel %vm75, %v80, %v79
    %vm82 = vcmp.lt.s32.totalorder %v66, 0
    %v83 = vsub.s32 0, %v66
    %v84 = vsel %vm82, %v83, %v66
    %v85 = vshrl.u32 %v84, 8
    %v86 = vand.u32 %v84, 255
    %v87 = vsub.s32 0, %v86
    %v88 = vsel %vm82, %v87, %v86
    %vm89 = vcmp.lt.s32.totalorder %v67, 0
    %v90 = vsub.s32 0, %v67
    %v91 = vsel %vm89, %v90, %v67
    %v92 = vshrl.u32 %v91, 8
    %v93 = vand.u32 %v91, 255
    %v94 = vsub.s32 0, %v93
    %v95 = vsel %vm89, %v94, %v93
    %vm96 = vcmp.ne.s32.totalorder %v74, 0
    %vm97 = vcmp.ne.s32.totalorder %v81, 0
    %vm98 = vcmp.ne.s32.totalorder %v88, 0
    %vm99 = vcmp.ne.s32.totalorder %v95, 0
    %vm100 = vcmp.lt.s32.totalorder %v74, 0
    %vm101 = vcmp.lt.s32.totalorder %v81, 0
    %vm102 = vcmp.lt.s32.totalorder %v88, 0
    %vm103 = vcmp.lt.s32.totalorder %v95, 0
    %vm104 = vmand %vm100, %vm96
    %vm105 = vmand %vm101, %vm97
    %vm106 = vmand %vm102, %vm98
    %vm107 = vmand %vm103, %vm99
    %v108 = vadd.s32 %v74, 256
    %v109 = vadd.s32 %v81, 256
    %v110 = vadd.s32 %v88, 256
    %v111 = vadd.s32 %v95, 256
    %v112 = vsel %vm104, %v108, %v74
    %v113 = vsel %vm105, %v109, %v81
    %v114 = vsel %vm106, %v110, %v88
    %v115 = vsel %vm107, %v111, %v95
    %vm116 = vcmp.lt.s32.totalorder %v112, 200
    %vm117 = vcmp.lt.s32.totalorder %v113, 200
    %vm118 = vcmp.lt.s32.totalorder %v114, 200
    %vm119 = vcmp.lt.s32.totalorder %v115, 200
    %v120 = vsel %vm116, 1, 0
    %v121 = vsel %vm117, 1, 0
    %v122 = vsel %vm118, 1, 0
    %v123 = vsel %vm119, 1, 0
    %v124 = vcvt.s32.f32 %v120
    %v125 = vcvt.s32.f32 %v121
    %v126 = vcvt.s32.f32 %v122
    %v127 = vcvt.s32.f32 %v123
    %v128 = vld [vmem:[%s0] sm:$0xff]
    %v129 = vld [vmem:[%s0 + $0x8] sm:$0xff]
    %v130 = vld [vmem:[%s0 + $0x10] sm:$0xff]
    %v131 = vld [vmem:[%s0 + $0x18] sm:$0xff]
    %v132 = vstv %s61
    %v133 = vmul.f32 %v128, %v132
    %v134 = vmul.f32 %v129, %v132
    %v135 = vmul.f32 %v130, %v132
    %v136 = vmul.f32 %v131, %v132
    %v137 = vstv %s62
    %v138 = vmul.f32 %v137, %v124
    %v139 = vmul.f32 %v137, %v125
    %v140 = vmul.f32 %v137, %v126
    %v141 = vmul.f32 %v137, %v127
    %v142 = vadd.f32 %v133, %v138
    %v143 = vadd.f32 %v134, %v139
    %v144 = vadd.f32 %v135, %v140
    %v145 = vadd.f32 %v136, %v141
    %147 = vrot.lane.b32.xlu0 %v142, 256
    %v148 = vpop.permute.xlu0 %147
    %150 = vrot.lane.b32.xlu0 %v143, 256
    %v151 = vpop.permute.xlu0 %150
    %153 = vrot.lane.b32.xlu0 %v144, 256
    %v154 = vpop.permute.xlu0 %153
    %156 = vrot.lane.b32.xlu0 %v145, 256
    %v157 = vpop.permute.xlu0 %156
    %v158 = vlaneseq
    %v159 = vshrl.u32 %v158, 7
    %vm160 = vcmp.lt.s32.totalorder %v64, %v159
    %v161 = vsel %vm160, %v154, %v157
    %v162 = vsel %vm160, %v151, %v154
    %v163 = vsel %vm160, %v148, %v151
    %v164 = vsel %vm160, %v157, %v148
    %165 = vst [vmem:[#allocation2] sm:$0xff] %v164
    %166 = vst [vmem:[#allocation2 + $0x8] sm:$0xff] %v163
    %167 = vst [vmem:[#allocation2 + $0x10] sm:$0xff] %v162
    %168 = vst [vmem:[#allocation2 + $0x18] sm:$0xff] %v161
    %s170 = sor.u32 256, 7
    %171 = vrot.lane.b32.xlu0 %v142, %s170
    %v172 = vpop.permute.xlu0 %171
    %s174 = sor.u32 256, 7
    %175 = vrot.lane.b32.xlu0 %v143, %s174
    %v176 = vpop.permute.xlu0 %175
    %s178 = sor.u32 256, 7
    %179 = vrot.lane.b32.xlu0 %v144, %s178
    %v180 = vpop.permute.xlu0 %179
    %s182 = sor.u32 256, 7
    %183 = vrot.lane.b32.xlu0 %v145, %s182
    %v184 = vpop.permute.xlu0 %183
    %v185 = vadd.s32 %v159, 7
    %vm186 = vcmp.lt.s32.totalorder %v64, %v185
    %v187 = vsel %vm186, %v180, %v184
    %v188 = vsel %vm186, %v176, %v180
    %v189 = vsel %vm186, %v172, %v176
    %v190 = vsel %vm186, %v184, %v172
    %191 = vst [vmem:[#allocation2 + $0x20] sm:$0xff] %v190
    %192 = vst [vmem:[#allocation2 + $0x28] sm:$0xff] %v189
    %193 = vst [vmem:[#allocation2 + $0x30] sm:$0xff] %v188
    %194 = vst [vmem:[#allocation2 + $0x38] sm:$0xff] %v187
    %s196 = sor.u32 256, 113
    %197 = vrot.lane.b32.xlu0 %v142, %s196
    %v198 = vpop.permute.xlu0 %197
    %s200 = sor.u32 256, 113
    %201 = vrot.lane.b32.xlu0 %v143, %s200
    %v202 = vpop.permute.xlu0 %201
    %s204 = sor.u32 256, 113
    %205 = vrot.lane.b32.xlu0 %v144, %s204
    %v206 = vpop.permute.xlu0 %205
    %s208 = sor.u32 256, 113
    %209 = vrot.lane.b32.xlu0 %v145, %s208
    %v210 = vpop.permute.xlu0 %209
    %v211 = vadd.s32 %v159, 113
    %vm212 = vcmp.lt.s32.totalorder %v64, %v211
    %v213 = vsel %vm212, %v206, %v210
    %v214 = vsel %vm212, %v202, %v206
    %v215 = vsel %vm212, %v198, %v202
    %v216 = vsel %vm212, %v210, %v198
    %217 = vst [vmem:[#allocation2 + $0x40] sm:$0xff] %v215
    %218 = vst [vmem:[#allocation2 + $0x48] sm:$0xff] %v214
    %219 = vst [vmem:[#allocation2 + $0x50] sm:$0xff] %v213
    %220 = vst [vmem:[#allocation2 + $0x58] sm:$0xff] %v216
    %s222 = sor.u32 256, 120
    %223 = vrot.lane.b32.xlu0 %v142, %s222
    %v224 = vpop.permute.xlu0 %223
    %s226 = sor.u32 256, 120
    %227 = vrot.lane.b32.xlu0 %v143, %s226
    %v228 = vpop.permute.xlu0 %227
    %s230 = sor.u32 256, 120
    %231 = vrot.lane.b32.xlu0 %v144, %s230
    %v232 = vpop.permute.xlu0 %231
    %s234 = sor.u32 256, 120
    %235 = vrot.lane.b32.xlu0 %v145, %s234
    %v236 = vpop.permute.xlu0 %235
    %v237 = vadd.s32 %v159, 120
    %vm238 = vcmp.lt.s32.totalorder %v64, %v237
    %v239 = vsel %vm238, %v232, %v236
    %v240 = vsel %vm238, %v228, %v232
    %v241 = vsel %vm238, %v224, %v228
    %v242 = vsel %vm238, %v236, %v224
    %243 = vst [vmem:[#allocation2 + $0x60] sm:$0xff] %v241
    %244 = vst [vmem:[#allocation2 + $0x68] sm:$0xff] %v240
    %245 = vst [vmem:[#allocation2 + $0x70] sm:$0xff] %v239
    %246 = vst [vmem:[#allocation2 + $0x78] sm:$0xff] %v242
    %v247 = vld [vmem:[#allocation6] sm:$0xff]
    %v248 = vld [vmem:[#allocation6 + $0x10] sm:$0xff]
    %v249 = vld [vmem:[#allocation2] sm:$0xff]
    %v250 = vld [vmem:[#allocation2 + $0x8] sm:$0xff]
    %v251 = vld [vmem:[#allocation2 + $0x10] sm:$0xff]
    %v252 = vld [vmem:[#allocation2 + $0x18] sm:$0xff]
    %v253 = vld [vmem:[#allocation2 + $0x20] sm:$0xff]
    %v254 = vld [vmem:[#allocation2 + $0x28] sm:$0xff]
    %v255 = vld [vmem:[#allocation2 + $0x30] sm:$0xff]
    %v256 = vld [vmem:[#allocation2 + $0x38] sm:$0xff]
    %v257 = vld [vmem:[#allocation2 + $0x40] sm:$0xff]
    %v258 = vld [vmem:[#allocation2 + $0x48] sm:$0xff]
    %v259 = vld [vmem:[#allocation2 + $0x50] sm:$0xff]
    %v260 = vld [vmem:[#allocation2 + $0x58] sm:$0xff]
    %v261 = vld [vmem:[#allocation2 + $0x60] sm:$0xff]
    %v262 = vld [vmem:[#allocation2 + $0x68] sm:$0xff]
    %v263 = vld [vmem:[#allocation2 + $0x70] sm:$0xff]
    %v264 = vld [vmem:[#allocation2 + $0x78] sm:$0xff]
    %v265 = vld [vmem:[%s3] sm:$0xff]
    %v266 = vld [vmem:[%s3 + $0x8] sm:$0xff]
    %268 = vset.pattern.permute.xlu0 0
    %269 = vperm.xlu0 %268, %v265
    %v270 = vpop.permute.xlu0 %269
    %273 = vset.pattern.permute.xlu0 0
    %274 = vperm.xlu0 %273, %v266
    %v275 = vpop.permute.xlu0 %274
    %vm277 = vcmask 261120
    %v279 = vsel %vm277, %v247, 0
    %v282 = vsel %vm277, %v248, 0
    %284 = vmatprep.subr.mxu0 0.0
    %285 = vmatpush1.msra.mxu0 0.0
    %286 = vmatprep.subr.mxu0 0.0
    %287 = vmatpush1.msra.mxu0 0.0
    %288 = vmatprep.subr.mxu0 0.0
    %289 = vmatpush1.msra.mxu0 0.0
    %290 = vmatprep.subr.mxu0 0.0
    %291 = vmatpush1.msra.mxu0 0.0
    %292 = vmatprep.subr.mxu0 0.0
    %293 = vmatpush1.msra.mxu0 0.0
    %294 = vmatprep.subr.mxu0 0.0
    %295 = vmatpush1.msra.mxu0 0.0
    %296 = vmatprep.subr.mxu0 0.0
    %297 = vmatpush1.msra.mxu0 0.0
    %298 = vmatprep.subr.mxu0 0.0
    %299 = vmatpush1.msra.mxu0 0.0
    %300 = vmatprep.subr.mxu0 0.0
    %301 = vmatpush1.msra.mxu0 0.0
    %302 = vmatprep.subr.mxu0 0.0
    %303 = vmatpush1.msra.mxu0 0.0
    %304 = vmatprep.subr.mxu0 0.0
    %305 = vmatpush1.msra.mxu0 0.0
    %306 = vmatprep.subr.mxu0 0.0
    %307 = vmatpush1.msra.mxu0 0.0
    %308 = vmatprep.subr.mxu0 %v262
    %309 = vmatpush1.msra.mxu0 %v261
    %310 = vmatprep.subr.mxu0 %v258
    %311 = vmatpush1.msra.mxu0 %v257
    %312 = vmatprep.subr.mxu0 %v254
    %313 = vmatpush1.msra.mxu0 %v253
    %314 = vmatprep.subr.mxu0 %v250
    %315 = vmatpush1.msra.mxu0 %v249
    %316 = vmatprep.subr.mxu0 0.0
    %317 = vmatpush2.msra.mxu0 0.0
    %318 = vmatprep.subr.mxu0 0.0
    %319 = vmatpush2.msra.mxu0 0.0
    %320 = vmatprep.subr.mxu0 0.0
    %321 = vmatpush2.msra.mxu0 0.0
    %322 = vmatprep.subr.mxu0 0.0
    %323 = vmatpush2.msra.mxu0 0.0
    %324 = vmatprep.subr.mxu0 0.0
    %325 = vmatpush2.msra.mxu0 0.0
    %326 = vmatprep.subr.mxu0 0.0
    %327 = vmatpush2.msra.mxu0 0.0
    %328 = vmatprep.subr.mxu0 0.0
    %329 = vmatpush2.msra.mxu0 0.0
    %330 = vmatprep.subr.mxu0 0.0
    %331 = vmatpush2.msra.mxu0 0.0
    %332 = vmatprep.subr.mxu0 0.0
    %333 = vmatpush2.msra.mxu0 0.0
    %334 = vmatprep.subr.mxu0 0.0
    %335 = vmatpush2.msra.mxu0 0.0
    %336 = vmatprep.subr.mxu0 0.0
    %337 = vmatpush2.msra.mxu0 0.0
    %338 = vmatprep.subr.mxu0 0.0
    %339 = vmatpush2.msra.mxu0 0.0
    %340 = vmatprep.subr.mxu0 0.0
    %341 = vmatpush2.msra.mxu0 0.0
    %342 = vmatprep.subr.mxu0 0.0
    %343 = vmatpush2.msra.mxu0 0.0
    %344 = vmatprep.subr.mxu0 0.0
    %345 = vmatpush2.msra.mxu0 0.0
    %346 = vmatprep.subr.mxu0 0.0
    %347 = vmatpush2.msra.mxu0 0.0
    %348 = vmatprep.mubr.f32.mxu0 0.0
    %349 = vmatmul.mubr.f32.gmra.mxu0 %v279
    %v350 = vpop.f32.mrf.mxu0
    %v351 = vadd.f32 %v270, %v350
    %v352 = vpop.f32.mrf.mxu0
    %v353 = vadd.f32 %v270, %v352
    %354 = vmatprep.mubr.f32.mxu0 0.0
    %355 = vmatmul.mubr.f32.gmra.mxu0 %v282
    %v356 = vpop.f32.mrf.mxu0
    %v357 = vadd.f32 %v275, %v356
    %v358 = vpop.f32.mrf.mxu0
    %v359 = vadd.f32 %v275, %v358
    %360 = vdwg.mxu0
    %361 = vmatprep.subr.mxu0 0.0
    %362 = vmatpush1.msra.mxu0 0.0
    %363 = vmatprep.subr.mxu0 0.0
    %364 = vmatpush1.msra.mxu0 0.0
    %365 = vmatprep.subr.mxu0 0.0
    %366 = vmatpush1.msra.mxu0 0.0
    %367 = vmatprep.subr.mxu0 0.0
    %368 = vmatpush1.msra.mxu0 0.0
    %369 = vmatprep.subr.mxu0 0.0
    %370 = vmatpush1.msra.mxu0 0.0
    %371 = vmatprep.subr.mxu0 0.0
    %372 = vmatpush1.msra.mxu0 0.0
    %373 = vmatprep.subr.mxu0 0.0
    %374 = vmatpush1.msra.mxu0 0.0
    %375 = vmatprep.subr.mxu0 0.0
    %376 = vmatpush1.msra.mxu0 0.0
    %377 = vmatprep.subr.mxu0 0.0
    %378 = vmatpush1.msra.mxu0 0.0
    %379 = vmatprep.subr.mxu0 0.0
    %380 = vmatpush1.msra.mxu0 0.0
    %381 = vmatprep.subr.mxu0 0.0
    %382 = vmatpush1.msra.mxu0 0.0
    %383 = vmatprep.subr.mxu0 0.0
    %384 = vmatpush1.msra.mxu0 0.0
    %385 = vmatprep.subr.mxu0 %v264
    %386 = vmatpush1.msra.mxu0 %v263
    %387 = vmatprep.subr.mxu0 %v260
    %388 = vmatpush1.msra.mxu0 %v259
    %389 = vmatprep.subr.mxu0 %v256
    %390 = vmatpush1.msra.mxu0 %v255
    %391 = vmatprep.subr.mxu0 %v252
    %392 = vmatpush1.msra.mxu0 %v251
    %393 = vmatprep.subr.mxu0 0.0
    %394 = vmatpush2.msra.mxu0 0.0
    %395 = vmatprep.subr.mxu0 0.0
    %396 = vmatpush2.msra.mxu0 0.0
    %397 = vmatprep.subr.mxu0 0.0
    %398 = vmatpush2.msra.mxu0 0.0
    %399 = vmatprep.subr.mxu0 0.0
    %400 = vmatpush2.msra.mxu0 0.0
    %401 = vmatprep.subr.mxu0 0.0
    %402 = vmatpush2.msra.mxu0 0.0
    %403 = vmatprep.subr.mxu0 0.0
    %404 = vmatpush2.msra.mxu0 0.0
    %405 = vmatprep.subr.mxu0 0.0
    %406 = vmatpush2.msra.mxu0 0.0
    %407 = vmatprep.subr.mxu0 0.0
    %408 = vmatpush2.msra.mxu0 0.0
    %409 = vmatprep.subr.mxu0 0.0
    %410 = vmatpush2.msra.mxu0 0.0
    %411 = vmatprep.subr.mxu0 0.0
    %412 = vmatpush2.msra.mxu0 0.0
    %413 = vmatprep.subr.mxu0 0.0
    %414 = vmatpush2.msra.mxu0 0.0
    %415 = vmatprep.subr.mxu0 0.0
    %416 = vmatpush2.msra.mxu0 0.0
    %417 = vmatprep.subr.mxu0 0.0
    %418 = vmatpush2.msra.mxu0 0.0
    %419 = vmatprep.subr.mxu0 0.0
    %420 = vmatpush2.msra.mxu0 0.0
    %421 = vmatprep.subr.mxu0 0.0
    %422 = vmatpush2.msra.mxu0 0.0
    %423 = vmatprep.subr.mxu0 0.0
    %424 = vmatpush2.msra.mxu0 0.0
    %425 = vmatprep.mubr.f32.mxu0 0.0
    %426 = vmatmul.mubr.f32.gmra.mxu0 %v279
    %v427 = vpop.f32.mrf.mxu0
    %v428 = vadd.f32 %v270, %v427
    %v429 = vpop.f32.mrf.mxu0
    %v430 = vadd.f32 %v270, %v429
    %431 = vmatprep.mubr.f32.mxu0 0.0
    %432 = vmatmul.mubr.f32.gmra.mxu0 %v282
    %v433 = vpop.f32.mrf.mxu0
    %v434 = vadd.f32 %v275, %v433
    %v435 = vpop.f32.mrf.mxu0
    %v436 = vadd.f32 %v275, %v435
    %437 = vdwg.mxu0
    %vm438 = vcmp.gt.f32.partialorder %v351, 0.0
    %vm439 = vcmp.gt.f32.partialorder %v353, 0.0
    %vm440 = vcmp.gt.f32.partialorder %v428, 0.0
    %vm441 = vcmp.gt.f32.partialorder %v430, 0.0
    %vm442 = vcmp.gt.f32.partialorder %v357, 0.0
    %vm443 = vcmp.gt.f32.partialorder %v359, 0.0
    %vm444 = vcmp.gt.f32.partialorder %v434, 0.0
    %vm445 = vcmp.gt.f32.partialorder %v436, 0.0
    %v446 = vmul.f32 %v351, 0.01
    %v447 = vmul.f32 %v353, 0.01
    %v448 = vmul.f32 %v428, 0.01
    %v449 = vmul.f32 %v430, 0.01
    %v450 = vmul.f32 %v357, 0.01
    %v451 = vmul.f32 %v359, 0.01
    %v452 = vmul.f32 %v434, 0.01
    %v453 = vmul.f32 %v436, 0.01
    %v454 = vsel %vm438, %v351, %v446
    %v455 = vsel %vm439, %v353, %v447
    %v456 = vsel %vm440, %v428, %v448
    %v457 = vsel %vm441, %v430, %v449
    %v458 = vsel %vm442, %v357, %v450
    %v459 = vsel %vm443, %v359, %v451
    %v460 = vsel %vm444, %v434, %v452
    %v461 = vsel %vm445, %v436, %v453
    %v462 = vmul.f32 %v454, %v124
    %v463 = vmul.f32 %v455, %v125
    %v464 = vmul.f32 %v456, %v126
    %v465 = vmul.f32 %v457, %v127
    %v466 = vmul.f32 %v458, %v124
    %v467 = vmul.f32 %v459, %v125
    %v468 = vmul.f32 %v460, %v126
    %v469 = vmul.f32 %v461, %v127
    %470 = vset.pattern.permute.xlu0 1
    %471 = vperm.xlu0 %470, %v265
    %v472 = vpop.permute.xlu0 %471
    %474 = vset.pattern.permute.xlu0 1
    %475 = vperm.xlu0 %474, %v266
    %v476 = vpop.permute.xlu0 %475
    %478 = vrot.lane.b32.xlu0 %v247, 96
    %v479 = vpop.permute.xlu0 %478
    %480 = vrot.lane.b32.xlu0 %v248, 96
    %v481 = vpop.permute.xlu0 %480
    %vm482 = vcmask 130048
    %v483 = vsel %vm482, %v479, 0
    %v485 = vsel %vm482, %v481, 0
    %487 = vmatprep.subr.mxu0 0.0
    %488 = vmatpush1.msra.mxu0 0.0
    %489 = vmatprep.subr.mxu0 0.0
    %490 = vmatpush1.msra.mxu0 0.0
    %491 = vmatprep.subr.mxu0 0.0
    %492 = vmatpush1.msra.mxu0 0.0
    %493 = vmatprep.subr.mxu0 0.0
    %494 = vmatpush1.msra.mxu0 0.0
    %495 = vmatprep.subr.mxu0 0.0
    %496 = vmatpush1.msra.mxu0 0.0
    %497 = vmatprep.subr.mxu0 0.0
    %498 = vmatpush1.msra.mxu0 0.0
    %499 = vmatprep.subr.mxu0 0.0
    %500 = vmatpush1.msra.mxu0 0.0
    %501 = vmatprep.subr.mxu0 0.0
    %502 = vmatpush1.msra.mxu0 0.0
    %503 = vmatprep.subr.mxu0 0.0
    %504 = vmatpush1.msra.mxu0 0.0
    %505 = vmatprep.subr.mxu0 0.0
    %506 = vmatpush1.msra.mxu0 0.0
    %507 = vmatprep.subr.mxu0 0.0
    %508 = vmatpush1.msra.mxu0 0.0
    %509 = vmatprep.subr.mxu0 0.0
    %510 = vmatpush1.msra.mxu0 0.0
    %511 = vmatprep.subr.mxu0 0.0
    %512 = vmatpush1.msra.mxu0 0.0
    %513 = vmatprep.subr.mxu0 0.0
    %514 = vmatpush1.msra.mxu0 0.0
    %515 = vmatprep.subr.mxu0 %v467
    %516 = vmatpush1.msra.mxu0 %v466
    %517 = vmatprep.subr.mxu0 %v463
    %518 = vmatpush1.msra.mxu0 %v462
    %519 = vmatprep.subr.mxu0 0.0
    %520 = vmatpush2.msra.mxu0 0.0
    %521 = vmatprep.subr.mxu0 0.0
    %522 = vmatpush2.msra.mxu0 0.0
    %523 = vmatprep.subr.mxu0 0.0
    %524 = vmatpush2.msra.mxu0 0.0
    %525 = vmatprep.subr.mxu0 0.0
    %526 = vmatpush2.msra.mxu0 0.0
    %527 = vmatprep.subr.mxu0 0.0
    %528 = vmatpush2.msra.mxu0 0.0
    %529 = vmatprep.subr.mxu0 0.0
    %530 = vmatpush2.msra.mxu0 0.0
    %531 = vmatprep.subr.mxu0 0.0
    %532 = vmatpush2.msra.mxu0 0.0
    %533 = vmatprep.subr.mxu0 0.0
    %534 = vmatpush2.msra.mxu0 0.0
    %535 = vmatprep.subr.mxu0 0.0
    %536 = vmatpush2.msra.mxu0 0.0
    %537 = vmatprep.subr.mxu0 0.0
    %538 = vmatpush2.msra.mxu0 0.0
    %539 = vmatprep.subr.mxu0 0.0
    %540 = vmatpush2.msra.mxu0 0.0
    %541 = vmatprep.subr.mxu0 0.0
    %542 = vmatpush2.msra.mxu0 0.0
    %543 = vmatprep.subr.mxu0 0.0
    %544 = vmatpush2.msra.mxu0 0.0
    %545 = vmatprep.subr.mxu0 0.0
    %546 = vmatpush2.msra.mxu0 0.0
    %547 = vmatprep.subr.mxu0 0.0
    %548 = vmatpush2.msra.mxu0 0.0
    %549 = vmatprep.subr.mxu0 0.0
    %550 = vmatpush2.msra.mxu0 0.0
    %551 = vmatprep.mubr.f32.mxu0 0.0
    %552 = vmatmul.mubr.f32.gmra.mxu0 %v483
    %v553 = vpop.f32.mrf.mxu0
    %v554 = vadd.f32 %v472, %v553
    %v555 = vpop.f32.mrf.mxu0
    %v556 = vadd.f32 %v472, %v555
    %557 = vmatprep.mubr.f32.mxu0 0.0
    %558 = vmatmul.mubr.f32.gmra.mxu0 %v485
    %v559 = vpop.f32.mrf.mxu0
    %v560 = vadd.f32 %v476, %v559
    %v561 = vpop.f32.mrf.mxu0
    %v562 = vadd.f32 %v476, %v561
    %563 = vdwg.mxu0
    %564 = vmatprep.subr.mxu0 0.0
    %565 = vmatpush1.msra.mxu0 0.0
    %566 = vmatprep.subr.mxu0 0.0
    %567 = vmatpush1.msra.mxu0 0.0
    %568 = vmatprep.subr.mxu0 0.0
    %569 = vmatpush1.msra.mxu0 0.0
    %570 = vmatprep.subr.mxu0 0.0
    %571 = vmatpush1.msra.mxu0 0.0
    %572 = vmatprep.subr.mxu0 0.0
    %573 = vmatpush1.msra.mxu0 0.0
    %574 = vmatprep.subr.mxu0 0.0
    %575 = vmatpush1.msra.mxu0 0.0
    %576 = vmatprep.subr.mxu0 0.0
    %577 = vmatpush1.msra.mxu0 0.0
    %578 = vmatprep.subr.mxu0 0.0
    %579 = vmatpush1.msra.mxu0 0.0
    %580 = vmatprep.subr.mxu0 0.0
    %581 = vmatpush1.msra.mxu0 0.0
    %582 = vmatprep.subr.mxu0 0.0
    %583 = vmatpush1.msra.mxu0 0.0
    %584 = vmatprep.subr.mxu0 0.0
    %585 = vmatpush1.msra.mxu0 0.0
    %586 = vmatprep.subr.mxu0 0.0
    %587 = vmatpush1.msra.mxu0 0.0
    %588 = vmatprep.subr.mxu0 0.0
    %589 = vmatpush1.msra.mxu0 0.0
    %590 = vmatprep.subr.mxu0 0.0
    %591 = vmatpush1.msra.mxu0 0.0
    %592 = vmatprep.subr.mxu0 %v469
    %593 = vmatpush1.msra.mxu0 %v468
    %594 = vmatprep.subr.mxu0 %v465
    %595 = vmatpush1.msra.mxu0 %v464
    %596 = vmatprep.subr.mxu0 0.0
    %597 = vmatpush2.msra.mxu0 0.0
    %598 = vmatprep.subr.mxu0 0.0
    %599 = vmatpush2.msra.mxu0 0.0
    %600 = vmatprep.subr.mxu0 0.0
    %601 = vmatpush2.msra.mxu0 0.0
    %602 = vmatprep.subr.mxu0 0.0
    %603 = vmatpush2.msra.mxu0 0.0
    %604 = vmatprep.subr.mxu0 0.0
    %605 = vmatpush2.msra.mxu0 0.0
    %606 = vmatprep.subr.mxu0 0.0
    %607 = vmatpush2.msra.mxu0 0.0
    %608 = vmatprep.subr.mxu0 0.0
    %609 = vmatpush2.msra.mxu0 0.0
    %610 = vmatprep.subr.mxu0 0.0
    %611 = vmatpush2.msra.mxu0 0.0
    %612 = vmatprep.subr.mxu0 0.0
    %613 = vmatpush2.msra.mxu0 0.0
    %614 = vmatprep.subr.mxu0 0.0
    %615 = vmatpush2.msra.mxu0 0.0
    %616 = vmatprep.subr.mxu0 0.0
    %617 = vmatpush2.msra.mxu0 0.0
    %618 = vmatprep.subr.mxu0 0.0
    %619 = vmatpush2.msra.mxu0 0.0
    %620 = vmatprep.subr.mxu0 0.0
    %621 = vmatpush2.msra.mxu0 0.0
    %622 = vmatprep.subr.mxu0 0.0
    %623 = vmatpush2.msra.mxu0 0.0
    %624 = vmatprep.subr.mxu0 0.0
    %625 = vmatpush2.msra.mxu0 0.0
    %626 = vmatprep.subr.mxu0 0.0
    %627 = vmatpush2.msra.mxu0 0.0
    %628 = vmatprep.mubr.f32.mxu0 0.0
    %629 = vmatmul.mubr.f32.gmra.mxu0 %v483
    %v630 = vpop.f32.mrf.mxu0
    %v631 = vadd.f32 %v472, %v630
    %v632 = vpop.f32.mrf.mxu0
    %v633 = vadd.f32 %v472, %v632
    %634 = vmatprep.mubr.f32.mxu0 0.0
    %635 = vmatmul.mubr.f32.gmra.mxu0 %v485
    %v636 = vpop.f32.mrf.mxu0
    %v637 = vadd.f32 %v476, %v636
    %v638 = vpop.f32.mrf.mxu0
    %v639 = vadd.f32 %v476, %v638
    %640 = vdwg.mxu0
    %vm641 = vcmp.gt.f32.partialorder %v554, 0.0
    %vm642 = vcmp.gt.f32.partialorder %v556, 0.0
    %vm643 = vcmp.gt.f32.partialorder %v631, 0.0
    %vm644 = vcmp.gt.f32.partialorder %v633, 0.0
    %vm645 = vcmp.gt.f32.partialorder %v560, 0.0
    %vm646 = vcmp.gt.f32.partialorder %v562, 0.0
    %vm647 = vcmp.gt.f32.partialorder %v637, 0.0
    %vm648 = vcmp.gt.f32.partialorder %v639, 0.0
    %v649 = vmul.f32 %v554, 0.01
    %v650 = vmul.f32 %v556, 0.01
    %v651 = vmul.f32 %v631, 0.01
    %v652 = vmul.f32 %v633, 0.01
    %v653 = vmul.f32 %v560, 0.01
    %v654 = vmul.f32 %v562, 0.01
    %v655 = vmul.f32 %v637, 0.01
    %v656 = vmul.f32 %v639, 0.01
    %v657 = vsel %vm641, %v554, %v649
    %v658 = vsel %vm642, %v556, %v650
    %v659 = vsel %vm643, %v631, %v651
    %v660 = vsel %vm644, %v633, %v652
    %v661 = vsel %vm645, %v560, %v653
    %v662 = vsel %vm646, %v562, %v654
    %v663 = vsel %vm647, %v637, %v655
    %v664 = vsel %vm648, %v639, %v656
    %665 = vrot.lane.b32.xlu0 %v462, 7
    %v666 = vpop.permute.xlu0 %665
    %667 = vrot.lane.b32.xlu0 %v466, 7
    %v668 = vpop.permute.xlu0 %667
    %669 = vrot.lane.b32.xlu0 %v463, 7
    %v670 = vpop.permute.xlu0 %669
    %671 = vrot.lane.b32.xlu0 %v467, 7
    %v672 = vpop.permute.xlu0 %671
    %673 = vrot.lane.b32.xlu0 %v464, 7
    %v674 = vpop.permute.xlu0 %673
    %675 = vrot.lane.b32.xlu0 %v468, 7
    %v676 = vpop.permute.xlu0 %675
    %677 = vrot.lane.b32.xlu0 %v465, 7
    %v678 = vpop.permute.xlu0 %677
    %679 = vrot.lane.b32.xlu0 %v469, 7
    %v680 = vpop.permute.xlu0 %679
    %vm681 = vcmp.lt.s32.totalorder %v64, 7
    %v682 = vsel %vm681, %v674, %v678
    %v683 = vsel %vm681, %v676, %v680
    %v684 = vsel %vm681, %v670, %v674
    %v685 = vsel %vm681, %v672, %v676
    %v686 = vsel %vm681, %v666, %v670
    %v687 = vsel %vm681, %v668, %v672
    %v688 = vsel %vm681, %v678, %v666
    %v689 = vsel %vm681, %v680, %v668
    %690 = vst [vmem:[#allocation2] sm:$0xff] %v688
    %691 = vst [vmem:[#allocation2 + $0x8] sm:$0xff] %v686
    %692 = vst [vmem:[#allocation2 + $0x10] sm:$0xff] %v684
    %693 = vst [vmem:[#allocation2 + $0x18] sm:$0xff] %v682
    %694 = vst [vmem:[#allocation2 + $0x20] sm:$0xff] %v689
    %695 = vst [vmem:[#allocation2 + $0x28] sm:$0xff] %v687
    %696 = vst [vmem:[#allocation2 + $0x30] sm:$0xff] %v685
    %697 = vst [vmem:[#allocation2 + $0x38] sm:$0xff] %v683
    %698 = vrot.lane.b32.xlu0 %v462, 6
    %v699 = vpop.permute.xlu0 %698
    %700 = vrot.lane.b32.xlu0 %v466, 6
    %v701 = vpop.permute.xlu0 %700
    %702 = vrot.lane.b32.xlu0 %v463, 6
    %v703 = vpop.permute.xlu0 %702
    %704 = vrot.lane.b32.xlu0 %v467, 6
    %v705 = vpop.permute.xlu0 %704
    %706 = vrot.lane.b32.xlu0 %v464, 6
    %v707 = vpop.permute.xlu0 %706
    %708 = vrot.lane.b32.xlu0 %v468, 6
    %v709 = vpop.permute.xlu0 %708
    %710 = vrot.lane.b32.xlu0 %v465, 6
    %v711 = vpop.permute.xlu0 %710
    %712 = vrot.lane.b32.xlu0 %v469, 6
    %v713 = vpop.permute.xlu0 %712
    %vm714 = vcmp.lt.s32.totalorder %v64, 6
    %v715 = vsel %vm714, %v707, %v711
    %v716 = vsel %vm714, %v709, %v713
    %v717 = vsel %vm714, %v703, %v707
    %v718 = vsel %vm714, %v705, %v709
    %v719 = vsel %vm714, %v699, %v703
    %v720 = vsel %vm714, %v701, %v705
    %v721 = vsel %vm714, %v711, %v699
    %v722 = vsel %vm714, %v713, %v701
    %723 = vst [vmem:[#allocation2 + $0x40] sm:$0xff] %v721
    %724 = vst [vmem:[#allocation2 + $0x48] sm:$0xff] %v719
    %725 = vst [vmem:[#allocation2 + $0x50] sm:$0xff] %v717
    %726 = vst [vmem:[#allocation2 + $0x58] sm:$0xff] %v715
    %727 = vst [vmem:[#allocation2 + $0x60] sm:$0xff] %v722
    %728 = vst [vmem:[#allocation2 + $0x68] sm:$0xff] %v720
    %729 = vst [vmem:[#allocation2 + $0x70] sm:$0xff] %v718
    %730 = vst [vmem:[#allocation2 + $0x78] sm:$0xff] %v716
    %731 = vrot.lane.b32.xlu0 %v462, 5
    %v732 = vpop.permute.xlu0 %731
    %733 = vrot.lane.b32.xlu0 %v466, 5
    %v734 = vpop.permute.xlu0 %733
    %735 = vrot.lane.b32.xlu0 %v463, 5
    %v736 = vpop.permute.xlu0 %735
    %737 = vrot.lane.b32.xlu0 %v467, 5
    %v738 = vpop.permute.xlu0 %737
    %739 = vrot.lane.b32.xlu0 %v464, 5
    %v740 = vpop.permute.xlu0 %739
    %741 = vrot.lane.b32.xlu0 %v468, 5
    %v742 = vpop.permute.xlu0 %741
    %743 = vrot.lane.b32.xlu0 %v465, 5
    %v744 = vpop.permute.xlu0 %743
    %745 = vrot.lane.b32.xlu0 %v469, 5
    %v746 = vpop.permute.xlu0 %745
    %vm747 = vcmp.lt.s32.totalorder %v64, 5
    %v748 = vsel %vm747, %v740, %v744
    %v749 = vsel %vm747, %v742, %v746
    %v750 = vsel %vm747, %v736, %v740
    %v751 = vsel %vm747, %v738, %v742
    %v752 = vsel %vm747, %v732, %v736
    %v753 = vsel %vm747, %v734, %v738
    %v754 = vsel %vm747, %v744, %v732
    %v755 = vsel %vm747, %v746, %v734
    %756 = vst [vmem:[#allocation2 + $0x80] sm:$0xff] %v754
    %757 = vst [vmem:[#allocation2 + $0x88] sm:$0xff] %v752
    %758 = vst [vmem:[#allocation2 + $0x90] sm:$0xff] %v750
    %759 = vst [vmem:[#allocation2 + $0x98] sm:$0xff] %v748
    %760 = vst [vmem:[#allocation2 + $0xa0] sm:$0xff] %v755
    %761 = vst [vmem:[#allocation2 + $0xa8] sm:$0xff] %v753
    %762 = vst [vmem:[#allocation2 + $0xb0] sm:$0xff] %v751
    %763 = vst [vmem:[#allocation2 + $0xb8] sm:$0xff] %v749
    %764 = vrot.lane.b32.xlu0 %v462, 4
    %v765 = vpop.permute.xlu0 %764
    %766 = vrot.lane.b32.xlu0 %v466, 4
    %v767 = vpop.permute.xlu0 %766
    %768 = vrot.lane.b32.xlu0 %v463, 4
    %v769 = vpop.permute.xlu0 %768
    %770 = vrot.lane.b32.xlu0 %v467, 4
    %v771 = vpop.permute.xlu0 %770
    %772 = vrot.lane.b32.xlu0 %v464, 4
    %v773 = vpop.permute.xlu0 %772
    %774 = vrot.lane.b32.xlu0 %v468, 4
    %v775 = vpop.permute.xlu0 %774
    %776 = vrot.lane.b32.xlu0 %v465, 4
    %v777 = vpop.permute.xlu0 %776
    %778 = vrot.lane.b32.xlu0 %v469, 4
    %v779 = vpop.permute.xlu0 %778
    %vm780 = vcmp.lt.s32.totalorder %v64, 4
    %v781 = vsel %vm780, %v773, %v777
    %v782 = vsel %vm780, %v775, %v779
    %v783 = vsel %vm780, %v769, %v773
    %v784 = vsel %vm780, %v771, %v775
    %v785 = vsel %vm780, %v765, %v769
    %v786 = vsel %vm780, %v767, %v771
    %v787 = vsel %vm780, %v777, %v765
    %v788 = vsel %vm780, %v779, %v767
    %789 = vst [vmem:[#allocation2 + $0xc0] sm:$0xff] %v787
    %790 = vst [vmem:[#allocation2 + $0xc8] sm:$0xff] %v785
    %791 = vst [vmem:[#allocation2 + $0xd0] sm:$0xff] %v783
    %792 = vst [vmem:[#allocation2 + $0xd8] sm:$0xff] %v781
    %793 = vst [vmem:[#allocation2 + $0xe0] sm:$0xff] %v788
    %794 = vst [vmem:[#allocation2 + $0xe8] sm:$0xff] %v786
    %795 = vst [vmem:[#allocation2 + $0xf0] sm:$0xff] %v784
    %796 = vst [vmem:[#allocation2 + $0xf8] sm:$0xff] %v782
    %797 = vrot.lane.b32.xlu0 %v462, 3
    %v798 = vpop.permute.xlu0 %797
    %799 = vrot.lane.b32.xlu0 %v466, 3
    %v800 = vpop.permute.xlu0 %799
    %801 = vrot.lane.b32.xlu0 %v463, 3
    %v802 = vpop.permute.xlu0 %801
    %803 = vrot.lane.b32.xlu0 %v467, 3
    %v804 = vpop.permute.xlu0 %803
    %805 = vrot.lane.b32.xlu0 %v464, 3
    %v806 = vpop.permute.xlu0 %805
    %807 = vrot.lane.b32.xlu0 %v468, 3
    %v808 = vpop.permute.xlu0 %807
    %809 = vrot.lane.b32.xlu0 %v465, 3
    %v810 = vpop.permute.xlu0 %809
    %811 = vrot.lane.b32.xlu0 %v469, 3
    %v812 = vpop.permute.xlu0 %811
    %vm813 = vcmp.lt.s32.totalorder %v64, 3
    %v814 = vsel %vm813, %v806, %v810
    %v815 = vsel %vm813, %v808, %v812
    %v816 = vsel %vm813, %v802, %v806
    %v817 = vsel %vm813, %v804, %v808
    %v818 = vsel %vm813, %v798, %v802
    %v819 = vsel %vm813, %v800, %v804
    %v820 = vsel %vm813, %v810, %v798
    %v821 = vsel %vm813, %v812, %v800
    %822 = vst [vmem:[#allocation2 + $0x100] sm:$0xff] %v820
    %823 = vst [vmem:[#allocation2 + $0x108] sm:$0xff] %v818
    %824 = vst [vmem:[#allocation2 + $0x110] sm:$0xff] %v816
    %825 = vst [vmem:[#allocation2 + $0x118] sm:$0xff] %v814
    %826 = vst [vmem:[#allocation2 + $0x120] sm:$0xff] %v821
    %827 = vst [vmem:[#allocation2 + $0x128] sm:$0xff] %v819
    %828 = vst [vmem:[#allocation2 + $0x130] sm:$0xff] %v817
    %829 = vst [vmem:[#allocation2 + $0x138] sm:$0xff] %v815
    %830 = vrot.lane.b32.xlu0 %v462, 2
    %v831 = vpop.permute.xlu0 %830
    %832 = vrot.lane.b32.xlu0 %v466, 2
    %v833 = vpop.permute.xlu0 %832
    %834 = vrot.lane.b32.xlu0 %v463, 2
    %v835 = vpop.permute.xlu0 %834
    %836 = vrot.lane.b32.xlu0 %v467, 2
    %v837 = vpop.permute.xlu0 %836
    %838 = vrot.lane.b32.xlu0 %v464, 2
    %v839 = vpop.permute.xlu0 %838
    %840 = vrot.lane.b32.xlu0 %v468, 2
    %v841 = vpop.permute.xlu0 %840
    %842 = vrot.lane.b32.xlu0 %v465, 2
    %v843 = vpop.permute.xlu0 %842
    %844 = vrot.lane.b32.xlu0 %v469, 2
    %v845 = vpop.permute.xlu0 %844
    %vm846 = vcmp.lt.s32.totalorder %v64, 2
    %v847 = vsel %vm846, %v839, %v843
    %v848 = vsel %vm846, %v841, %v845
    %v849 = vsel %vm846, %v835, %v839
    %v850 = vsel %vm846, %v837, %v841
    %v851 = vsel %vm846, %v831, %v835
    %v852 = vsel %vm846, %v833, %v837
    %v853 = vsel %vm846, %v843, %v831
    %v854 = vsel %vm846, %v845, %v833
    %855 = vst [vmem:[#allocation2 + $0x140] sm:$0xff] %v853
    %856 = vst [vmem:[#allocation2 + $0x148] sm:$0xff] %v851
    %857 = vst [vmem:[#allocation2 + $0x150] sm:$0xff] %v849
    %858 = vst [vmem:[#allocation2 + $0x158] sm:$0xff] %v847
    %859 = vst [vmem:[#allocation2 + $0x160] sm:$0xff] %v854
    %860 = vst [vmem:[#allocation2 + $0x168] sm:$0xff] %v852
    %861 = vst [vmem:[#allocation2 + $0x170] sm:$0xff] %v850
    %862 = vst [vmem:[#allocation2 + $0x178] sm:$0xff] %v848
    %863 = vrot.lane.b32.xlu0 %v462, 1
    %v864 = vpop.permute.xlu0 %863
    %865 = vrot.lane.b32.xlu0 %v466, 1
    %v866 = vpop.permute.xlu0 %865
    %867 = vrot.lane.b32.xlu0 %v463, 1
    %v868 = vpop.permute.xlu0 %867
    %869 = vrot.lane.b32.xlu0 %v467, 1
    %v870 = vpop.permute.xlu0 %869
    %871 = vrot.lane.b32.xlu0 %v464, 1
    %v872 = vpop.permute.xlu0 %871
    %873 = vrot.lane.b32.xlu0 %v468, 1
    %v874 = vpop.permute.xlu0 %873
    %875 = vrot.lane.b32.xlu0 %v465, 1
    %v876 = vpop.permute.xlu0 %875
    %877 = vrot.lane.b32.xlu0 %v469, 1
    %v878 = vpop.permute.xlu0 %877
    %vm879 = vcmp.lt.s32.totalorder %v64, 1
    %v880 = vsel %vm879, %v872, %v876
    %v881 = vsel %vm879, %v874, %v878
    %v882 = vsel %vm879, %v868, %v872
    %v883 = vsel %vm879, %v870, %v874
    %v884 = vsel %vm879, %v864, %v868
    %v885 = vsel %vm879, %v866, %v870
    %v886 = vsel %vm879, %v876, %v864
    %v887 = vsel %vm879, %v878, %v866
    %888 = vst [vmem:[#allocation2 + $0x180] sm:$0xff] %v886
    %889 = vst [vmem:[#allocation2 + $0x188] sm:$0xff] %v884
    %890 = vst [vmem:[#allocation2 + $0x190] sm:$0xff] %v882
    %891 = vst [vmem:[#allocation2 + $0x198] sm:$0xff] %v880
    %892 = vst [vmem:[#allocation2 + $0x1a0] sm:$0xff] %v887
    %893 = vst [vmem:[#allocation2 + $0x1a8] sm:$0xff] %v885
    %894 = vst [vmem:[#allocation2 + $0x1b0] sm:$0xff] %v883
    %895 = vst [vmem:[#allocation2 + $0x1b8] sm:$0xff] %v881
    %896 = vst [vmem:[#allocation2 + $0x1c0] sm:$0xff] %v462
    %897 = vst [vmem:[#allocation2 + $0x1c8] sm:$0xff] %v463
    %898 = vst [vmem:[#allocation2 + $0x1d0] sm:$0xff] %v464
    %899 = vst [vmem:[#allocation2 + $0x1d8] sm:$0xff] %v465
    %900 = vst [vmem:[#allocation2 + $0x1e0] sm:$0xff] %v466
    %901 = vst [vmem:[#allocation2 + $0x1e8] sm:$0xff] %v467
    %902 = vst [vmem:[#allocation2 + $0x1f0] sm:$0xff] %v468
    %903 = vst [vmem:[#allocation2 + $0x1f8] sm:$0xff] %v469
    %904 = vrot.lane.b32.xlu0 %v462, 127
    %v905 = vpop.permute.xlu0 %904
    %906 = vrot.lane.b32.xlu0 %v466, 127
    %v907 = vpop.permute.xlu0 %906
    %908 = vrot.lane.b32.xlu0 %v463, 127
    %v909 = vpop.permute.xlu0 %908
    %910 = vrot.lane.b32.xlu0 %v467, 127
    %v911 = vpop.permute.xlu0 %910
    %912 = vrot.lane.b32.xlu0 %v464, 127
    %v913 = vpop.permute.xlu0 %912
    %914 = vrot.lane.b32.xlu0 %v468, 127
    %v915 = vpop.permute.xlu0 %914
    %916 = vrot.lane.b32.xlu0 %v465, 127
    %v917 = vpop.permute.xlu0 %916
    %918 = vrot.lane.b32.xlu0 %v469, 127
    %v919 = vpop.permute.xlu0 %918
    %vm920 = vcmp.lt.s32.totalorder %v64, 127
    %v921 = vsel %vm920, %v913, %v917
    %v922 = vsel %vm920, %v915, %v919
    %v923 = vsel %vm920, %v909, %v913
    %v924 = vsel %vm920, %v911, %v915
    %v925 = vsel %vm920, %v905, %v909
    %v926 = vsel %vm920, %v907, %v911
    %v927 = vsel %vm920, %v917, %v905
    %v928 = vsel %vm920, %v919, %v907
    %929 = vst [vmem:[#allocation2 + $0x200] sm:$0xff] %v925
    %930 = vst [vmem:[#allocation2 + $0x208] sm:$0xff] %v923
    %931 = vst [vmem:[#allocation2 + $0x210] sm:$0xff] %v921
    %932 = vst [vmem:[#allocation2 + $0x218] sm:$0xff] %v927
    %933 = vst [vmem:[#allocation2 + $0x220] sm:$0xff] %v926
    %934 = vst [vmem:[#allocation2 + $0x228] sm:$0xff] %v924
    %935 = vst [vmem:[#allocation2 + $0x230] sm:$0xff] %v922
    %936 = vst [vmem:[#allocation2 + $0x238] sm:$0xff] %v928
    %937 = vrot.lane.b32.xlu0 %v462, 126
    %v938 = vpop.permute.xlu0 %937
    %939 = vrot.lane.b32.xlu0 %v466, 126
    %v940 = vpop.permute.xlu0 %939
    %941 = vrot.lane.b32.xlu0 %v463, 126
    %v942 = vpop.permute.xlu0 %941
    %943 = vrot.lane.b32.xlu0 %v467, 126
    %v944 = vpop.permute.xlu0 %943
    %945 = vrot.lane.b32.xlu0 %v464, 126
    %v946 = vpop.permute.xlu0 %945
    %947 = vrot.lane.b32.xlu0 %v468, 126
    %v948 = vpop.permute.xlu0 %947
    %949 = vrot.lane.b32.xlu0 %v465, 126
    %v950 = vpop.permute.xlu0 %949
    %951 = vrot.lane.b32.xlu0 %v469, 126
    %v952 = vpop.permute.xlu0 %951
    %vm953 = vcmp.lt.s32.totalorder %v64, 126
    %v954 = vsel %vm953, %v946, %v950
    %v955 = vsel %vm953, %v948, %v952
    %v956 = vsel %vm953, %v942, %v946
    %v957 = vsel %vm953, %v944, %v948
    %v958 = vsel %vm953, %v938, %v942
    %v959 = vsel %vm953, %v940, %v944
    %v960 = vsel %vm953, %v950, %v938
    %v961 = vsel %vm953, %v952, %v940
    %962 = vst [vmem:[#allocation2 + $0x240] sm:$0xff] %v958
    %963 = vst [vmem:[#allocation2 + $0x248] sm:$0xff] %v956
    %964 = vst [vmem:[#allocation2 + $0x250] sm:$0xff] %v954
    %965 = vst [vmem:[#allocation2 + $0x258] sm:$0xff] %v960
    %966 = vst [vmem:[#allocation2 + $0x260] sm:$0xff] %v959
    %967 = vst [vmem:[#allocation2 + $0x268] sm:$0xff] %v957
    %968 = vst [vmem:[#allocation2 + $0x270] sm:$0xff] %v955
    %969 = vst [vmem:[#allocation2 + $0x278] sm:$0xff] %v961
    %970 = vrot.lane.b32.xlu0 %v462, 125
    %v971 = vpop.permute.xlu0 %970
    %972 = vrot.lane.b32.xlu0 %v466, 125
    %v973 = vpop.permute.xlu0 %972
    %974 = vrot.lane.b32.xlu0 %v463, 125
    %v975 = vpop.permute.xlu0 %974
    %976 = vrot.lane.b32.xlu0 %v467, 125
    %v977 = vpop.permute.xlu0 %976
    %978 = vrot.lane.b32.xlu0 %v464, 125
    %v979 = vpop.permute.xlu0 %978
    %980 = vrot.lane.b32.xlu0 %v468, 125
    %v981 = vpop.permute.xlu0 %980
    %982 = vrot.lane.b32.xlu0 %v465, 125
    %v983 = vpop.permute.xlu0 %982
    %984 = vrot.lane.b32.xlu0 %v469, 125
    %v985 = vpop.permute.xlu0 %984
    %vm986 = vcmp.lt.s32.totalorder %v64, 125
    %v987 = vsel %vm986, %v979, %v983
    %v988 = vsel %vm986, %v981, %v985
    %v989 = vsel %vm986, %v975, %v979
    %v990 = vsel %vm986, %v977, %v981
    %v991 = vsel %vm986, %v971, %v975
    %v992 = vsel %vm986, %v973, %v977
    %v993 = vsel %vm986, %v983, %v971
    %v994 = vsel %vm986, %v985, %v973
    %995 = vst [vmem:[#allocation2 + $0x280] sm:$0xff] %v991
    %996 = vst [vmem:[#allocation2 + $0x288] sm:$0xff] %v989
    %997 = vst [vmem:[#allocation2 + $0x290] sm:$0xff] %v987
    %998 = vst [vmem:[#allocation2 + $0x298] sm:$0xff] %v993
    %999 = vst [vmem:[#allocation2 + $0x2a0] sm:$0xff] %v992
    %1000 = vst [vmem:[#allocation2 + $0x2a8] sm:$0xff] %v990
    %1001 = vst [vmem:[#allocation2 + $0x2b0] sm:$0xff] %v988
    %1002 = vst [vmem:[#allocation2 + $0x2b8] sm:$0xff] %v994
    %1003 = vrot.lane.b32.xlu0 %v462, 124
    %v1004 = vpop.permute.xlu0 %1003
    %1005 = vrot.lane.b32.xlu0 %v466, 124
    %v1006 = vpop.permute.xlu0 %1005
    %1007 = vrot.lane.b32.xlu0 %v463, 124
    %v1008 = vpop.permute.xlu0 %1007
    %1009 = vrot.lane.b32.xlu0 %v467, 124
    %v1010 = vpop.permute.xlu0 %1009
    %1011 = vrot.lane.b32.xlu0 %v464, 124
    %v1012 = vpop.permute.xlu0 %1011
    %1013 = vrot.lane.b32.xlu0 %v468, 124
    %v1014 = vpop.permute.xlu0 %1013
    %1015 = vrot.lane.b32.xlu0 %v465, 124
    %v1016 = vpop.permute.xlu0 %1015
    %1017 = vrot.lane.b32.xlu0 %v469, 124
    %v1018 = vpop.permute.xlu0 %1017
    %vm1019 = vcmp.lt.s32.totalorder %v64, 124
    %v1020 = vsel %vm1019, %v1012, %v1016
    %v1021 = vsel %vm1019, %v1014, %v1018
    %v1022 = vsel %vm1019, %v1008, %v1012
    %v1023 = vsel %vm1019, %v1010, %v1014
    %v1024 = vsel %vm1019, %v1004, %v1008
    %v1025 = vsel %vm1019, %v1006, %v1010
    %v1026 = vsel %vm1019, %v1016, %v1004
    %v1027 = vsel %vm1019, %v1018, %v1006
    %1028 = vst [vmem:[#allocation2 + $0x2c0] sm:$0xff] %v1024
    %1029 = vst [vmem:[#allocation2 + $0x2c8] sm:$0xff] %v1022
    %1030 = vst [vmem:[#allocation2 + $0x2d0] sm:$0xff] %v1020
    %1031 = vst [vmem:[#allocation2 + $0x2d8] sm:$0xff] %v1026
    %1032 = vst [vmem:[#allocation2 + $0x2e0] sm:$0xff] %v1025
    %1033 = vst [vmem:[#allocation2 + $0x2e8] sm:$0xff] %v1023
    %1034 = vst [vmem:[#allocation2 + $0x2f0] sm:$0xff] %v1021
    %1035 = vst [vmem:[#allocation2 + $0x2f8] sm:$0xff] %v1027
    %1036 = vrot.lane.b32.xlu0 %v462, 123
    %v1037 = vpop.permute.xlu0 %1036
    %1038 = vrot.lane.b32.xlu0 %v466, 123
    %v1039 = vpop.permute.xlu0 %1038
    %1040 = vrot.lane.b32.xlu0 %v463, 123
    %v1041 = vpop.permute.xlu0 %1040
    %1042 = vrot.lane.b32.xlu0 %v467, 123
    %v1043 = vpop.permute.xlu0 %1042
    %1044 = vrot.lane.b32.xlu0 %v464, 123
    %v1045 = vpop.permute.xlu0 %1044
    %1046 = vrot.lane.b32.xlu0 %v468, 123
    %v1047 = vpop.permute.xlu0 %1046
    %1048 = vrot.lane.b32.xlu0 %v465, 123
    %v1049 = vpop.permute.xlu0 %1048
    %1050 = vrot.lane.b32.xlu0 %v469, 123
    %v1051 = vpop.permute.xlu0 %1050
    %vm1052 = vcmp.lt.s32.totalorder %v64, 123
    %v1053 = vsel %vm1052, %v1045, %v1049
    %v1054 = vsel %vm1052, %v1047, %v1051
    %v1055 = vsel %vm1052, %v1041, %v1045
    %v1056 = vsel %vm1052, %v1043, %v1047
    %v1057 = vsel %vm1052, %v1037, %v1041
    %v1058 = vsel %vm1052, %v1039, %v1043
    %v1059 = vsel %vm1052, %v1049, %v1037
    %v1060 = vsel %vm1052, %v1051, %v1039
    %1061 = vst [vmem:[#allocation2 + $0x300] sm:$0xff] %v1057
    %1062 = vst [vmem:[#allocation2 + $0x308] sm:$0xff] %v1055
    %1063 = vst [vmem:[#allocation2 + $0x310] sm:$0xff] %v1053
    %1064 = vst [vmem:[#allocation2 + $0x318] sm:$0xff] %v1059
    %1065 = vst [vmem:[#allocation2 + $0x320] sm:$0xff] %v1058
    %1066 = vst [vmem:[#allocation2 + $0x328] sm:$0xff] %v1056
    %1067 = vst [vmem:[#allocation2 + $0x330] sm:$0xff] %v1054
    %1068 = vst [vmem:[#allocation2 + $0x338] sm:$0xff] %v1060
    %1069 = vrot.lane.b32.xlu0 %v462, 122
    %v1070 = vpop.permute.xlu0 %1069
    %1071 = vrot.lane.b32.xlu0 %v466, 122
    %v1072 = vpop.permute.xlu0 %1071
    %1073 = vrot.lane.b32.xlu0 %v463, 122
    %v1074 = vpop.permute.xlu0 %1073
    %1075 = vrot.lane.b32.xlu0 %v467, 122
    %v1076 = vpop.permute.xlu0 %1075
    %1077 = vrot.lane.b32.xlu0 %v464, 122
    %v1078 = vpop.permute.xlu0 %1077
    %1079 = vrot.lane.b32.xlu0 %v468, 122
    %v1080 = vpop.permute.xlu0 %1079
    %1081 = vrot.lane.b32.xlu0 %v465, 122
    %v1082 = vpop.permute.xlu0 %1081
    %1083 = vrot.lane.b32.xlu0 %v469, 122
    %v1084 = vpop.permute.xlu0 %1083
    %vm1085 = vcmp.lt.s32.totalorder %v64, 122
    %v1086 = vsel %vm1085, %v1078, %v1082
    %v1087 = vsel %vm1085, %v1080, %v1084
    %v1088 = vsel %vm1085, %v1074, %v1078
    %v1089 = vsel %vm1085, %v1076, %v1080
    %v1090 = vsel %vm1085, %v1070, %v1074
    %v1091 = vsel %vm1085, %v1072, %v1076
    %v1092 = vsel %vm1085, %v1082, %v1070
    %v1093 = vsel %vm1085, %v1084, %v1072
    %1094 = vst [vmem:[#allocation2 + $0x340] sm:$0xff] %v1090
    %1095 = vst [vmem:[#allocation2 + $0x348] sm:$0xff] %v1088
    %1096 = vst [vmem:[#allocation2 + $0x350] sm:$0xff] %v1086
    %1097 = vst [vmem:[#allocation2 + $0x358] sm:$0xff] %v1092
    %1098 = vst [vmem:[#allocation2 + $0x360] sm:$0xff] %v1091
    %1099 = vst [vmem:[#allocation2 + $0x368] sm:$0xff] %v1089
    %1100 = vst [vmem:[#allocation2 + $0x370] sm:$0xff] %v1087
    %1101 = vst [vmem:[#allocation2 + $0x378] sm:$0xff] %v1093
    %1102 = vrot.lane.b32.xlu0 %v462, 121
    %v1103 = vpop.permute.xlu0 %1102
    %1104 = vrot.lane.b32.xlu0 %v466, 121
    %v1105 = vpop.permute.xlu0 %1104
    %1106 = vrot.lane.b32.xlu0 %v463, 121
    %v1107 = vpop.permute.xlu0 %1106
    %1108 = vrot.lane.b32.xlu0 %v467, 121
    %v1109 = vpop.permute.xlu0 %1108
    %1110 = vrot.lane.b32.xlu0 %v464, 121
    %v1111 = vpop.permute.xlu0 %1110
    %1112 = vrot.lane.b32.xlu0 %v468, 121
    %v1113 = vpop.permute.xlu0 %1112
    %1114 = vrot.lane.b32.xlu0 %v465, 121
    %v1115 = vpop.permute.xlu0 %1114
    %1116 = vrot.lane.b32.xlu0 %v469, 121
    %v1117 = vpop.permute.xlu0 %1116
    %vm1118 = vcmp.lt.s32.totalorder %v64, 121
    %v1119 = vsel %vm1118, %v1111, %v1115
    %v1120 = vsel %vm1118, %v1113, %v1117
    %v1121 = vsel %vm1118, %v1107, %v1111
    %v1122 = vsel %vm1118, %v1109, %v1113
    %v1123 = vsel %vm1118, %v1103, %v1107
    %v1124 = vsel %vm1118, %v1105, %v1109
    %v1125 = vsel %vm1118, %v1115, %v1103
    %v1126 = vsel %vm1118, %v1117, %v1105
    %1127 = vst [vmem:[#allocation2 + $0x380] sm:$0xff] %v1123
    %1128 = vst [vmem:[#allocation2 + $0x388] sm:$0xff] %v1121
    %1129 = vst [vmem:[#allocation2 + $0x390] sm:$0xff] %v1119
    %1130 = vst [vmem:[#allocation2 + $0x398] sm:$0xff] %v1125
    %1131 = vst [vmem:[#allocation2 + $0x3a0] sm:$0xff] %v1124
    %1132 = vst [vmem:[#allocation2 + $0x3a8] sm:$0xff] %v1122
    %1133 = vst [vmem:[#allocation2 + $0x3b0] sm:$0xff] %v1120
    %1134 = vst [vmem:[#allocation2 + $0x3b8] sm:$0xff] %v1126
    %v1135 = vld [vmem:[#allocation6 + $0x20] sm:$0xff]
    %v1136 = vld [vmem:[#allocation6 + $0x28] sm:$0xff]
    %v1137 = vld [vmem:[#allocation6 + $0x30] sm:$0xff]
    %v1138 = vld [vmem:[#allocation6 + $0x38] sm:$0xff]
    %v1139 = vld [vmem:[#allocation6 + $0x40] sm:$0xff]
    %v1140 = vld [vmem:[#allocation6 + $0x48] sm:$0xff]
    %v1141 = vld [vmem:[#allocation2] sm:$0xff]
    %v1142 = vld [vmem:[#allocation2 + $0x8] sm:$0xff]
    %v1143 = vld [vmem:[#allocation2 + $0x10] sm:$0xff]
    %v1144 = vld [vmem:[#allocation2 + $0x18] sm:$0xff]
    %v1145 = vld [vmem:[#allocation2 + $0x20] sm:$0xff]
    %v1146 = vld [vmem:[#allocation2 + $0x28] sm:$0xff]
    %v1147 = vld [vmem:[#allocation2 + $0x30] sm:$0xff]
    %v1148 = vld [vmem:[#allocation2 + $0x38] sm:$0xff]
    %v1149 = vld [vmem:[#allocation2 + $0x40] sm:$0xff]
    %v1150 = vld [vmem:[#allocation2 + $0x48] sm:$0xff]
    %v1151 = vld [vmem:[#allocation2 + $0x50] sm:$0xff]
    %v1152 = vld [vmem:[#allocation2 + $0x58] sm:$0xff]
    %v1153 = vld [vmem:[#allocation2 + $0x60] sm:$0xff]
    %v1154 = vld [vmem:[#allocation2 + $0x68] sm:$0xff]
    %v1155 = vld [vmem:[#allocation2 + $0x70] sm:$0xff]
    %v1156 = vld [vmem:[#allocation2 + $0x78] sm:$0xff]
    %v1157 = vld [vmem:[#allocation2 + $0x80] sm:$0xff]
    %v1158 = vld [vmem:[#allocation2 + $0x88] sm:$0xff]
    %v1159 = vld [vmem:[#allocation2 + $0x90] sm:$0xff]
    %v1160 = vld [vmem:[#allocation2 + $0x98] sm:$0xff]
    %v1161 = vld [vmem:[#allocation2 + $0xa0] sm:$0xff]
    %v1162 = vld [vmem:[#allocation2 + $0xa8] sm:$0xff]
    %v1163 = vld [vmem:[#allocation2 + $0xb0] sm:$0xff]
    %v1164 = vld [vmem:[#allocation2 + $0xb8] sm:$0xff]
    %v1165 = vld [vmem:[#allocation2 + $0xc0] sm:$0xff]
    %v1166 = vld [vmem:[#allocation2 + $0xc8] sm:$0xff]
    %v1167 = vld [vmem:[#allocation2 + $0xd0] sm:$0xff]
    %v1168 = vld [vmem:[#allocation2 + $0xd8] sm:$0xff]
    %v1169 = vld [vmem:[#allocation2 + $0xe0] sm:$0xff]
    %v1170 = vld [vmem:[#allocation2 + $0xe8] sm:$0xff]
    %v1171 = vld [vmem:[#allocation2 + $0xf0] sm:$0xff]
    %v1172 = vld [vmem:[#allocation2 + $0xf8] sm:$0xff]
    %v1173 = vld [vmem:[#allocation2 + $0x100] sm:$0xff]
    %v1174 = vld [vmem:[#allocation2 + $0x108] sm:$0xff]
    %v1175 = vld [vmem:[#allocation2 + $0x110] sm:$0xff]
    %v1176 = vld [vmem:[#allocation2 + $0x118] sm:$0xff]
    %v1177 = vld [vmem:[#allocation2 + $0x120] sm:$0xff]
    %v1178 = vld [vmem:[#allocation2 + $0x128] sm:$0xff]
    %v1179 = vld [vmem:[#allocation2 + $0x130] sm:$0xff]
    %v1180 = vld [vmem:[#allocation2 + $0x138] sm:$0xff]
    %v1181 = vld [vmem:[#allocation2 + $0x140] sm:$0xff]
    %v1182 = vld [vmem:[#allocation2 + $0x148] sm:$0xff]
    %v1183 = vld [vmem:[#allocation2 + $0x150] sm:$0xff]
    %v1184 = vld [vmem:[#allocation2 + $0x158] sm:$0xff]
    %v1185 = vld [vmem:[#allocation2 + $0x160] sm:$0xff]
    %v1186 = vld [vmem:[#allocation2 + $0x168] sm:$0xff]
    %v1187 = vld [vmem:[#allocation2 + $0x170] sm:$0xff]
    %v1188 = vld [vmem:[#allocation2 + $0x178] sm:$0xff]
    %v1189 = vld [vmem:[#allocation2 + $0x180] sm:$0xff]
    %v1190 = vld [vmem:[#allocation2 + $0x188] sm:$0xff]
    %v1191 = vld [vmem:[#allocation2 + $0x190] sm:$0xff]
    %v1192 = vld [vmem:[#allocation2 + $0x198] sm:$0xff]
    %v1193 = vld [vmem:[#allocation2 + $0x1a0] sm:$0xff]
    %v1194 = vld [vmem:[#allocation2 + $0x1a8] sm:$0xff]
    %v1195 = vld [vmem:[#allocation2 + $0x1b0] sm:$0xff]
    %v1196 = vld [vmem:[#allocation2 + $0x1b8] sm:$0xff]
    %v1197 = vld [vmem:[#allocation2 + $0x1c0] sm:$0xff]
    %v1198 = vld [vmem:[#allocation2 + $0x1c8] sm:$0xff]
    %v1199 = vld [vmem:[#allocation2 + $0x1d0] sm:$0xff]
    %v1200 = vld [vmem:[#allocation2 + $0x1d8] sm:$0xff]
    %v1201 = vld [vmem:[#allocation2 + $0x1e0] sm:$0xff]
    %v1202 = vld [vmem:[#allocation2 + $0x1e8] sm:$0xff]
    %v1203 = vld [vmem:[#allocation2 + $0x1f0] sm:$0xff]
    %v1204 = vld [vmem:[#allocation2 + $0x1f8] sm:$0xff]
    %v1205 = vld [vmem:[#allocation2 + $0x200] sm:$0xff]
    %v1206 = vld [vmem:[#allocation2 + $0x208] sm:$0xff]
    %v1207 = vld [vmem:[#allocation2 + $0x210] sm:$0xff]
    %v1208 = vld [vmem:[#allocation2 + $0x218] sm:$0xff]
    %v1209 = vld [vmem:[#allocation2 + $0x220] sm:$0xff]
    %v1210 = vld [vmem:[#allocation2 + $0x228] sm:$0xff]
    %v1211 = vld [vmem:[#allocation2 + $0x230] sm:$0xff]
    %v1212 = vld [vmem:[#allocation2 + $0x238] sm:$0xff]
    %v1213 = vld [vmem:[#allocation2 + $0x240] sm:$0xff]
    %v1214 = vld [vmem:[#allocation2 + $0x248] sm:$0xff]
    %v1215 = vld [vmem:[#allocation2 + $0x250] sm:$0xff]
    %v1216 = vld [vmem:[#allocation2 + $0x258] sm:$0xff]
    %v1217 = vld [vmem:[#allocation2 + $0x260] sm:$0xff]
    %v1218 = vld [vmem:[#allocation2 + $0x268] sm:$0xff]
    %v1219 = vld [vmem:[#allocation2 + $0x270] sm:$0xff]
    %v1220 = vld [vmem:[#allocation2 + $0x278] sm:$0xff]
    %v1221 = vld [vmem:[#allocation2 + $0x280] sm:$0xff]
    %v1222 = vld [vmem:[#allocation2 + $0x288] sm:$0xff]
    %v1223 = vld [vmem:[#allocation2 + $0x290] sm:$0xff]
    %v1224 = vld [vmem:[#allocation2 + $0x298] sm:$0xff]
    %v1225 = vld [vmem:[#allocation2 + $0x2a0] sm:$0xff]
    %v1226 = vld [vmem:[#allocation2 + $0x2a8] sm:$0xff]
    %v1227 = vld [vmem:[#allocation2 + $0x2b0] sm:$0xff]
    %v1228 = vld [vmem:[#allocation2 + $0x2b8] sm:$0xff]
    %v1229 = vld [vmem:[#allocation2 + $0x2c0] sm:$0xff]
    %v1230 = vld [vmem:[#allocation2 + $0x2c8] sm:$0xff]
    %v1231 = vld [vmem:[#allocation2 + $0x2d0] sm:$0xff]
    %v1232 = vld [vmem:[#allocation2 + $0x2d8] sm:$0xff]
    %v1233 = vld [vmem:[#allocation2 + $0x2e0] sm:$0xff]
    %v1234 = vld [vmem:[#allocation2 + $0x2e8] sm:$0xff]
    %v1235 = vld [vmem:[#allocation2 + $0x2f0] sm:$0xff]
    %v1236 = vld [vmem:[#allocation2 + $0x2f8] sm:$0xff]
    %v1237 = vld [vmem:[#allocation2 + $0x300] sm:$0xff]
    %v1238 = vld [vmem:[#allocation2 + $0x308] sm:$0xff]
    %v1239 = vld [vmem:[#allocation2 + $0x310] sm:$0xff]
    %v1240 = vld [vmem:[#allocation2 + $0x318] sm:$0xff]
    %v1241 = vld [vmem:[#allocation2 + $0x320] sm:$0xff]
    %v1242 = vld [vmem:[#allocation2 + $0x328] sm:$0xff]
    %v1243 = vld [vmem:[#allocation2 + $0x330] sm:$0xff]
    %v1244 = vld [vmem:[#allocation2 + $0x338] sm:$0xff]
    %v1245 = vld [vmem:[#allocation2 + $0x340] sm:$0xff]
    %v1246 = vld [vmem:[#allocation2 + $0x348] sm:$0xff]
    %v1247 = vld [vmem:[#allocation2 + $0x350] sm:$0xff]
    %v1248 = vld [vmem:[#allocation2 + $0x358] sm:$0xff]
    %v1249 = vld [vmem:[#allocation2 + $0x360] sm:$0xff]
    %v1250 = vld [vmem:[#allocation2 + $0x368] sm:$0xff]
    %v1251 = vld [vmem:[#allocation2 + $0x370] sm:$0xff]
    %v1252 = vld [vmem:[#allocation2 + $0x378] sm:$0xff]
    %v1253 = vld [vmem:[#allocation2 + $0x380] sm:$0xff]
    %v1254 = vld [vmem:[#allocation2 + $0x388] sm:$0xff]
    %v1255 = vld [vmem:[#allocation2 + $0x390] sm:$0xff]
    %v1256 = vld [vmem:[#allocation2 + $0x398] sm:$0xff]
    %v1257 = vld [vmem:[#allocation2 + $0x3a0] sm:$0xff]
    %v1258 = vld [vmem:[#allocation2 + $0x3a8] sm:$0xff]
    %v1259 = vld [vmem:[#allocation2 + $0x3b0] sm:$0xff]
    %v1260 = vld [vmem:[#allocation2 + $0x3b8] sm:$0xff]
    %v1261 = vld [vmem:[%s3] sm:$0xff]
    %v1262 = vld [vmem:[%s3 + $0x8] sm:$0xff]
    %v1263 = vld [vmem:[%s3 + $0x10] sm:$0xff]
    %1265 = vset.pattern.permute.xlu0 2
    %1266 = vperm.xlu0 %1265, %v1261
    %v1267 = vpop.permute.xlu0 %1266
    %1270 = vset.pattern.permute.xlu0 2
    %1271 = vperm.xlu0 %1270, %v1262
    %v1272 = vpop.permute.xlu0 %1271
    %1275 = vset.pattern.permute.xlu0 2
    %1276 = vperm.xlu0 %1275, %v1263
    %v1277 = vpop.permute.xlu0 %1276
    %vm1279 = vcmask 916480
    %v1281 = vsel %vm1279, %v1136, 0
    %v1284 = vsel %vm1279, %v1138, 0
    %v1287 = vsel %vm1279, %v1140, 0
    %1289 = vmatprep.subr.mxu0 %v1202
    %1290 = vmatpush1.msra.mxu0 %v1201
    %1291 = vmatprep.subr.mxu0 %v1198
    %1292 = vmatpush1.msra.mxu0 %v1197
    %1293 = vmatprep.subr.mxu0 %v1194
    %1294 = vmatpush1.msra.mxu0 %v1193
    %1295 = vmatprep.subr.mxu0 %v1190
    %1296 = vmatpush1.msra.mxu0 %v1189
    %1297 = vmatprep.subr.mxu0 %v1186
    %1298 = vmatpush1.msra.mxu0 %v1185
    %1299 = vmatprep.subr.mxu0 %v1182
    %1300 = vmatpush1.msra.mxu0 %v1181
    %1301 = vmatprep.subr.mxu0 %v1178
    %1302 = vmatpush1.msra.mxu0 %v1177
    %1303 = vmatprep.subr.mxu0 %v1174
    %1304 = vmatpush1.msra.mxu0 %v1173
    %1305 = vmatprep.subr.mxu0 %v1170
    %1306 = vmatpush1.msra.mxu0 %v1169
    %1307 = vmatprep.subr.mxu0 %v1166
    %1308 = vmatpush1.msra.mxu0 %v1165
    %1309 = vmatprep.subr.mxu0 %v1162
    %1310 = vmatpush1.msra.mxu0 %v1161
    %1311 = vmatprep.subr.mxu0 %v1158
    %1312 = vmatpush1.msra.mxu0 %v1157
    %1313 = vmatprep.subr.mxu0 %v1154
    %1314 = vmatpush1.msra.mxu0 %v1153
    %1315 = vmatprep.subr.mxu0 %v1150
    %1316 = vmatpush1.msra.mxu0 %v1149
    %1317 = vmatprep.subr.mxu0 %v1146
    %1318 = vmatpush1.msra.mxu0 %v1145
    %1319 = vmatprep.subr.mxu0 %v1142
    %1320 = vmatpush1.msra.mxu0 %v1141
    %1321 = vmatprep.subr.mxu0 0.0
    %1322 = vmatpush2.msra.mxu0 0.0
    %1323 = vmatprep.subr.mxu0 0.0
    %1324 = vmatpush2.msra.mxu0 0.0
    %1325 = vmatprep.subr.mxu0 %v1258
    %1326 = vmatpush2.msra.mxu0 %v1257
    %1327 = vmatprep.subr.mxu0 %v1254
    %1328 = vmatpush2.msra.mxu0 %v1253
    %1329 = vmatprep.subr.mxu0 %v1250
    %1330 = vmatpush2.msra.mxu0 %v1249
    %1331 = vmatprep.subr.mxu0 %v1246
    %1332 = vmatpush2.msra.mxu0 %v1245
    %1333 = vmatprep.subr.mxu0 %v1242
    %1334 = vmatpush2.msra.mxu0 %v1241
    %1335 = vmatprep.subr.mxu0 %v1238
    %1336 = vmatpush2.msra.mxu0 %v1237
    %1337 = vmatprep.subr.mxu0 %v1234
    %1338 = vmatpush2.msra.mxu0 %v1233
    %1339 = vmatprep.subr.mxu0 %v1230
    %1340 = vmatpush2.msra.mxu0 %v1229
    %1341 = vmatprep.subr.mxu0 %v1226
    %1342 = vmatpush2.msra.mxu0 %v1225
    %1343 = vmatprep.subr.mxu0 %v1222
    %1344 = vmatpush2.msra.mxu0 %v1221
    %1345 = vmatprep.subr.mxu0 %v1218
    %1346 = vmatpush2.msra.mxu0 %v1217
    %1347 = vmatprep.subr.mxu0 %v1214
    %1348 = vmatpush2.msra.mxu0 %v1213
    %1349 = vmatprep.subr.mxu0 %v1210
    %1350 = vmatpush2.msra.mxu0 %v1209
    %1351 = vmatprep.subr.mxu0 %v1206
    %1352 = vmatpush2.msra.mxu0 %v1205
    %1353 = vmatprep.mubr.f32.mxu0 %v1281
    %1354 = vmatmul.mubr.f32.gmra.mxu0 %v1135
    %v1355 = vpop.f32.mrf.mxu0
    %v1356 = vadd.f32 %v1267, %v1355
    %v1357 = vpop.f32.mrf.mxu0
    %v1358 = vadd.f32 %v1267, %v1357
    %1359 = vmatprep.mubr.f32.mxu0 %v1284
    %1360 = vmatmul.mubr.f32.gmra.mxu0 %v1137
    %v1361 = vpop.f32.mrf.mxu0
    %v1362 = vadd.f32 %v1272, %v1361
    %v1363 = vpop.f32.mrf.mxu0
    %v1364 = vadd.f32 %v1272, %v1363
    %1365 = vmatprep.mubr.f32.mxu0 %v1287
    %1366 = vmatmul.mubr.f32.gmra.mxu0 %v1139
    %v1367 = vpop.f32.mrf.mxu0
    %v1368 = vadd.f32 %v1277, %v1367
    %v1369 = vpop.f32.mrf.mxu0
    %v1370 = vadd.f32 %v1277, %v1369
    %1371 = vdwg.mxu0
    %1372 = vmatprep.subr.mxu0 %v1204
    %1373 = vmatpush1.msra.mxu0 %v1203
    %1374 = vmatprep.subr.mxu0 %v1200
    %1375 = vmatpush1.msra.mxu0 %v1199
    %1376 = vmatprep.subr.mxu0 %v1196
    %1377 = vmatpush1.msra.mxu0 %v1195
    %1378 = vmatprep.subr.mxu0 %v1192
    %1379 = vmatpush1.msra.mxu0 %v1191
    %1380 = vmatprep.subr.mxu0 %v1188
    %1381 = vmatpush1.msra.mxu0 %v1187
    %1382 = vmatprep.subr.mxu0 %v1184
    %1383 = vmatpush1.msra.mxu0 %v1183
    %1384 = vmatprep.subr.mxu0 %v1180
    %1385 = vmatpush1.msra.mxu0 %v1179
    %1386 = vmatprep.subr.mxu0 %v1176
    %1387 = vmatpush1.msra.mxu0 %v1175
    %1388 = vmatprep.subr.mxu0 %v1172
    %1389 = vmatpush1.msra.mxu0 %v1171
    %1390 = vmatprep.subr.mxu0 %v1168
    %1391 = vmatpush1.msra.mxu0 %v1167
    %1392 = vmatprep.subr.mxu0 %v1164
    %1393 = vmatpush1.msra.mxu0 %v1163
    %1394 = vmatprep.subr.mxu0 %v1160
    %1395 = vmatpush1.msra.mxu0 %v1159
    %1396 = vmatprep.subr.mxu0 %v1156
    %1397 = vmatpush1.msra.mxu0 %v1155
    %1398 = vmatprep.subr.mxu0 %v1152
    %1399 = vmatpush1.msra.mxu0 %v1151
    %1400 = vmatprep.subr.mxu0 %v1148
    %1401 = vmatpush1.msra.mxu0 %v1147
    %1402 = vmatprep.subr.mxu0 %v1144
    %1403 = vmatpush1.msra.mxu0 %v1143
    %1404 = vmatprep.subr.mxu0 0.0
    %1405 = vmatpush2.msra.mxu0 0.0
    %1406 = vmatprep.subr.mxu0 0.0
    %1407 = vmatpush2.msra.mxu0 0.0
    %1408 = vmatprep.subr.mxu0 %v1260
    %1409 = vmatpush2.msra.mxu0 %v1259
    %1410 = vmatprep.subr.mxu0 %v1256
    %1411 = vmatpush2.msra.mxu0 %v1255
    %1412 = vmatprep.subr.mxu0 %v1252
    %1413 = vmatpush2.msra.mxu0 %v1251
    %1414 = vmatprep.subr.mxu0 %v1248
    %1415 = vmatpush2.msra.mxu0 %v1247
    %1416 = vmatprep.subr.mxu0 %v1244
    %1417 = vmatpush2.msra.mxu0 %v1243
    %1418 = vmatprep.subr.mxu0 %v1240
    %1419 = vmatpush2.msra.mxu0 %v1239
    %1420 = vmatprep.subr.mxu0 %v1236
    %1421 = vmatpush2.msra.mxu0 %v1235
    %1422 = vmatprep.subr.mxu0 %v1232
    %1423 = vmatpush2.msra.mxu0 %v1231
    %1424 = vmatprep.subr.mxu0 %v1228
    %1425 = vmatpush2.msra.mxu0 %v1227
    %1426 = vmatprep.subr.mxu0 %v1224
    %1427 = vmatpush2.msra.mxu0 %v1223
    %1428 = vmatprep.subr.mxu0 %v1220
    %1429 = vmatpush2.msra.mxu0 %v1219
    %1430 = vmatprep.subr.mxu0 %v1216
    %1431 = vmatpush2.msra.mxu0 %v1215
    %1432 = vmatprep.subr.mxu0 %v1212
    %1433 = vmatpush2.msra.mxu0 %v1211
    %1434 = vmatprep.subr.mxu0 %v1208
    %1435 = vmatpush2.msra.mxu0 %v1207
    %1436 = vmatprep.mubr.f32.mxu0 %v1281
    %1437 = vmatmul.mubr.f32.gmra.mxu0 %v1135
    %v1438 = vpop.f32.mrf.mxu0
    %v1439 = vadd.f32 %v1267, %v1438
    %v1440 = vpop.f32.mrf.mxu0
    %v1441 = vadd.f32 %v1267, %v1440
    %1442 = vmatprep.mubr.f32.mxu0 %v1284
    %1443 = vmatmul.mubr.f32.gmra.mxu0 %v1137
    %v1444 = vpop.f32.mrf.mxu0
    %v1445 = vadd.f32 %v1272, %v1444
    %v1446 = vpop.f32.mrf.mxu0
    %v1447 = vadd.f32 %v1272, %v1446
    %1448 = vmatprep.mubr.f32.mxu0 %v1287
    %1449 = vmatmul.mubr.f32.gmra.mxu0 %v1139
    %v1450 = vpop.f32.mrf.mxu0
    %v1451 = vadd.f32 %v1277, %v1450
    %v1452 = vpop.f32.mrf.mxu0
    %v1453 = vadd.f32 %v1277, %v1452
    %1454 = vdwg.mxu0
    %vm1455 = vcmp.gt.f32.partialorder %v1356, 0.0
    %vm1456 = vcmp.gt.f32.partialorder %v1358, 0.0
    %vm1457 = vcmp.gt.f32.partialorder %v1439, 0.0
    %vm1458 = vcmp.gt.f32.partialorder %v1441, 0.0
    %vm1459 = vcmp.gt.f32.partialorder %v1362, 0.0
    %vm1460 = vcmp.gt.f32.partialorder %v1364, 0.0
    %vm1461 = vcmp.gt.f32.partialorder %v1445, 0.0
    %vm1462 = vcmp.gt.f32.partialorder %v1447, 0.0
    %vm1463 = vcmp.gt.f32.partialorder %v1368, 0.0
    %vm1464 = vcmp.gt.f32.partialorder %v1370, 0.0
    %vm1465 = vcmp.gt.f32.partialorder %v1451, 0.0
    %vm1466 = vcmp.gt.f32.partialorder %v1453, 0.0
    %v1467 = vmul.f32 %v1356, 0.01
    %v1468 = vmul.f32 %v1358, 0.01
    %v1469 = vmul.f32 %v1439, 0.01
    %v1470 = vmul.f32 %v1441, 0.01
    %v1471 = vmul.f32 %v1362, 0.01
    %v1472 = vmul.f32 %v1364, 0.01
    %v1473 = vmul.f32 %v1445, 0.01
    %v1474 = vmul.f32 %v1447, 0.01
    %v1475 = vmul.f32 %v1368, 0.01
    %v1476 = vmul.f32 %v1370, 0.01
    %v1477 = vmul.f32 %v1451, 0.01
    %v1478 = vmul.f32 %v1453, 0.01
    %v1479 = vsel %vm1455, %v1356, %v1467
    %v1480 = vsel %vm1456, %v1358, %v1468
    %v1481 = vsel %vm1457, %v1439, %v1469
    %v1482 = vsel %vm1458, %v1441, %v1470
    %v1483 = vsel %vm1459, %v1362, %v1471
    %v1484 = vsel %vm1460, %v1364, %v1472
    %v1485 = vsel %vm1461, %v1445, %v1473
    %v1486 = vsel %vm1462, %v1447, %v1474
    %v1487 = vsel %vm1463, %v1368, %v1475
    %v1488 = vsel %vm1464, %v1370, %v1476
    %v1489 = vsel %vm1465, %v1451, %v1477
    %v1490 = vsel %vm1466, %v1453, %v1478
    %v1491 = vmul.f32 %v1479, %v124
    %v1492 = vmul.f32 %v1480, %v125
    %v1493 = vmul.f32 %v1481, %v126
    %v1494 = vmul.f32 %v1482, %v127
    %v1495 = vmul.f32 %v1483, %v124
    %v1496 = vmul.f32 %v1484, %v125
    %v1497 = vmul.f32 %v1485, %v126
    %v1498 = vmul.f32 %v1486, %v127
    %v1499 = vmul.f32 %v1487, %v124
    %v1500 = vmul.f32 %v1488, %v125
    %v1501 = vmul.f32 %v1489, %v126
    %v1502 = vmul.f32 %v1490, %v127
    %v1503 = vld [vmem:[#allocation6 + $0x50] sm:$0xff]
    %v1504 = vld [vmem:[#allocation6 + $0x60] sm:$0xff]
    %v1505 = vld [vmem:[#allocation6 + $0x70] sm:$0xff]
    %1506 = vset.pattern.permute.xlu0 3
    %1507 = vperm.xlu0 %1506, %v1261
    %v1508 = vpop.permute.xlu0 %1507
    %1510 = vset.pattern.permute.xlu0 3
    %1511 = vperm.xlu0 %1510, %v1262
    %v1512 = vpop.permute.xlu0 %1511
    %1514 = vset.pattern.permute.xlu0 3
    %1515 = vperm.xlu0 %1514, %v1263
    %v1516 = vpop.permute.xlu0 %1515
    %vm1518 = vcmask 195584
    %v1520 = vsel %vm1518, %v1503, 0
    %v1523 = vsel %vm1518, %v1504, 0
    %v1526 = vsel %vm1518, %v1505, 0
    %1528 = vmatprep.subr.mxu0 0.0
    %1529 = vmatpush1.msra.mxu0 0.0
    %1530 = vmatprep.subr.mxu0 0.0
    %1531 = vmatpush1.msra.mxu0 0.0
    %1532 = vmatprep.subr.mxu0 0.0
    %1533 = vmatpush1.msra.mxu0 0.0
    %1534 = vmatprep.subr.mxu0 0.0
    %1535 = vmatpush1.msra.mxu0 0.0
    %1536 = vmatprep.subr.mxu0 0.0
    %1537 = vmatpush1.msra.mxu0 0.0
    %1538 = vmatprep.subr.mxu0 0.0
    %1539 = vmatpush1.msra.mxu0 0.0
    %1540 = vmatprep.subr.mxu0 0.0
    %1541 = vmatpush1.msra.mxu0 0.0
    %1542 = vmatprep.subr.mxu0 0.0
    %1543 = vmatpush1.msra.mxu0 0.0
    %1544 = vmatprep.subr.mxu0 0.0
    %1545 = vmatpush1.msra.mxu0 0.0
    %1546 = vmatprep.subr.mxu0 0.0
    %1547 = vmatpush1.msra.mxu0 0.0
    %1548 = vmatprep.subr.mxu0 0.0
    %1549 = vmatpush1.msra.mxu0 0.0
    %1550 = vmatprep.subr.mxu0 0.0
    %1551 = vmatpush1.msra.mxu0 0.0
    %1552 = vmatprep.subr.mxu0 0.0
    %1553 = vmatpush1.msra.mxu0 0.0
    %1554 = vmatprep.subr.mxu0 %v1500
    %1555 = vmatpush1.msra.mxu0 %v1499
    %1556 = vmatprep.subr.mxu0 %v1496
    %1557 = vmatpush1.msra.mxu0 %v1495
    %1558 = vmatprep.subr.mxu0 %v1492
    %1559 = vmatpush1.msra.mxu0 %v1491
    %1560 = vmatprep.subr.mxu0 0.0
    %1561 = vmatpush2.msra.mxu0 0.0
    %1562 = vmatprep.subr.mxu0 0.0
    %1563 = vmatpush2.msra.mxu0 0.0
    %1564 = vmatprep.subr.mxu0 0.0
    %1565 = vmatpush2.msra.mxu0 0.0
    %1566 = vmatprep.subr.mxu0 0.0
    %1567 = vmatpush2.msra.mxu0 0.0
    %1568 = vmatprep.subr.mxu0 0.0
    %1569 = vmatpush2.msra.mxu0 0.0
    %1570 = vmatprep.subr.mxu0 0.0
    %1571 = vmatpush2.msra.mxu0 0.0
    %1572 = vmatprep.subr.mxu0 0.0
    %1573 = vmatpush2.msra.mxu0 0.0
    %1574 = vmatprep.subr.mxu0 0.0
    %1575 = vmatpush2.msra.mxu0 0.0
    %1576 = vmatprep.subr.mxu0 0.0
    %1577 = vmatpush2.msra.mxu0 0.0
    %1578 = vmatprep.subr.mxu0 0.0
    %1579 = vmatpush2.msra.mxu0 0.0
    %1580 = vmatprep.subr.mxu0 0.0
    %1581 = vmatpush2.msra.mxu0 0.0
    %1582 = vmatprep.subr.mxu0 0.0
    %1583 = vmatpush2.msra.mxu0 0.0
    %1584 = vmatprep.subr.mxu0 0.0
    %1585 = vmatpush2.msra.mxu0 0.0
    %1586 = vmatprep.subr.mxu0 0.0
    %1587 = vmatpush2.msra.mxu0 0.0
    %1588 = vmatprep.subr.mxu0 0.0
    %1589 = vmatpush2.msra.mxu0 0.0
    %1590 = vmatprep.subr.mxu0 0.0
    %1591 = vmatpush2.msra.mxu0 0.0
    %1592 = vmatprep.mubr.f32.mxu0 0.0
    %1593 = vmatmul.mubr.f32.gmra.mxu0 %v1520
    %v1594 = vpop.f32.mrf.mxu0
    %v1595 = vadd.f32 %v1508, %v1594
    %v1596 = vpop.f32.mrf.mxu0
    %v1597 = vadd.f32 %v1508, %v1596
    %1598 = vmatprep.mubr.f32.mxu0 0.0
    %1599 = vmatmul.mubr.f32.gmra.mxu0 %v1523
    %v1600 = vpop.f32.mrf.mxu0
    %v1601 = vadd.f32 %v1512, %v1600
    %v1602 = vpop.f32.mrf.mxu0
    %v1603 = vadd.f32 %v1512, %v1602
    %1604 = vmatprep.mubr.f32.mxu0 0.0
    %1605 = vmatmul.mubr.f32.gmra.mxu0 %v1526
    %v1606 = vpop.f32.mrf.mxu0
    %v1607 = vadd.f32 %v1516, %v1606
    %v1608 = vpop.f32.mrf.mxu0
    %v1609 = vadd.f32 %v1516, %v1608
    %1610 = vdwg.mxu0
    %1611 = vmatprep.subr.mxu0 0.0
    %1612 = vmatpush1.msra.mxu0 0.0
    %1613 = vmatprep.subr.mxu0 0.0
    %1614 = vmatpush1.msra.mxu0 0.0
    %1615 = vmatprep.subr.mxu0 0.0
    %1616 = vmatpush1.msra.mxu0 0.0
    %1617 = vmatprep.subr.mxu0 0.0
    %1618 = vmatpush1.msra.mxu0 0.0
    %1619 = vmatprep.subr.mxu0 0.0
    %1620 = vmatpush1.msra.mxu0 0.0
    %1621 = vmatprep.subr.mxu0 0.0
    %1622 = vmatpush1.msra.mxu0 0.0
    %1623 = vmatprep.subr.mxu0 0.0
    %1624 = vmatpush1.msra.mxu0 0.0
    %1625 = vmatprep.subr.mxu0 0.0
    %1626 = vmatpush1.msra.mxu0 0.0
    %1627 = vmatprep.subr.mxu0 0.0
    %1628 = vmatpush1.msra.mxu0 0.0
    %1629 = vmatprep.subr.mxu0 0.0
    %1630 = vmatpush1.msra.mxu0 0.0
    %1631 = vmatprep.subr.mxu0 0.0
    %1632 = vmatpush1.msra.mxu0 0.0
    %1633 = vmatprep.subr.mxu0 0.0
    %1634 = vmatpush1.msra.mxu0 0.0
    %1635 = vmatprep.subr.mxu0 0.0
    %1636 = vmatpush1.msra.mxu0 0.0
    %1637 = vmatprep.subr.mxu0 %v1502
    %1638 = vmatpush1.msra.mxu0 %v1501
    %1639 = vmatprep.subr.mxu0 %v1498
    %1640 = vmatpush1.msra.mxu0 %v1497
    %1641 = vmatprep.subr.mxu0 %v1494
    %1642 = vmatpush1.msra.mxu0 %v1493
    %1643 = vmatprep.subr.mxu0 0.0
    %1644 = vmatpush2.msra.mxu0 0.0
    %1645 = vmatprep.subr.mxu0 0.0
    %1646 = vmatpush2.msra.mxu0 0.0
    %1647 = vmatprep.subr.mxu0 0.0
    %1648 = vmatpush2.msra.mxu0 0.0
    %1649 = vmatprep.subr.mxu0 0.0
    %1650 = vmatpush2.msra.mxu0 0.0
    %1651 = vmatprep.subr.mxu0 0.0
    %1652 = vmatpush2.msra.mxu0 0.0
    %1653 = vmatprep.subr.mxu0 0.0
    %1654 = vmatpush2.msra.mxu0 0.0
    %1655 = vmatprep.subr.mxu0 0.0
    %1656 = vmatpush2.msra.mxu0 0.0
    %1657 = vmatprep.subr.mxu0 0.0
    %1658 = vmatpush2.msra.mxu0 0.0
    %1659 = vmatprep.subr.mxu0 0.0
    %1660 = vmatpush2.msra.mxu0 0.0
    %1661 = vmatprep.subr.mxu0 0.0
    %1662 = vmatpush2.msra.mxu0 0.0
    %1663 = vmatprep.subr.mxu0 0.0
    %1664 = vmatpush2.msra.mxu0 0.0
    %1665 = vmatprep.subr.mxu0 0.0
    %1666 = vmatpush2.msra.mxu0 0.0
    %1667 = vmatprep.subr.mxu0 0.0
    %1668 = vmatpush2.msra.mxu0 0.0
    %1669 = vmatprep.subr.mxu0 0.0
    %1670 = vmatpush2.msra.mxu0 0.0
    %1671 = vmatprep.subr.mxu0 0.0
    %1672 = vmatpush2.msra.mxu0 0.0
    %1673 = vmatprep.subr.mxu0 0.0
    %1674 = vmatpush2.msra.mxu0 0.0
    %1675 = vmatprep.mubr.f32.mxu0 0.0
    %1676 = vmatmul.mubr.f32.gmra.mxu0 %v1520
    %v1677 = vpop.f32.mrf.mxu0
    %v1678 = vadd.f32 %v1508, %v1677
    %v1679 = vpop.f32.mrf.mxu0
    %v1680 = vadd.f32 %v1508, %v1679
    %1681 = vmatprep.mubr.f32.mxu0 0.0
    %1682 = vmatmul.mubr.f32.gmra.mxu0 %v1523
    %v1683 = vpop.f32.mrf.mxu0
    %v1684 = vadd.f32 %v1512, %v1683
    %v1685 = vpop.f32.mrf.mxu0
    %v1686 = vadd.f32 %v1512, %v1685
    %1687 = vmatprep.mubr.f32.mxu0 0.0
    %1688 = vmatmul.mubr.f32.gmra.mxu0 %v1526
    %v1689 = vpop.f32.mrf.mxu0
    %v1690 = vadd.f32 %v1516, %v1689
    %v1691 = vpop.f32.mrf.mxu0
    %v1692 = vadd.f32 %v1516, %v1691
    %1693 = vdwg.mxu0
    %vm1694 = vcmp.gt.f32.partialorder %v1595, 0.0
    %vm1695 = vcmp.gt.f32.partialorder %v1597, 0.0
    %vm1696 = vcmp.gt.f32.partialorder %v1678, 0.0
    %vm1697 = vcmp.gt.f32.partialorder %v1680, 0.0
    %vm1698 = vcmp.gt.f32.partialorder %v1601, 0.0
    %vm1699 = vcmp.gt.f32.partialorder %v1603, 0.0
    %vm1700 = vcmp.gt.f32.partialorder %v1684, 0.0
    %vm1701 = vcmp.gt.f32.partialorder %v1686, 0.0
    %vm1702 = vcmp.gt.f32.partialorder %v1607, 0.0
    %vm1703 = vcmp.gt.f32.partialorder %v1609, 0.0
    %vm1704 = vcmp.gt.f32.partialorder %v1690, 0.0
    %vm1705 = vcmp.gt.f32.partialorder %v1692, 0.0
    %v1706 = vmul.f32 %v1595, 0.01
    %v1707 = vmul.f32 %v1597, 0.01
    %v1708 = vmul.f32 %v1678, 0.01
    %v1709 = vmul.f32 %v1680, 0.01
    %v1710 = vmul.f32 %v1601, 0.01
    %v1711 = vmul.f32 %v1603, 0.01
    %v1712 = vmul.f32 %v1684, 0.01
    %v1713 = vmul.f32 %v1686, 0.01
    %v1714 = vmul.f32 %v1607, 0.01
    %v1715 = vmul.f32 %v1609, 0.01
    %v1716 = vmul.f32 %v1690, 0.01
    %v1717 = vmul.f32 %v1692, 0.01
    %v1718 = vsel %vm1694, %v1595, %v1706
    %v1719 = vsel %vm1695, %v1597, %v1707
    %v1720 = vsel %vm1696, %v1678, %v1708
    %v1721 = vsel %vm1697, %v1680, %v1709
    %v1722 = vsel %vm1698, %v1601, %v1710
    %v1723 = vsel %vm1699, %v1603, %v1711
    %v1724 = vsel %vm1700, %v1684, %v1712
    %v1725 = vsel %vm1701, %v1686, %v1713
    %v1726 = vsel %vm1702, %v1607, %v1714
    %v1727 = vsel %vm1703, %v1609, %v1715
    %v1728 = vsel %vm1704, %v1690, %v1716
    %v1729 = vsel %vm1705, %v1692, %v1717
    %1730 = vrot.lane.b32.xlu0 %v1491, 2
    %v1731 = vpop.permute.xlu0 %1730
    %1732 = vrot.lane.b32.xlu0 %v1495, 2
    %v1733 = vpop.permute.xlu0 %1732
    %1734 = vrot.lane.b32.xlu0 %v1499, 2
    %v1735 = vpop.permute.xlu0 %1734
    %1736 = vrot.lane.b32.xlu0 %v1492, 2
    %v1737 = vpop.permute.xlu0 %1736
    %1738 = vrot.lane.b32.xlu0 %v1496, 2
    %v1739 = vpop.permute.xlu0 %1738
    %1740 = vrot.lane.b32.xlu0 %v1500, 2
    %v1741 = vpop.permute.xlu0 %1740
    %1742 = vrot.lane.b32.xlu0 %v1493, 2
    %v1743 = vpop.permute.xlu0 %1742
    %1744 = vrot.lane.b32.xlu0 %v1497, 2
    %v1745 = vpop.permute.xlu0 %1744
    %1746 = vrot.lane.b32.xlu0 %v1501, 2
    %v1747 = vpop.permute.xlu0 %1746
    %1748 = vrot.lane.b32.xlu0 %v1494, 2
    %v1749 = vpop.permute.xlu0 %1748
    %1750 = vrot.lane.b32.xlu0 %v1498, 2
    %v1751 = vpop.permute.xlu0 %1750
    %1752 = vrot.lane.b32.xlu0 %v1502, 2
    %v1753 = vpop.permute.xlu0 %1752
    %v1754 = vsel %vm846, %v1743, %v1749
    %v1755 = vsel %vm846, %v1745, %v1751
    %v1756 = vsel %vm846, %v1747, %v1753
    %v1757 = vsel %vm846, %v1737, %v1743
    %v1758 = vsel %vm846, %v1739, %v1745
    %v1759 = vsel %vm846, %v1741, %v1747
    %v1760 = vsel %vm846, %v1731, %v1737
    %v1761 = vsel %vm846, %v1733, %v1739
    %v1762 = vsel %vm846, %v1735, %v1741
    %v1763 = vsel %vm846, %v1749, %v1731
    %v1764 = vsel %vm846, %v1751, %v1733
    %v1765 = vsel %vm846, %v1753, %v1735
    %1766 = vst [vmem:[#allocation2] sm:$0xff] %v1763
    %1767 = vst [vmem:[#allocation2 + $0x8] sm:$0xff] %v1760
    %1768 = vst [vmem:[#allocation2 + $0x10] sm:$0xff] %v1757
    %1769 = vst [vmem:[#allocation2 + $0x18] sm:$0xff] %v1754
    %1770 = vst [vmem:[#allocation2 + $0x20] sm:$0xff] %v1764
    %1771 = vst [vmem:[#allocation2 + $0x28] sm:$0xff] %v1761
    %1772 = vst [vmem:[#allocation2 + $0x30] sm:$0xff] %v1758
    %1773 = vst [vmem:[#allocation2 + $0x38] sm:$0xff] %v1755
    %1774 = vst [vmem:[#allocation2 + $0x40] sm:$0xff] %v1765
    %1775 = vst [vmem:[#allocation2 + $0x48] sm:$0xff] %v1762
    %1776 = vst [vmem:[#allocation2 + $0x50] sm:$0xff] %v1759
    %1777 = vst [vmem:[#allocation2 + $0x58] sm:$0xff] %v1756
    %1778 = vrot.lane.b32.xlu0 %v1491, 1
    %v1779 = vpop.permute.xlu0 %1778
    %1780 = vrot.lane.b32.xlu0 %v1495, 1
    %v1781 = vpop.permute.xlu0 %1780
    %1782 = vrot.lane.b32.xlu0 %v1499, 1
    %v1783 = vpop.permute.xlu0 %1782
    %1784 = vrot.lane.b32.xlu0 %v1492, 1
    %v1785 = vpop.permute.xlu0 %1784
    %1786 = vrot.lane.b32.xlu0 %v1496, 1
    %v1787 = vpop.permute.xlu0 %1786
    %1788 = vrot.lane.b32.xlu0 %v1500, 1
    %v1789 = vpop.permute.xlu0 %1788
    %1790 = vrot.lane.b32.xlu0 %v1493, 1
    %v1791 = vpop.permute.xlu0 %1790
    %1792 = vrot.lane.b32.xlu0 %v1497, 1
    %v1793 = vpop.permute.xlu0 %1792
    %1794 = vrot.lane.b32.xlu0 %v1501, 1
    %v1795 = vpop.permute.xlu0 %1794
    %1796 = vrot.lane.b32.xlu0 %v1494, 1
    %v1797 = vpop.permute.xlu0 %1796
    %1798 = vrot.lane.b32.xlu0 %v1498, 1
    %v1799 = vpop.permute.xlu0 %1798
    %1800 = vrot.lane.b32.xlu0 %v1502, 1
    %v1801 = vpop.permute.xlu0 %1800
    %v1802 = vsel %vm879, %v1791, %v1797
    %v1803 = vsel %vm879, %v1793, %v1799
    %v1804 = vsel %vm879, %v1795, %v1801
    %v1805 = vsel %vm879, %v1785, %v1791
    %v1806 = vsel %vm879, %v1787, %v1793
    %v1807 = vsel %vm879, %v1789, %v1795
    %v1808 = vsel %vm879, %v1779, %v1785
    %v1809 = vsel %vm879, %v1781, %v1787
    %v1810 = vsel %vm879, %v1783, %v1789
    %v1811 = vsel %vm879, %v1797, %v1779
    %v1812 = vsel %vm879, %v1799, %v1781
    %v1813 = vsel %vm879, %v1801, %v1783
    %1814 = vst [vmem:[#allocation2 + $0x60] sm:$0xff] %v1811
    %1815 = vst [vmem:[#allocation2 + $0x68] sm:$0xff] %v1808
    %1816 = vst [vmem:[#allocation2 + $0x70] sm:$0xff] %v1805
    %1817 = vst [vmem:[#allocation2 + $0x78] sm:$0xff] %v1802
    %1818 = vst [vmem:[#allocation2 + $0x80] sm:$0xff] %v1812
    %1819 = vst [vmem:[#allocation2 + $0x88] sm:$0xff] %v1809
    %1820 = vst [vmem:[#allocation2 + $0x90] sm:$0xff] %v1806
    %1821 = vst [vmem:[#allocation2 + $0x98] sm:$0xff] %v1803
    %1822 = vst [vmem:[#allocation2 + $0xa0] sm:$0xff] %v1813
    %1823 = vst [vmem:[#allocation2 + $0xa8] sm:$0xff] %v1810
    %1824 = vst [vmem:[#allocation2 + $0xb0] sm:$0xff] %v1807
    %1825 = vst [vmem:[#allocation2 + $0xb8] sm:$0xff] %v1804
    %1826 = vst [vmem:[#allocation2 + $0xc0] sm:$0xff] %v1491
    %1827 = vst [vmem:[#allocation2 + $0xc8] sm:$0xff] %v1492
    %1828 = vst [vmem:[#allocation2 + $0xd0] sm:$0xff] %v1493
    %1829 = vst [vmem:[#allocation2 + $0xd8] sm:$0xff] %v1494
    %1830 = vst [vmem:[#allocation2 + $0xe0] sm:$0xff] %v1495
    %1831 = vst [vmem:[#allocation2 + $0xe8] sm:$0xff] %v1496
    %1832 = vst [vmem:[#allocation2 + $0xf0] sm:$0xff] %v1497
    %1833 = vst [vmem:[#allocation2 + $0xf8] sm:$0xff] %v1498
    %1834 = vst [vmem:[#allocation2 + $0x100] sm:$0xff] %v1499
    %1835 = vst [vmem:[#allocation2 + $0x108] sm:$0xff] %v1500
    %1836 = vst [vmem:[#allocation2 + $0x110] sm:$0xff] %v1501
    %1837 = vst [vmem:[#allocation2 + $0x118] sm:$0xff] %v1502
    %1838 = vrot.lane.b32.xlu0 %v1491, 127
    %v1839 = vpop.permute.xlu0 %1838
    %1840 = vrot.lane.b32.xlu0 %v1495, 127
    %v1841 = vpop.permute.xlu0 %1840
    %1842 = vrot.lane.b32.xlu0 %v1499, 127
    %v1843 = vpop.permute.xlu0 %1842
    %1844 = vrot.lane.b32.xlu0 %v1492, 127
    %v1845 = vpop.permute.xlu0 %1844
    %1846 = vrot.lane.b32.xlu0 %v1496, 127
    %v1847 = vpop.permute.xlu0 %1846
    %1848 = vrot.lane.b32.xlu0 %v1500, 127
    %v1849 = vpop.permute.xlu0 %1848
    %1850 = vrot.lane.b32.xlu0 %v1493, 127
    %v1851 = vpop.permute.xlu0 %1850
    %1852 = vrot.lane.b32.xlu0 %v1497, 127
    %v1853 = vpop.permute.xlu0 %1852
    %1854 = vrot.lane.b32.xlu0 %v1501, 127
    %v1855 = vpop.permute.xlu0 %1854
    %1856 = vrot.lane.b32.xlu0 %v1494, 127
    %v1857 = vpop.permute.xlu0 %1856
    %1858 = vrot.lane.b32.xlu0 %v1498, 127
    %v1859 = vpop.permute.xlu0 %1858
    %1860 = vrot.lane.b32.xlu0 %v1502, 127
    %v1861 = vpop.permute.xlu0 %1860
    %v1862 = vsel %vm920, %v1851, %v1857
    %v1863 = vsel %vm920, %v1853, %v1859
    %v1864 = vsel %vm920, %v1855, %v1861
    %v1865 = vsel %vm920, %v1845, %v1851
    %v1866 = vsel %vm920, %v1847, %v1853
    %v1867 = vsel %vm920, %v1849, %v1855
    %v1868 = vsel %vm920, %v1839, %v1845
    %v1869 = vsel %vm920, %v1841, %v1847
    %v1870 = vsel %vm920, %v1843, %v1849
    %v1871 = vsel %vm920, %v1857, %v1839
    %v1872 = vsel %vm920, %v1859, %v1841
    %v1873 = vsel %vm920, %v1861, %v1843
    %1874 = vst [vmem:[#allocation2 + $0x120] sm:$0xff] %v1868
    %1875 = vst [vmem:[#allocation2 + $0x128] sm:$0xff] %v1865
    %1876 = vst [vmem:[#allocation2 + $0x130] sm:$0xff] %v1862
    %1877 = vst [vmem:[#allocation2 + $0x138] sm:$0xff] %v1871
    %1878 = vst [vmem:[#allocation2 + $0x140] sm:$0xff] %v1869
    %1879 = vst [vmem:[#allocation2 + $0x148] sm:$0xff] %v1866
    %1880 = vst [vmem:[#allocation2 + $0x150] sm:$0xff] %v1863
    %1881 = vst [vmem:[#allocation2 + $0x158] sm:$0xff] %v1872
    %1882 = vst [vmem:[#allocation2 + $0x160] sm:$0xff] %v1870
    %1883 = vst [vmem:[#allocation2 + $0x168] sm:$0xff] %v1867
    %1884 = vst [vmem:[#allocation2 + $0x170] sm:$0xff] %v1864
    %1885 = vst [vmem:[#allocation2 + $0x178] sm:$0xff] %v1873
    %1886 = vrot.lane.b32.xlu0 %v1491, 126
    %v1887 = vpop.permute.xlu0 %1886
    %1888 = vrot.lane.b32.xlu0 %v1495, 126
    %v1889 = vpop.permute.xlu0 %1888
    %1890 = vrot.lane.b32.xlu0 %v1499, 126
    %v1891 = vpop.permute.xlu0 %1890
    %1892 = vrot.lane.b32.xlu0 %v1492, 126
    %v1893 = vpop.permute.xlu0 %1892
    %1894 = vrot.lane.b32.xlu0 %v1496, 126
    %v1895 = vpop.permute.xlu0 %1894
    %1896 = vrot.lane.b32.xlu0 %v1500, 126
    %v1897 = vpop.permute.xlu0 %1896
    %1898 = vrot.lane.b32.xlu0 %v1493, 126
    %v1899 = vpop.permute.xlu0 %1898
    %1900 = vrot.lane.b32.xlu0 %v1497, 126
    %v1901 = vpop.permute.xlu0 %1900
    %1902 = vrot.lane.b32.xlu0 %v1501, 126
    %v1903 = vpop.permute.xlu0 %1902
    %1904 = vrot.lane.b32.xlu0 %v1494, 126
    %v1905 = vpop.permute.xlu0 %1904
    %1906 = vrot.lane.b32.xlu0 %v1498, 126
    %v1907 = vpop.permute.xlu0 %1906
    %1908 = vrot.lane.b32.xlu0 %v1502, 126
    %v1909 = vpop.permute.xlu0 %1908
    %v1910 = vsel %vm953, %v1899, %v1905
    %v1911 = vsel %vm953, %v1901, %v1907
    %v1912 = vsel %vm953, %v1903, %v1909
    %v1913 = vsel %vm953, %v1893, %v1899
    %v1914 = vsel %vm953, %v1895, %v1901
    %v1915 = vsel %vm953, %v1897, %v1903
    %v1916 = vsel %vm953, %v1887, %v1893
    %v1917 = vsel %vm953, %v1889, %v1895
    %v1918 = vsel %vm953, %v1891, %v1897
    %v1919 = vsel %vm953, %v1905, %v1887
    %v1920 = vsel %vm953, %v1907, %v1889
    %v1921 = vsel %vm953, %v1909, %v1891
    %1922 = vst [vmem:[#allocation2 + $0x180] sm:$0xff] %v1916
    %1923 = vst [vmem:[#allocation2 + $0x188] sm:$0xff] %v1913
    %1924 = vst [vmem:[#allocation2 + $0x190] sm:$0xff] %v1910
    %1925 = vst [vmem:[#allocation2 + $0x198] sm:$0xff] %v1919
    %1926 = vst [vmem:[#allocation2 + $0x1a0] sm:$0xff] %v1917
    %1927 = vst [vmem:[#allocation2 + $0x1a8] sm:$0xff] %v1914
    %1928 = vst [vmem:[#allocation2 + $0x1b0] sm:$0xff] %v1911
    %1929 = vst [vmem:[#allocation2 + $0x1b8] sm:$0xff] %v1920
    %1930 = vst [vmem:[#allocation2 + $0x1c0] sm:$0xff] %v1918
    %1931 = vst [vmem:[#allocation2 + $0x1c8] sm:$0xff] %v1915
    %1932 = vst [vmem:[#allocation2 + $0x1d0] sm:$0xff] %v1912
    %1933 = vst [vmem:[#allocation2 + $0x1d8] sm:$0xff] %v1921
    %v1934 = vld [vmem:[#allocation6 + $0x80] sm:$0xff]
    %v1935 = vld [vmem:[#allocation6 + $0x90] sm:$0xff]
    %v1936 = vld [vmem:[#allocation6 + $0xa0] sm:$0xff]
    %v1937 = vld [vmem:[#allocation6 + $0xb0] sm:$0xff]
    %v1938 = vld [vmem:[#allocation6 + $0xc0] sm:$0xff]
    %v1939 = vld [vmem:[#allocation2] sm:$0xff]
    %v1940 = vld [vmem:[#allocation2 + $0x8] sm:$0xff]
    %v1941 = vld [vmem:[#allocation2 + $0x10] sm:$0xff]
    %v1942 = vld [vmem:[#allocation2 + $0x18] sm:$0xff]
    %v1943 = vld [vmem:[#allocation2 + $0x20] sm:$0xff]
    %v1944 = vld [vmem:[#allocation2 + $0x28] sm:$0xff]
    %v1945 = vld [vmem:[#allocation2 + $0x30] sm:$0xff]
    %v1946 = vld [vmem:[#allocation2 + $0x38] sm:$0xff]
    %v1947 = vld [vmem:[#allocation2 + $0x40] sm:$0xff]
    %v1948 = vld [vmem:[#allocation2 + $0x48] sm:$0xff]
    %v1949 = vld [vmem:[#allocation2 + $0x50] sm:$0xff]
    %v1950 = vld [vmem:[#allocation2 + $0x58] sm:$0xff]
    %v1951 = vld [vmem:[#allocation2 + $0x60] sm:$0xff]
    %v1952 = vld [vmem:[#allocation2 + $0x68] sm:$0xff]
    %v1953 = vld [vmem:[#allocation2 + $0x70] sm:$0xff]
    %v1954 = vld [vmem:[#allocation2 + $0x78] sm:$0xff]
    %v1955 = vld [vmem:[#allocation2 + $0x80] sm:$0xff]
    %v1956 = vld [vmem:[#allocation2 + $0x88] sm:$0xff]
    %v1957 = vld [vmem:[#allocation2 + $0x90] sm:$0xff]
    %v1958 = vld [vmem:[#allocation2 + $0x98] sm:$0xff]
    %v1959 = vld [vmem:[#allocation2 + $0xa0] sm:$0xff]
    %v1960 = vld [vmem:[#allocation2 + $0xa8] sm:$0xff]
    %v1961 = vld [vmem:[#allocation2 + $0xb0] sm:$0xff]
    %v1962 = vld [vmem:[#allocation2 + $0xb8] sm:$0xff]
    %v1963 = vld [vmem:[#allocation2 + $0xc0] sm:$0xff]
    %v1964 = vld [vmem:[#allocation2 + $0xc8] sm:$0xff]
    %v1965 = vld [vmem:[#allocation2 + $0xd0] sm:$0xff]
    %v1966 = vld [vmem:[#allocation2 + $0xd8] sm:$0xff]
    %v1967 = vld [vmem:[#allocation2 + $0xe0] sm:$0xff]
    %v1968 = vld [vmem:[#allocation2 + $0xe8] sm:$0xff]
    %v1969 = vld [vmem:[#allocation2 + $0xf0] sm:$0xff]
    %v1970 = vld [vmem:[#allocation2 + $0xf8] sm:$0xff]
    %v1971 = vld [vmem:[#allocation2 + $0x100] sm:$0xff]
    %v1972 = vld [vmem:[#allocation2 + $0x108] sm:$0xff]
    %v1973 = vld [vmem:[#allocation2 + $0x110] sm:$0xff]
    %v1974 = vld [vmem:[#allocation2 + $0x118] sm:$0xff]
    %v1975 = vld [vmem:[#allocation2 + $0x120] sm:$0xff]
    %v1976 = vld [vmem:[#allocation2 + $0x128] sm:$0xff]
    %v1977 = vld [vmem:[#allocation2 + $0x130] sm:$0xff]
    %v1978 = vld [vmem:[#allocation2 + $0x138] sm:$0xff]
    %v1979 = vld [vmem:[#allocation2 + $0x140] sm:$0xff]
    %v1980 = vld [vmem:[#allocation2 + $0x148] sm:$0xff]
    %v1981 = vld [vmem:[#allocation2 + $0x150] sm:$0xff]
    %v1982 = vld [vmem:[#allocation2 + $0x158] sm:$0xff]
    %v1983 = vld [vmem:[#allocation2 + $0x160] sm:$0xff]
    %v1984 = vld [vmem:[#allocation2 + $0x168] sm:$0xff]
    %v1985 = vld [vmem:[#allocation2 + $0x170] sm:$0xff]
    %v1986 = vld [vmem:[#allocation2 + $0x178] sm:$0xff]
    %v1987 = vld [vmem:[#allocation2 + $0x180] sm:$0xff]
    %v1988 = vld [vmem:[#allocation2 + $0x188] sm:$0xff]
    %v1989 = vld [vmem:[#allocation2 + $0x190] sm:$0xff]
    %v1990 = vld [vmem:[#allocation2 + $0x198] sm:$0xff]
    %v1991 = vld [vmem:[#allocation2 + $0x1a0] sm:$0xff]
    %v1992 = vld [vmem:[#allocation2 + $0x1a8] sm:$0xff]
    %v1993 = vld [vmem:[#allocation2 + $0x1b0] sm:$0xff]
    %v1994 = vld [vmem:[#allocation2 + $0x1b8] sm:$0xff]
    %v1995 = vld [vmem:[#allocation2 + $0x1c0] sm:$0xff]
    %v1996 = vld [vmem:[#allocation2 + $0x1c8] sm:$0xff]
    %v1997 = vld [vmem:[#allocation2 + $0x1d0] sm:$0xff]
    %v1998 = vld [vmem:[#allocation2 + $0x1d8] sm:$0xff]
    %v1999 = vld [vmem:[%s3] sm:$0xff]
    %v2000 = vld [vmem:[%s3 + $0x8] sm:$0xff]
    %v2001 = vld [vmem:[%s3 + $0x10] sm:$0xff]
    %v2002 = vld [vmem:[%s3 + $0x18] sm:$0xff]
    %v2003 = vld [vmem:[%s3 + $0x20] sm:$0xff]
    %2005 = vset.pattern.permute.xlu0 4
    %2006 = vperm.xlu0 %2005, %v1999
    %v2007 = vpop.permute.xlu0 %2006
    %2010 = vset.pattern.permute.xlu0 4
    %2011 = vperm.xlu0 %2010, %v2000
    %v2012 = vpop.permute.xlu0 %2011
    %2015 = vset.pattern.permute.xlu0 4
    %2016 = vperm.xlu0 %2015, %v2001
    %v2017 = vpop.permute.xlu0 %2016
    %2020 = vset.pattern.permute.xlu0 4
    %2021 = vperm.xlu0 %2020, %v2002
    %v2022 = vpop.permute.xlu0 %2021
    %2025 = vset.pattern.permute.xlu0 4
    %2026 = vperm.xlu0 %2025, %v2003
    %v2027 = vpop.permute.xlu0 %2026
    %vm2029 = vcmask 982016
    %v2031 = vsel %vm2029, %v1934, 0
    %v2034 = vsel %vm2029, %v1935, 0
    %v2037 = vsel %vm2029, %v1936, 0
    %v2040 = vsel %vm2029, %v1937, 0
    %v2043 = vsel %vm2029, %v1938, 0
    %2045 = vmatprep.subr.mxu0 0.0
    %2046 = vmatpush1.msra.mxu0 0.0
    %2047 = vmatprep.subr.mxu0 %v1996
    %2048 = vmatpush1.msra.mxu0 %v1995
    %2049 = vmatprep.subr.mxu0 %v1992
    %2050 = vmatpush1.msra.mxu0 %v1991
    %2051 = vmatprep.subr.mxu0 %v1988
    %2052 = vmatpush1.msra.mxu0 %v1987
    %2053 = vmatprep.subr.mxu0 %v1984
    %2054 = vmatpush1.msra.mxu0 %v1983
    %2055 = vmatprep.subr.mxu0 %v1980
    %2056 = vmatpush1.msra.mxu0 %v1979
    %2057 = vmatprep.subr.mxu0 %v1976
    %2058 = vmatpush1.msra.mxu0 %v1975
    %2059 = vmatprep.subr.mxu0 %v1972
    %2060 = vmatpush1.msra.mxu0 %v1971
    %2061 = vmatprep.subr.mxu0 %v1968
    %2062 = vmatpush1.msra.mxu0 %v1967
    %2063 = vmatprep.subr.mxu0 %v1964
    %2064 = vmatpush1.msra.mxu0 %v1963
    %2065 = vmatprep.subr.mxu0 %v1960
    %2066 = vmatpush1.msra.mxu0 %v1959
    %2067 = vmatprep.subr.mxu0 %v1956
    %2068 = vmatpush1.msra.mxu0 %v1955
    %2069 = vmatprep.subr.mxu0 %v1952
    %2070 = vmatpush1.msra.mxu0 %v1951
    %2071 = vmatprep.subr.mxu0 %v1948
    %2072 = vmatpush1.msra.mxu0 %v1947
    %2073 = vmatprep.subr.mxu0 %v1944
    %2074 = vmatpush1.msra.mxu0 %v1943
    %2075 = vmatprep.subr.mxu0 %v1940
    %2076 = vmatpush1.msra.mxu0 %v1939
    %2077 = vmatprep.subr.mxu0 0.0
    %2078 = vmatpush2.msra.mxu0 0.0
    %2079 = vmatprep.subr.mxu0 0.0
    %2080 = vmatpush2.msra.mxu0 0.0
    %2081 = vmatprep.subr.mxu0 0.0
    %2082 = vmatpush2.msra.mxu0 0.0
    %2083 = vmatprep.subr.mxu0 0.0
    %2084 = vmatpush2.msra.mxu0 0.0
    %2085 = vmatprep.subr.mxu0 0.0
    %2086 = vmatpush2.msra.mxu0 0.0
    %2087 = vmatprep.subr.mxu0 0.0
    %2088 = vmatpush2.msra.mxu0 0.0
    %2089 = vmatprep.subr.mxu0 0.0
    %2090 = vmatpush2.msra.mxu0 0.0
    %2091 = vmatprep.subr.mxu0 0.0
    %2092 = vmatpush2.msra.mxu0 0.0
    %2093 = vmatprep.subr.mxu0 0.0
    %2094 = vmatpush2.msra.mxu0 0.0
    %2095 = vmatprep.subr.mxu0 0.0
    %2096 = vmatpush2.msra.mxu0 0.0
    %2097 = vmatprep.subr.mxu0 0.0
    %2098 = vmatpush2.msra.mxu0 0.0
    %2099 = vmatprep.subr.mxu0 0.0
    %2100 = vmatpush2.msra.mxu0 0.0
    %2101 = vmatprep.subr.mxu0 0.0
    %2102 = vmatpush2.msra.mxu0 0.0
    %2103 = vmatprep.subr.mxu0 0.0
    %2104 = vmatpush2.msra.mxu0 0.0
    %2105 = vmatprep.subr.mxu0 0.0
    %2106 = vmatpush2.msra.mxu0 0.0
    %2107 = vmatprep.subr.mxu0 0.0
    %2108 = vmatpush2.msra.mxu0 0.0
    %2109 = vmatprep.mubr.f32.mxu0 0.0
    %2110 = vmatmul.mubr.f32.gmra.mxu0 %v2031
    %v2111 = vpop.f32.mrf.mxu0
    %v2112 = vadd.f32 %v2007, %v2111
    %v2113 = vpop.f32.mrf.mxu0
    %v2114 = vadd.f32 %v2007, %v2113
    %2115 = vmatprep.mubr.f32.mxu0 0.0
    %2116 = vmatmul.mubr.f32.gmra.mxu0 %v2034
    %v2117 = vpop.f32.mrf.mxu0
    %v2118 = vadd.f32 %v2012, %v2117
    %v2119 = vpop.f32.mrf.mxu0
    %v2120 = vadd.f32 %v2012, %v2119
    %2121 = vmatprep.mubr.f32.mxu0 0.0
    %2122 = vmatmul.mubr.f32.gmra.mxu0 %v2037
    %v2123 = vpop.f32.mrf.mxu0
    %v2124 = vadd.f32 %v2017, %v2123
    %v2125 = vpop.f32.mrf.mxu0
    %v2126 = vadd.f32 %v2017, %v2125
    %2127 = vmatprep.mubr.f32.mxu0 0.0
    %2128 = vmatmul.mubr.f32.gmra.mxu0 %v2040
    %v2129 = vpop.f32.mrf.mxu0
    %v2130 = vadd.f32 %v2022, %v2129
    %v2131 = vpop.f32.mrf.mxu0
    %v2132 = vadd.f32 %v2022, %v2131
    %2133 = vmatprep.mubr.f32.mxu0 0.0
    %2134 = vmatmul.mubr.f32.gmra.mxu0 %v2043
    %v2135 = vpop.f32.mrf.mxu0
    %v2136 = vadd.f32 %v2027, %v2135
    %v2137 = vpop.f32.mrf.mxu0
    %v2138 = vadd.f32 %v2027, %v2137
    %2139 = vdwg.mxu0
    %2140 = vmatprep.subr.mxu0 0.0
    %2141 = vmatpush1.msra.mxu0 0.0
    %2142 = vmatprep.subr.mxu0 %v1998
    %2143 = vmatpush1.msra.mxu0 %v1997
    %2144 = vmatprep.subr.mxu0 %v1994
    %2145 = vmatpush1.msra.mxu0 %v1993
    %2146 = vmatprep.subr.mxu0 %v1990
    %2147 = vmatpush1.msra.mxu0 %v1989
    %2148 = vmatprep.subr.mxu0 %v1986
    %2149 = vmatpush1.msra.mxu0 %v1985
    %2150 = vmatprep.subr.mxu0 %v1982
    %2151 = vmatpush1.msra.mxu0 %v1981
    %2152 = vmatprep.subr.mxu0 %v1978
    %2153 = vmatpush1.msra.mxu0 %v1977
    %2154 = vmatprep.subr.mxu0 %v1974
    %2155 = vmatpush1.msra.mxu0 %v1973
    %2156 = vmatprep.subr.mxu0 %v1970
    %2157 = vmatpush1.msra.mxu0 %v1969
    %2158 = vmatprep.subr.mxu0 %v1966
    %2159 = vmatpush1.msra.mxu0 %v1965
    %2160 = vmatprep.subr.mxu0 %v1962
    %2161 = vmatpush1.msra.mxu0 %v1961
    %2162 = vmatprep.subr.mxu0 %v1958
    %2163 = vmatpush1.msra.mxu0 %v1957
    %2164 = vmatprep.subr.mxu0 %v1954
    %2165 = vmatpush1.msra.mxu0 %v1953
    %2166 = vmatprep.subr.mxu0 %v1950
    %2167 = vmatpush1.msra.mxu0 %v1949
    %2168 = vmatprep.subr.mxu0 %v1946
    %2169 = vmatpush1.msra.mxu0 %v1945
    %2170 = vmatprep.subr.mxu0 %v1942
    %2171 = vmatpush1.msra.mxu0 %v1941
    %2172 = vmatprep.subr.mxu0 0.0
    %2173 = vmatpush2.msra.mxu0 0.0
    %2174 = vmatprep.subr.mxu0 0.0
    %2175 = vmatpush2.msra.mxu0 0.0
    %2176 = vmatprep.subr.mxu0 0.0
    %2177 = vmatpush2.msra.mxu0 0.0
    %2178 = vmatprep.subr.mxu0 0.0
    %2179 = vmatpush2.msra.mxu0 0.0
    %2180 = vmatprep.subr.mxu0 0.0
    %2181 = vmatpush2.msra.mxu0 0.0
    %2182 = vmatprep.subr.mxu0 0.0
    %2183 = vmatpush2.msra.mxu0 0.0
    %2184 = vmatprep.subr.mxu0 0.0
    %2185 = vmatpush2.msra.mxu0 0.0
    %2186 = vmatprep.subr.mxu0 0.0
    %2187 = vmatpush2.msra.mxu0 0.0
    %2188 = vmatprep.subr.mxu0 0.0
    %2189 = vmatpush2.msra.mxu0 0.0
    %2190 = vmatprep.subr.mxu0 0.0
    %2191 = vmatpush2.msra.mxu0 0.0
    %2192 = vmatprep.subr.mxu0 0.0
    %2193 = vmatpush2.msra.mxu0 0.0
    %2194 = vmatprep.subr.mxu0 0.0
    %2195 = vmatpush2.msra.mxu0 0.0
    %2196 = vmatprep.subr.mxu0 0.0
    %2197 = vmatpush2.msra.mxu0 0.0
    %2198 = vmatprep.subr.mxu0 0.0
    %2199 = vmatpush2.msra.mxu0 0.0
    %2200 = vmatprep.subr.mxu0 0.0
    %2201 = vmatpush2.msra.mxu0 0.0
    %2202 = vmatprep.subr.mxu0 0.0
    %2203 = vmatpush2.msra.mxu0 0.0
    %2204 = vmatprep.mubr.f32.mxu0 0.0
    %2205 = vmatmul.mubr.f32.gmra.mxu0 %v2031
    %v2206 = vpop.f32.mrf.mxu0
    %v2207 = vadd.f32 %v2007, %v2206
    %v2208 = vpop.f32.mrf.mxu0
    %v2209 = vadd.f32 %v2007, %v2208
    %2210 = vmatprep.mubr.f32.mxu0 0.0
    %2211 = vmatmul.mubr.f32.gmra.mxu0 %v2034
    %v2212 = vpop.f32.mrf.mxu0
    %v2213 = vadd.f32 %v2012, %v2212
    %v2214 = vpop.f32.mrf.mxu0
    %v2215 = vadd.f32 %v2012, %v2214
    %2216 = vmatprep.mubr.f32.mxu0 0.0
    %2217 = vmatmul.mubr.f32.gmra.mxu0 %v2037
    %v2218 = vpop.f32.mrf.mxu0
    %v2219 = vadd.f32 %v2017, %v2218
    %v2220 = vpop.f32.mrf.mxu0
    %v2221 = vadd.f32 %v2017, %v2220
    %2222 = vmatprep.mubr.f32.mxu0 0.0
    %2223 = vmatmul.mubr.f32.gmra.mxu0 %v2040
    %v2224 = vpop.f32.mrf.mxu0
    %v2225 = vadd.f32 %v2022, %v2224
    %v2226 = vpop.f32.mrf.mxu0
    %v2227 = vadd.f32 %v2022, %v2226
    %2228 = vmatprep.mubr.f32.mxu0 0.0
    %2229 = vmatmul.mubr.f32.gmra.mxu0 %v2043
    %v2230 = vpop.f32.mrf.mxu0
    %v2231 = vadd.f32 %v2027, %v2230
    %v2232 = vpop.f32.mrf.mxu0
    %v2233 = vadd.f32 %v2027, %v2232
    %2234 = vdwg.mxu0
    %vm2235 = vcmp.gt.f32.partialorder %v2112, 0.0
    %vm2236 = vcmp.gt.f32.partialorder %v2114, 0.0
    %vm2237 = vcmp.gt.f32.partialorder %v2207, 0.0
    %vm2238 = vcmp.gt.f32.partialorder %v2209, 0.0
    %vm2239 = vcmp.gt.f32.partialorder %v2118, 0.0
    %vm2240 = vcmp.gt.f32.partialorder %v2120, 0.0
    %vm2241 = vcmp.gt.f32.partialorder %v2213, 0.0
    %vm2242 = vcmp.gt.f32.partialorder %v2215, 0.0
    %vm2243 = vcmp.gt.f32.partialorder %v2124, 0.0
    %vm2244 = vcmp.gt.f32.partialorder %v2126, 0.0
    %vm2245 = vcmp.gt.f32.partialorder %v2219, 0.0
    %vm2246 = vcmp.gt.f32.partialorder %v2221, 0.0
    %vm2247 = vcmp.gt.f32.partialorder %v2130, 0.0
    %vm2248 = vcmp.gt.f32.partialorder %v2132, 0.0
    %vm2249 = vcmp.gt.f32.partialorder %v2225, 0.0
    %vm2250 = vcmp.gt.f32.partialorder %v2227, 0.0
    %vm2251 = vcmp.gt.f32.partialorder %v2136, 0.0
    %vm2252 = vcmp.gt.f32.partialorder %v2138, 0.0
    %vm2253 = vcmp.gt.f32.partialorder %v2231, 0.0
    %vm2254 = vcmp.gt.f32.partialorder %v2233, 0.0
    %v2255 = vmul.f32 %v2112, 0.01
    %v2256 = vmul.f32 %v2114, 0.01
    %v2257 = vmul.f32 %v2207, 0.01
    %v2258 = vmul.f32 %v2209, 0.01
    %v2259 = vmul.f32 %v2118, 0.01
    %v2260 = vmul.f32 %v2120, 0.01
    %v2261 = vmul.f32 %v2213, 0.01
    %v2262 = vmul.f32 %v2215, 0.01
    %v2263 = vmul.f32 %v2124, 0.01
    %v2264 = vmul.f32 %v2126, 0.01
    %v2265 = vmul.f32 %v2219, 0.01
    %v2266 = vmul.f32 %v2221, 0.01
    %v2267 = vmul.f32 %v2130, 0.01
    %v2268 = vmul.f32 %v2132, 0.01
    %v2269 = vmul.f32 %v2225, 0.01
    %v2270 = vmul.f32 %v2227, 0.01
    %v2271 = vmul.f32 %v2136, 0.01
    %v2272 = vmul.f32 %v2138, 0.01
    %v2273 = vmul.f32 %v2231, 0.01
    %v2274 = vmul.f32 %v2233, 0.01
    %v2275 = vsel %vm2235, %v2112, %v2255
    %v2276 = vsel %vm2236, %v2114, %v2256
    %v2277 = vsel %vm2237, %v2207, %v2257
    %v2278 = vsel %vm2238, %v2209, %v2258
    %v2279 = vsel %vm2239, %v2118, %v2259
    %v2280 = vsel %vm2240, %v2120, %v2260
    %v2281 = vsel %vm2241, %v2213, %v2261
    %v2282 = vsel %vm2242, %v2215, %v2262
    %v2283 = vsel %vm2243, %v2124, %v2263
    %v2284 = vsel %vm2244, %v2126, %v2264
    %v2285 = vsel %vm2245, %v2219, %v2265
    %v2286 = vsel %vm2246, %v2221, %v2266
    %v2287 = vsel %vm2247, %v2130, %v2267
    %v2288 = vsel %vm2248, %v2132, %v2268
    %v2289 = vsel %vm2249, %v2225, %v2269
    %v2290 = vsel %vm2250, %v2227, %v2270
    %v2291 = vsel %vm2251, %v2136, %v2271
    %v2292 = vsel %vm2252, %v2138, %v2272
    %v2293 = vsel %vm2253, %v2231, %v2273
    %v2294 = vsel %vm2254, %v2233, %v2274
    %v2295 = vld [vmem:[#allocation6 + $0x88] sm:$0xff]
    %v2296 = vld [vmem:[#allocation6 + $0x98] sm:$0xff]
    %v2297 = vld [vmem:[#allocation6 + $0xa8] sm:$0xff]
    %v2298 = vld [vmem:[#allocation6 + $0xb8] sm:$0xff]
    %v2299 = vld [vmem:[#allocation6 + $0xc8] sm:$0xff]
    %2300 = vset.pattern.permute.xlu0 5
    %2301 = vperm.xlu0 %2300, %v1999
    %v2302 = vpop.permute.xlu0 %2301
    %2304 = vset.pattern.permute.xlu0 5
    %2305 = vperm.xlu0 %2304, %v2000
    %v2306 = vpop.permute.xlu0 %2305
    %2308 = vset.pattern.permute.xlu0 5
    %2309 = vperm.xlu0 %2308, %v2001
    %v2310 = vpop.permute.xlu0 %2309
    %2312 = vset.pattern.permute.xlu0 5
    %2313 = vperm.xlu0 %2312, %v2002
    %v2314 = vpop.permute.xlu0 %2313
    %2316 = vset.pattern.permute.xlu0 5
    %2317 = vperm.xlu0 %2316, %v2003
    %v2318 = vpop.permute.xlu0 %2317
    %vm2320 = vcmask 326656
    %v2322 = vsel %vm2320, %v2295, 0
    %v2325 = vsel %vm2320, %v2296, 0
    %v2328 = vsel %vm2320, %v2297, 0
    %v2331 = vsel %vm2320, %v2298, 0
    %v2334 = vsel %vm2320, %v2299, 0
    %2336 = vmatprep.subr.mxu0 0.0
    %2337 = vmatpush1.msra.mxu0 0.0
    %2338 = vmatprep.subr.mxu0 0.0
    %2339 = vmatpush1.msra.mxu0 0.0
    %2340 = vmatprep.subr.mxu0 0.0
    %2341 = vmatpush1.msra.mxu0 0.0
    %2342 = vmatprep.subr.mxu0 0.0
    %2343 = vmatpush1.msra.mxu0 0.0
    %2344 = vmatprep.subr.mxu0 0.0
    %2345 = vmatpush1.msra.mxu0 0.0
    %2346 = vmatprep.subr.mxu0 0.0
    %2347 = vmatpush1.msra.mxu0 0.0
    %2348 = vmatprep.subr.mxu0 0.0
    %2349 = vmatpush1.msra.mxu0 0.0
    %2350 = vmatprep.subr.mxu0 0.0
    %2351 = vmatpush1.msra.mxu0 0.0
    %2352 = vmatprep.subr.mxu0 0.0
    %2353 = vmatpush1.msra.mxu0 0.0
    %2354 = vmatprep.subr.mxu0 0.0
    %2355 = vmatpush1.msra.mxu0 0.0
    %2356 = vmatprep.subr.mxu0 0.0
    %2357 = vmatpush1.msra.mxu0 0.0
    %2358 = vmatprep.subr.mxu0 %v2292
    %2359 = vmatpush1.msra.mxu0 %v2291
    %2360 = vmatprep.subr.mxu0 %v2288
    %2361 = vmatpush1.msra.mxu0 %v2287
    %2362 = vmatprep.subr.mxu0 %v2284
    %2363 = vmatpush1.msra.mxu0 %v2283
    %2364 = vmatprep.subr.mxu0 %v2280
    %2365 = vmatpush1.msra.mxu0 %v2279
    %2366 = vmatprep.subr.mxu0 %v2276
    %2367 = vmatpush1.msra.mxu0 %v2275
    %2368 = vmatprep.subr.mxu0 0.0
    %2369 = vmatpush2.msra.mxu0 0.0
    %2370 = vmatprep.subr.mxu0 0.0
    %2371 = vmatpush2.msra.mxu0 0.0
    %2372 = vmatprep.subr.mxu0 0.0
    %2373 = vmatpush2.msra.mxu0 0.0
    %2374 = vmatprep.subr.mxu0 0.0
    %2375 = vmatpush2.msra.mxu0 0.0
    %2376 = vmatprep.subr.mxu0 0.0
    %2377 = vmatpush2.msra.mxu0 0.0
    %2378 = vmatprep.subr.mxu0 0.0
    %2379 = vmatpush2.msra.mxu0 0.0
    %2380 = vmatprep.subr.mxu0 0.0
    %2381 = vmatpush2.msra.mxu0 0.0
    %2382 = vmatprep.subr.mxu0 0.0
    %2383 = vmatpush2.msra.mxu0 0.0
    %2384 = vmatprep.subr.mxu0 0.0
    %2385 = vmatpush2.msra.mxu0 0.0
    %2386 = vmatprep.subr.mxu0 0.0
    %2387 = vmatpush2.msra.mxu0 0.0
    %2388 = vmatprep.subr.mxu0 0.0
    %2389 = vmatpush2.msra.mxu0 0.0
    %2390 = vmatprep.subr.mxu0 0.0
    %2391 = vmatpush2.msra.mxu0 0.0
    %2392 = vmatprep.subr.mxu0 0.0
    %2393 = vmatpush2.msra.mxu0 0.0
    %2394 = vmatprep.subr.mxu0 0.0
    %2395 = vmatpush2.msra.mxu0 0.0
    %2396 = vmatprep.subr.mxu0 0.0
    %2397 = vmatpush2.msra.mxu0 0.0
    %2398 = vmatprep.subr.mxu0 0.0
    %2399 = vmatpush2.msra.mxu0 0.0
    %2400 = vmatprep.mubr.f32.mxu0 0.0
    %2401 = vmatmul.mubr.f32.gmra.mxu0 %v2322
    %v2402 = vpop.f32.mrf.mxu0
    %v2403 = vadd.f32 %v2302, %v2402
    %v2404 = vpop.f32.mrf.mxu0
    %v2405 = vadd.f32 %v2302, %v2404
    %2406 = vmatprep.mubr.f32.mxu0 0.0
    %2407 = vmatmul.mubr.f32.gmra.mxu0 %v2325
    %v2408 = vpop.f32.mrf.mxu0
    %v2409 = vadd.f32 %v2306, %v2408
    %v2410 = vpop.f32.mrf.mxu0
    %v2411 = vadd.f32 %v2306, %v2410
    %2412 = vmatprep.mubr.f32.mxu0 0.0
    %2413 = vmatmul.mubr.f32.gmra.mxu0 %v2328
    %v2414 = vpop.f32.mrf.mxu0
    %v2415 = vadd.f32 %v2310, %v2414
    %v2416 = vpop.f32.mrf.mxu0
    %v2417 = vadd.f32 %v2310, %v2416
    %2418 = vmatprep.mubr.f32.mxu0 0.0
    %2419 = vmatmul.mubr.f32.gmra.mxu0 %v2331
    %v2420 = vpop.f32.mrf.mxu0
    %v2421 = vadd.f32 %v2314, %v2420
    %v2422 = vpop.f32.mrf.mxu0
    %v2423 = vadd.f32 %v2314, %v2422
    %2424 = vmatprep.mubr.f32.mxu0 0.0
    %2425 = vmatmul.mubr.f32.gmra.mxu0 %v2334
    %v2426 = vpop.f32.mrf.mxu0
    %v2427 = vadd.f32 %v2318, %v2426
    %v2428 = vpop.f32.mrf.mxu0
    %v2429 = vadd.f32 %v2318, %v2428
    %2430 = vdwg.mxu0
    %2431 = vmatprep.subr.mxu0 0.0
    %2432 = vmatpush1.msra.mxu0 0.0
    %2433 = vmatprep.subr.mxu0 0.0
    %2434 = vmatpush1.msra.mxu0 0.0
    %2435 = vmatprep.subr.mxu0 0.0
    %2436 = vmatpush1.msra.mxu0 0.0
    %2437 = vmatprep.subr.mxu0 0.0
    %2438 = vmatpush1.msra.mxu0 0.0
    %2439 = vmatprep.subr.mxu0 0.0
    %2440 = vmatpush1.msra.mxu0 0.0
    %2441 = vmatprep.subr.mxu0 0.0
    %2442 = vmatpush1.msra.mxu0 0.0
    %2443 = vmatprep.subr.mxu0 0.0
    %2444 = vmatpush1.msra.mxu0 0.0
    %2445 = vmatprep.subr.mxu0 0.0
    %2446 = vmatpush1.msra.mxu0 0.0
    %2447 = vmatprep.subr.mxu0 0.0
    %2448 = vmatpush1.msra.mxu0 0.0
    %2449 = vmatprep.subr.mxu0 0.0
    %2450 = vmatpush1.msra.mxu0 0.0
    %2451 = vmatprep.subr.mxu0 0.0
    %2452 = vmatpush1.msra.mxu0 0.0
    %2453 = vmatprep.subr.mxu0 %v2294
    %2454 = vmatpush1.msra.mxu0 %v2293
    %2455 = vmatprep.subr.mxu0 %v2290
    %2456 = vmatpush1.msra.mxu0 %v2289
    %2457 = vmatprep.subr.mxu0 %v2286
    %2458 = vmatpush1.msra.mxu0 %v2285
    %2459 = vmatprep.subr.mxu0 %v2282
    %2460 = vmatpush1.msra.mxu0 %v2281
    %2461 = vmatprep.subr.mxu0 %v2278
    %2462 = vmatpush1.msra.mxu0 %v2277
    %2463 = vmatprep.subr.mxu0 0.0
    %2464 = vmatpush2.msra.mxu0 0.0
    %2465 = vmatprep.subr.mxu0 0.0
    %2466 = vmatpush2.msra.mxu0 0.0
    %2467 = vmatprep.subr.mxu0 0.0
    %2468 = vmatpush2.msra.mxu0 0.0
    %2469 = vmatprep.subr.mxu0 0.0
    %2470 = vmatpush2.msra.mxu0 0.0
    %2471 = vmatprep.subr.mxu0 0.0
    %2472 = vmatpush2.msra.mxu0 0.0
    %2473 = vmatprep.subr.mxu0 0.0
    %2474 = vmatpush2.msra.mxu0 0.0
    %2475 = vmatprep.subr.mxu0 0.0
    %2476 = vmatpush2.msra.mxu0 0.0
    %2477 = vmatprep.subr.mxu0 0.0
    %2478 = vmatpush2.msra.mxu0 0.0
    %2479 = vmatprep.subr.mxu0 0.0
    %2480 = vmatpush2.msra.mxu0 0.0
    %2481 = vmatprep.subr.mxu0 0.0
    %2482 = vmatpush2.msra.mxu0 0.0
    %2483 = vmatprep.subr.mxu0 0.0
    %2484 = vmatpush2.msra.mxu0 0.0
    %2485 = vmatprep.subr.mxu0 0.0
    %2486 = vmatpush2.msra.mxu0 0.0
    %2487 = vmatprep.subr.mxu0 0.0
    %2488 = vmatpush2.msra.mxu0 0.0
    %2489 = vmatprep.subr.mxu0 0.0
    %2490 = vmatpush2.msra.mxu0 0.0
    %2491 = vmatprep.subr.mxu0 0.0
    %2492 = vmatpush2.msra.mxu0 0.0
    %2493 = vmatprep.subr.mxu0 0.0
    %2494 = vmatpush2.msra.mxu0 0.0
    %2495 = vmatprep.mubr.f32.mxu0 0.0
    %2496 = vmatmul.mubr.f32.gmra.mxu0 %v2322
    %v2497 = vpop.f32.mrf.mxu0
    %v2498 = vadd.f32 %v2302, %v2497
    %v2499 = vpop.f32.mrf.mxu0
    %v2500 = vadd.f32 %v2302, %v2499
    %2501 = vmatprep.mubr.f32.mxu0 0.0
    %2502 = vmatmul.mubr.f32.gmra.mxu0 %v2325
    %v2503 = vpop.f32.mrf.mxu0
    %v2504 = vadd.f32 %v2306, %v2503
    %v2505 = vpop.f32.mrf.mxu0
    %v2506 = vadd.f32 %v2306, %v2505
    %2507 = vmatprep.mubr.f32.mxu0 0.0
    %2508 = vmatmul.mubr.f32.gmra.mxu0 %v2328
    %v2509 = vpop.f32.mrf.mxu0
    %v2510 = vadd.f32 %v2310, %v2509
    %v2511 = vpop.f32.mrf.mxu0
    %v2512 = vadd.f32 %v2310, %v2511
    %2513 = vmatprep.mubr.f32.mxu0 0.0
    %2514 = vmatmul.mubr.f32.gmra.mxu0 %v2331
    %v2515 = vpop.f32.mrf.mxu0
    %v2516 = vadd.f32 %v2314, %v2515
    %v2517 = vpop.f32.mrf.mxu0
    %v2518 = vadd.f32 %v2314, %v2517
    %2519 = vmatprep.mubr.f32.mxu0 0.0
    %2520 = vmatmul.mubr.f32.gmra.mxu0 %v2334
    %v2521 = vpop.f32.mrf.mxu0
    %v2522 = vadd.f32 %v2318, %v2521
    %v2523 = vpop.f32.mrf.mxu0
    %v2524 = vadd.f32 %v2318, %v2523
    %2525 = vdwg.mxu0
    %vm2526 = vcmp.gt.f32.partialorder %v2403, 0.0
    %vm2527 = vcmp.gt.f32.partialorder %v2405, 0.0
    %vm2528 = vcmp.gt.f32.partialorder %v2498, 0.0
    %vm2529 = vcmp.gt.f32.partialorder %v2500, 0.0
    %vm2530 = vcmp.gt.f32.partialorder %v2409, 0.0
    %vm2531 = vcmp.gt.f32.partialorder %v2411, 0.0
    %vm2532 = vcmp.gt.f32.partialorder %v2504, 0.0
    %vm2533 = vcmp.gt.f32.partialorder %v2506, 0.0
    %vm2534 = vcmp.gt.f32.partialorder %v2415, 0.0
    %vm2535 = vcmp.gt.f32.partialorder %v2417, 0.0
    %vm2536 = vcmp.gt.f32.partialorder %v2510, 0.0
    %vm2537 = vcmp.gt.f32.partialorder %v2512, 0.0
    %vm2538 = vcmp.gt.f32.partialorder %v2421, 0.0
    %vm2539 = vcmp.gt.f32.partialorder %v2423, 0.0
    %vm2540 = vcmp.gt.f32.partialorder %v2516, 0.0
    %vm2541 = vcmp.gt.f32.partialorder %v2518, 0.0
    %vm2542 = vcmp.gt.f32.partialorder %v2427, 0.0
    %vm2543 = vcmp.gt.f32.partialorder %v2429, 0.0
    %vm2544 = vcmp.gt.f32.partialorder %v2522, 0.0
    %vm2545 = vcmp.gt.f32.partialorder %v2524, 0.0
    %v2546 = vmul.f32 %v2403, 0.01
    %v2547 = vmul.f32 %v2405, 0.01
    %v2548 = vmul.f32 %v2498, 0.01
    %v2549 = vmul.f32 %v2500, 0.01
    %v2550 = vmul.f32 %v2409, 0.01
    %v2551 = vmul.f32 %v2411, 0.01
    %v2552 = vmul.f32 %v2504, 0.01
    %v2553 = vmul.f32 %v2506, 0.01
    %v2554 = vmul.f32 %v2415, 0.01
    %v2555 = vmul.f32 %v2417, 0.01
    %v2556 = vmul.f32 %v2510, 0.01
    %v2557 = vmul.f32 %v2512, 0.01
    %v2558 = vmul.f32 %v2421, 0.01
    %v2559 = vmul.f32 %v2423, 0.01
    %v2560 = vmul.f32 %v2516, 0.01
    %v2561 = vmul.f32 %v2518, 0.01
    %v2562 = vmul.f32 %v2427, 0.01
    %v2563 = vmul.f32 %v2429, 0.01
    %v2564 = vmul.f32 %v2522, 0.01
    %v2565 = vmul.f32 %v2524, 0.01
    %v2566 = vsel %vm2526, %v2403, %v2546
    %v2567 = vsel %vm2527, %v2405, %v2547
    %v2568 = vsel %vm2528, %v2498, %v2548
    %v2569 = vsel %vm2529, %v2500, %v2549
    %v2570 = vsel %vm2530, %v2409, %v2550
    %v2571 = vsel %vm2531, %v2411, %v2551
    %v2572 = vsel %vm2532, %v2504, %v2552
    %v2573 = vsel %vm2533, %v2506, %v2553
    %v2574 = vsel %vm2534, %v2415, %v2554
    %v2575 = vsel %vm2535, %v2417, %v2555
    %v2576 = vsel %vm2536, %v2510, %v2556
    %v2577 = vsel %vm2537, %v2512, %v2557
    %v2578 = vsel %vm2538, %v2421, %v2558
    %v2579 = vsel %vm2539, %v2423, %v2559
    %v2580 = vsel %vm2540, %v2516, %v2560
    %v2581 = vsel %vm2541, %v2518, %v2561
    %v2582 = vsel %vm2542, %v2427, %v2562
    %v2583 = vsel %vm2543, %v2429, %v2563
    %v2584 = vsel %vm2544, %v2522, %v2564
    %v2585 = vsel %vm2545, %v2524, %v2565
    %v2586 = vld [vmem:[#allocation7] sm:$0xff]
    %v2587 = vld [vmem:[#allocation7 + $0x8] sm:$0xff]
    %v2588 = vld [vmem:[#allocation7 + $0xa0] sm:$0xff]
    %v2589 = vld [vmem:[#allocation7 + $0xa8] sm:$0xff]
    %v2590 = vld [vmem:[#allocation7 + $0x140] sm:$0xff]
    %v2591 = vld [vmem:[#allocation7 + $0x148] sm:$0xff]
    %v2592 = vld [vmem:[#allocation7 + $0x1e0] sm:$0xff]
    %v2593 = vld [vmem:[#allocation7 + $0x1e8] sm:$0xff]
    %v2594 = vmul.f32 %v2586, %v657
    %v2595 = vmul.f32 %v2587, %v658
    %v2596 = vmul.f32 %v2588, %v657
    %v2597 = vmul.f32 %v2589, %v658
    %v2598 = vmul.f32 %v2590, %v657
    %v2599 = vmul.f32 %v2591, %v658
    %v2600 = vmul.f32 %v2592, %v657
    %v2601 = vmul.f32 %v2593, %v658
    %v2602 = vrot.slane %v2594, 4
    %v2603 = vadd.f32 %v2594, %v2602
    %v2604 = vrot.slane %v2603, 2
    %v2605 = vadd.f32 %v2603, %v2604
    %v2606 = vrot.slane %v2605, 1
    %v2607 = vadd.f32 %v2605, %v2606
    %v2608 = vrot.slane %v2595, 4
    %v2609 = vadd.f32 %v2595, %v2608
    %v2610 = vrot.slane %v2609, 2
    %v2611 = vadd.f32 %v2609, %v2610
    %v2612 = vrot.slane %v2611, 1
    %v2613 = vadd.f32 %v2611, %v2612
    %v2614 = vrot.slane %v2596, 4
    %v2615 = vadd.f32 %v2596, %v2614
    %v2616 = vrot.slane %v2615, 2
    %v2617 = vadd.f32 %v2615, %v2616
    %v2618 = vrot.slane %v2617, 1
    %v2619 = vadd.f32 %v2617, %v2618
    %v2620 = vrot.slane %v2597, 4
    %v2621 = vadd.f32 %v2597, %v2620
    %v2622 = vrot.slane %v2621, 2
    %v2623 = vadd.f32 %v2621, %v2622
    %v2624 = vrot.slane %v2623, 1
    %v2625 = vadd.f32 %v2623, %v2624
    %v2626 = vrot.slane %v2598, 4
    %v2627 = vadd.f32 %v2598, %v2626
    %v2628 = vrot.slane %v2627, 2
    %v2629 = vadd.f32 %v2627, %v2628
    %v2630 = vrot.slane %v2629, 1
    %v2631 = vadd.f32 %v2629, %v2630
    %v2632 = vrot.slane %v2599, 4
    %v2633 = vadd.f32 %v2599, %v2632
    %v2634 = vrot.slane %v2633, 2
    %v2635 = vadd.f32 %v2633, %v2634
    %v2636 = vrot.slane %v2635, 1
    %v2637 = vadd.f32 %v2635, %v2636
    %v2638 = vrot.slane %v2600, 4
    %v2639 = vadd.f32 %v2600, %v2638
    %v2640 = vrot.slane %v2639, 2
    %v2641 = vadd.f32 %v2639, %v2640
    %v2642 = vrot.slane %v2641, 1
    %v2643 = vadd.f32 %v2641, %v2642
    %v2644 = vrot.slane %v2601, 4
    %v2645 = vadd.f32 %v2601, %v2644
    %v2646 = vrot.slane %v2645, 2
    %v2647 = vadd.f32 %v2645, %v2646
    %v2648 = vrot.slane %v2647, 1
    %v2649 = vadd.f32 %v2647, %v2648
    %v2650 = vadd.f32 %v2607, 0.0
    %v2651 = vadd.f32 %v2613, 0.0
    %v2652 = vadd.f32 %v2619, 0.0
    %v2653 = vadd.f32 %v2625, 0.0
    %v2654 = vadd.f32 %v2631, 0.0
    %v2655 = vadd.f32 %v2637, 0.0
    %v2656 = vadd.f32 %v2643, 0.0
    %v2657 = vadd.f32 %v2649, 0.0
    %v2658 = vmul.f32 %v2586, %v659
    %v2659 = vmul.f32 %v2587, %v660
    %v2660 = vmul.f32 %v2588, %v659
    %v2661 = vmul.f32 %v2589, %v660
    %v2662 = vmul.f32 %v2590, %v659
    %v2663 = vmul.f32 %v2591, %v660
    %v2664 = vmul.f32 %v2592, %v659
    %v2665 = vmul.f32 %v2593, %v660
    %v2666 = vrot.slane %v2658, 4
    %v2667 = vadd.f32 %v2658, %v2666
    %v2668 = vrot.slane %v2667, 2
    %v2669 = vadd.f32 %v2667, %v2668
    %v2670 = vrot.slane %v2669, 1
    %v2671 = vadd.f32 %v2669, %v2670
    %v2672 = vrot.slane %v2659, 4
    %v2673 = vadd.f32 %v2659, %v2672
    %v2674 = vrot.slane %v2673, 2
    %v2675 = vadd.f32 %v2673, %v2674
    %v2676 = vrot.slane %v2675, 1
    %v2677 = vadd.f32 %v2675, %v2676
    %v2678 = vrot.slane %v2660, 4
    %v2679 = vadd.f32 %v2660, %v2678
    %v2680 = vrot.slane %v2679, 2
    %v2681 = vadd.f32 %v2679, %v2680
    %v2682 = vrot.slane %v2681, 1
    %v2683 = vadd.f32 %v2681, %v2682
    %v2684 = vrot.slane %v2661, 4
    %v2685 = vadd.f32 %v2661, %v2684
    %v2686 = vrot.slane %v2685, 2
    %v2687 = vadd.f32 %v2685, %v2686
    %v2688 = vrot.slane %v2687, 1
    %v2689 = vadd.f32 %v2687, %v2688
    %v2690 = vrot.slane %v2662, 4
    %v2691 = vadd.f32 %v2662, %v2690
    %v2692 = vrot.slane %v2691, 2
    %v2693 = vadd.f32 %v2691, %v2692
    %v2694 = vrot.slane %v2693, 1
    %v2695 = vadd.f32 %v2693, %v2694
    %v2696 = vrot.slane %v2663, 4
    %v2697 = vadd.f32 %v2663, %v2696
    %v2698 = vrot.slane %v2697, 2
    %v2699 = vadd.f32 %v2697, %v2698
    %v2700 = vrot.slane %v2699, 1
    %v2701 = vadd.f32 %v2699, %v2700
    %v2702 = vrot.slane %v2664, 4
    %v2703 = vadd.f32 %v2664, %v2702
    %v2704 = vrot.slane %v2703, 2
    %v2705 = vadd.f32 %v2703, %v2704
    %v2706 = vrot.slane %v2705, 1
    %v2707 = vadd.f32 %v2705, %v2706
    %v2708 = vrot.slane %v2665, 4
    %v2709 = vadd.f32 %v2665, %v2708
    %v2710 = vrot.slane %v2709, 2
    %v2711 = vadd.f32 %v2709, %v2710
    %v2712 = vrot.slane %v2711, 1
    %v2713 = vadd.f32 %v2711, %v2712
    %v2714 = vadd.f32 %v2671, 0.0
    %v2715 = vadd.f32 %v2677, 0.0
    %v2716 = vadd.f32 %v2683, 0.0
    %v2717 = vadd.f32 %v2689, 0.0
    %v2718 = vadd.f32 %v2695, 0.0
    %v2719 = vadd.f32 %v2701, 0.0
    %v2720 = vadd.f32 %v2707, 0.0
    %v2721 = vadd.f32 %v2713, 0.0
    %v2722 = vld [vmem:[#allocation7 + $0x10] sm:$0xff]
    %v2723 = vld [vmem:[#allocation7 + $0x18] sm:$0xff]
    %v2724 = vld [vmem:[#allocation7 + $0xb0] sm:$0xff]
    %v2725 = vld [vmem:[#allocation7 + $0xb8] sm:$0xff]
    %v2726 = vld [vmem:[#allocation7 + $0x150] sm:$0xff]
    %v2727 = vld [vmem:[#allocation7 + $0x158] sm:$0xff]
    %v2728 = vld [vmem:[#allocation7 + $0x1f0] sm:$0xff]
    %v2729 = vld [vmem:[#allocation7 + $0x1f8] sm:$0xff]
    %v2730 = vmul.f32 %v2722, %v661
    %v2731 = vmul.f32 %v2723, %v662
    %v2732 = vmul.f32 %v2724, %v661
    %v2733 = vmul.f32 %v2725, %v662
    %v2734 = vmul.f32 %v2726, %v661
    %v2735 = vmul.f32 %v2727, %v662
    %v2736 = vmul.f32 %v2728, %v661
    %v2737 = vmul.f32 %v2729, %v662
    %v2738 = vrot.slane %v2730, 4
    %v2739 = vadd.f32 %v2730, %v2738
    %v2740 = vrot.slane %v2739, 2
    %v2741 = vadd.f32 %v2739, %v2740
    %v2742 = vrot.slane %v2741, 1
    %v2743 = vadd.f32 %v2741, %v2742
    %v2744 = vrot.slane %v2731, 4
    %v2745 = vadd.f32 %v2731, %v2744
    %v2746 = vrot.slane %v2745, 2
    %v2747 = vadd.f32 %v2745, %v2746
    %v2748 = vrot.slane %v2747, 1
    %v2749 = vadd.f32 %v2747, %v2748
    %v2750 = vrot.slane %v2732, 4
    %v2751 = vadd.f32 %v2732, %v2750
    %v2752 = vrot.slane %v2751, 2
    %v2753 = vadd.f32 %v2751, %v2752
    %v2754 = vrot.slane %v2753, 1
    %v2755 = vadd.f32 %v2753, %v2754
    %v2756 = vrot.slane %v2733, 4
    %v2757 = vadd.f32 %v2733, %v2756
    %v2758 = vrot.slane %v2757, 2
    %v2759 = vadd.f32 %v2757, %v2758
    %v2760 = vrot.slane %v2759, 1
    %v2761 = vadd.f32 %v2759, %v2760
    %v2762 = vrot.slane %v2734, 4
    %v2763 = vadd.f32 %v2734, %v2762
    %v2764 = vrot.slane %v2763, 2
    %v2765 = vadd.f32 %v2763, %v2764
    %v2766 = vrot.slane %v2765, 1
    %v2767 = vadd.f32 %v2765, %v2766
    %v2768 = vrot.slane %v2735, 4
    %v2769 = vadd.f32 %v2735, %v2768
    %v2770 = vrot.slane %v2769, 2
    %v2771 = vadd.f32 %v2769, %v2770
    %v2772 = vrot.slane %v2771, 1
    %v2773 = vadd.f32 %v2771, %v2772
    %v2774 = vrot.slane %v2736, 4
    %v2775 = vadd.f32 %v2736, %v2774
    %v2776 = vrot.slane %v2775, 2
    %v2777 = vadd.f32 %v2775, %v2776
    %v2778 = vrot.slane %v2777, 1
    %v2779 = vadd.f32 %v2777, %v2778
    %v2780 = vrot.slane %v2737, 4
    %v2781 = vadd.f32 %v2737, %v2780
    %v2782 = vrot.slane %v2781, 2
    %v2783 = vadd.f32 %v2781, %v2782
    %v2784 = vrot.slane %v2783, 1
    %v2785 = vadd.f32 %v2783, %v2784
    %v2786 = vadd.f32 %v2650, %v2743
    %v2787 = vadd.f32 %v2651, %v2749
    %v2788 = vadd.f32 %v2652, %v2755
    %v2789 = vadd.f32 %v2653, %v2761
    %v2790 = vadd.f32 %v2654, %v2767
    %v2791 = vadd.f32 %v2655, %v2773
    %v2792 = vadd.f32 %v2656, %v2779
    %v2793 = vadd.f32 %v2657, %v2785
    %v2794 = vmul.f32 %v2722, %v663
    %v2795 = vmul.f32 %v2723, %v664
    %v2796 = vmul.f32 %v2724, %v663
    %v2797 = vmul.f32 %v2725, %v664
    %v2798 = vmul.f32 %v2726, %v663
    %v2799 = vmul.f32 %v2727, %v664
    %v2800 = vmul.f32 %v2728, %v663
    %v2801 = vmul.f32 %v2729, %v664
    %v2802 = vrot.slane %v2794, 4
    %v2803 = vadd.f32 %v2794, %v2802
    %v2804 = vrot.slane %v2803, 2
    %v2805 = vadd.f32 %v2803, %v2804
    %v2806 = vrot.slane %v2805, 1
    %v2807 = vadd.f32 %v2805, %v2806
    %v2808 = vrot.slane %v2795, 4
    %v2809 = vadd.f32 %v2795, %v2808
    %v2810 = vrot.slane %v2809, 2
    %v2811 = vadd.f32 %v2809, %v2810
    %v2812 = vrot.slane %v2811, 1
    %v2813 = vadd.f32 %v2811, %v2812
    %v2814 = vrot.slane %v2796, 4
    %v2815 = vadd.f32 %v2796, %v2814
    %v2816 = vrot.slane %v2815, 2
    %v2817 = vadd.f32 %v2815, %v2816
    %v2818 = vrot.slane %v2817, 1
    %v2819 = vadd.f32 %v2817, %v2818
    %v2820 = vrot.slane %v2797, 4
    %v2821 = vadd.f32 %v2797, %v2820
    %v2822 = vrot.slane %v2821, 2
    %v2823 = vadd.f32 %v2821, %v2822
    %v2824 = vrot.slane %v2823, 1
    %v2825 = vadd.f32 %v2823, %v2824
    %v2826 = vrot.slane %v2798, 4
    %v2827 = vadd.f32 %v2798, %v2826
    %v2828 = vrot.slane %v2827, 2
    %v2829 = vadd.f32 %v2827, %v2828
    %v2830 = vrot.slane %v2829, 1
    %v2831 = vadd.f32 %v2829, %v2830
    %v2832 = vrot.slane %v2799, 4
    %v2833 = vadd.f32 %v2799, %v2832
    %v2834 = vrot.slane %v2833, 2
    %v2835 = vadd.f32 %v2833, %v2834
    %v2836 = vrot.slane %v2835, 1
    %v2837 = vadd.f32 %v2835, %v2836
    %v2838 = vrot.slane %v2800, 4
    %v2839 = vadd.f32 %v2800, %v2838
    %v2840 = vrot.slane %v2839, 2
    %v2841 = vadd.f32 %v2839, %v2840
    %v2842 = vrot.slane %v2841, 1
    %v2843 = vadd.f32 %v2841, %v2842
    %v2844 = vrot.slane %v2801, 4
    %v2845 = vadd.f32 %v2801, %v2844
    %v2846 = vrot.slane %v2845, 2
    %v2847 = vadd.f32 %v2845, %v2846
    %v2848 = vrot.slane %v2847, 1
    %v2849 = vadd.f32 %v2847, %v2848
    %v2850 = vadd.f32 %v2714, %v2807
    %v2851 = vadd.f32 %v2715, %v2813
    %v2852 = vadd.f32 %v2716, %v2819
    %v2853 = vadd.f32 %v2717, %v2825
    %v2854 = vadd.f32 %v2718, %v2831
    %v2855 = vadd.f32 %v2719, %v2837
    %v2856 = vadd.f32 %v2720, %v2843
    %v2857 = vadd.f32 %v2721, %v2849
    %v2858 = vld [vmem:[#allocation7 + $0x20] sm:$0xff]
    %v2859 = vld [vmem:[#allocation7 + $0x28] sm:$0xff]
    %v2860 = vld [vmem:[#allocation7 + $0xc0] sm:$0xff]
    %v2861 = vld [vmem:[#allocation7 + $0xc8] sm:$0xff]
    %v2862 = vld [vmem:[#allocation7 + $0x160] sm:$0xff]
    %v2863 = vld [vmem:[#allocation7 + $0x168] sm:$0xff]
    %v2864 = vld [vmem:[#allocation7 + $0x200] sm:$0xff]
    %v2865 = vld [vmem:[#allocation7 + $0x208] sm:$0xff]
    %v2866 = vmul.f32 %v2858, %v1718
    %v2867 = vmul.f32 %v2859, %v1719
    %v2868 = vmul.f32 %v2860, %v1718
    %v2869 = vmul.f32 %v2861, %v1719
    %v2870 = vmul.f32 %v2862, %v1718
    %v2871 = vmul.f32 %v2863, %v1719
    %v2872 = vmul.f32 %v2864, %v1718
    %v2873 = vmul.f32 %v2865, %v1719
    %v2874 = vrot.slane %v2866, 4
    %v2875 = vadd.f32 %v2866, %v2874
    %v2876 = vrot.slane %v2875, 2
    %v2877 = vadd.f32 %v2875, %v2876
    %v2878 = vrot.slane %v2877, 1
    %v2879 = vadd.f32 %v2877, %v2878
    %v2880 = vrot.slane %v2867, 4
    %v2881 = vadd.f32 %v2867, %v2880
    %v2882 = vrot.slane %v2881, 2
    %v2883 = vadd.f32 %v2881, %v2882
    %v2884 = vrot.slane %v2883, 1
    %v2885 = vadd.f32 %v2883, %v2884
    %v2886 = vrot.slane %v2868, 4
    %v2887 = vadd.f32 %v2868, %v2886
    %v2888 = vrot.slane %v2887, 2
    %v2889 = vadd.f32 %v2887, %v2888
    %v2890 = vrot.slane %v2889, 1
    %v2891 = vadd.f32 %v2889, %v2890
    %v2892 = vrot.slane %v2869, 4
    %v2893 = vadd.f32 %v2869, %v2892
    %v2894 = vrot.slane %v2893, 2
    %v2895 = vadd.f32 %v2893, %v2894
    %v2896 = vrot.slane %v2895, 1
    %v2897 = vadd.f32 %v2895, %v2896
    %v2898 = vrot.slane %v2870, 4
    %v2899 = vadd.f32 %v2870, %v2898
    %v2900 = vrot.slane %v2899, 2
    %v2901 = vadd.f32 %v2899, %v2900
    %v2902 = vrot.slane %v2901, 1
    %v2903 = vadd.f32 %v2901, %v2902
    %v2904 = vrot.slane %v2871, 4
    %v2905 = vadd.f32 %v2871, %v2904
    %v2906 = vrot.slane %v2905, 2
    %v2907 = vadd.f32 %v2905, %v2906
    %v2908 = vrot.slane %v2907, 1
    %v2909 = vadd.f32 %v2907, %v2908
    %v2910 = vrot.slane %v2872, 4
    %v2911 = vadd.f32 %v2872, %v2910
    %v2912 = vrot.slane %v2911, 2
    %v2913 = vadd.f32 %v2911, %v2912
    %v2914 = vrot.slane %v2913, 1
    %v2915 = vadd.f32 %v2913, %v2914
    %v2916 = vrot.slane %v2873, 4
    %v2917 = vadd.f32 %v2873, %v2916
    %v2918 = vrot.slane %v2917, 2
    %v2919 = vadd.f32 %v2917, %v2918
    %v2920 = vrot.slane %v2919, 1
    %v2921 = vadd.f32 %v2919, %v2920
    %v2922 = vadd.f32 %v2786, %v2879
    %v2923 = vadd.f32 %v2787, %v2885
    %v2924 = vadd.f32 %v2788, %v2891
    %v2925 = vadd.f32 %v2789, %v2897
    %v2926 = vadd.f32 %v2790, %v2903
    %v2927 = vadd.f32 %v2791, %v2909
    %v2928 = vadd.f32 %v2792, %v2915
    %v2929 = vadd.f32 %v2793, %v2921
    %v2930 = vmul.f32 %v2858, %v1720
    %v2931 = vmul.f32 %v2859, %v1721
    %v2932 = vmul.f32 %v2860, %v1720
    %v2933 = vmul.f32 %v2861, %v1721
    %v2934 = vmul.f32 %v2862, %v1720
    %v2935 = vmul.f32 %v2863, %v1721
    %v2936 = vmul.f32 %v2864, %v1720
    %v2937 = vmul.f32 %v2865, %v1721
    %v2938 = vrot.slane %v2930, 4
    %v2939 = vadd.f32 %v2930, %v2938
    %v2940 = vrot.slane %v2939, 2
    %v2941 = vadd.f32 %v2939, %v2940
    %v2942 = vrot.slane %v2941, 1
    %v2943 = vadd.f32 %v2941, %v2942
    %v2944 = vrot.slane %v2931, 4
    %v2945 = vadd.f32 %v2931, %v2944
    %v2946 = vrot.slane %v2945, 2
    %v2947 = vadd.f32 %v2945, %v2946
    %v2948 = vrot.slane %v2947, 1
    %v2949 = vadd.f32 %v2947, %v2948
    %v2950 = vrot.slane %v2932, 4
    %v2951 = vadd.f32 %v2932, %v2950
    %v2952 = vrot.slane %v2951, 2
    %v2953 = vadd.f32 %v2951, %v2952
    %v2954 = vrot.slane %v2953, 1
    %v2955 = vadd.f32 %v2953, %v2954
    %v2956 = vrot.slane %v2933, 4
    %v2957 = vadd.f32 %v2933, %v2956
    %v2958 = vrot.slane %v2957, 2
    %v2959 = vadd.f32 %v2957, %v2958
    %v2960 = vrot.slane %v2959, 1
    %v2961 = vadd.f32 %v2959, %v2960
    %v2962 = vrot.slane %v2934, 4
    %v2963 = vadd.f32 %v2934, %v2962
    %v2964 = vrot.slane %v2963, 2
    %v2965 = vadd.f32 %v2963, %v2964
    %v2966 = vrot.slane %v2965, 1
    %v2967 = vadd.f32 %v2965, %v2966
    %v2968 = vrot.slane %v2935, 4
    %v2969 = vadd.f32 %v2935, %v2968
    %v2970 = vrot.slane %v2969, 2
    %v2971 = vadd.f32 %v2969, %v2970
    %v2972 = vrot.slane %v2971, 1
    %v2973 = vadd.f32 %v2971, %v2972
    %v2974 = vrot.slane %v2936, 4
    %v2975 = vadd.f32 %v2936, %v2974
    %v2976 = vrot.slane %v2975, 2
    %v2977 = vadd.f32 %v2975, %v2976
    %v2978 = vrot.slane %v2977, 1
    %v2979 = vadd.f32 %v2977, %v2978
    %v2980 = vrot.slane %v2937, 4
    %v2981 = vadd.f32 %v2937, %v2980
    %v2982 = vrot.slane %v2981, 2
    %v2983 = vadd.f32 %v2981, %v2982
    %v2984 = vrot.slane %v2983, 1
    %v2985 = vadd.f32 %v2983, %v2984
    %v2986 = vadd.f32 %v2850, %v2943
    %v2987 = vadd.f32 %v2851, %v2949
    %v2988 = vadd.f32 %v2852, %v2955
    %v2989 = vadd.f32 %v2853, %v2961
    %v2990 = vadd.f32 %v2854, %v2967
    %v2991 = vadd.f32 %v2855, %v2973
    %v2992 = vadd.f32 %v2856, %v2979
    %v2993 = vadd.f32 %v2857, %v2985
    %v2994 = vld [vmem:[#allocation7 + $0x30] sm:$0xff]
    %v2995 = vld [vmem:[#allocation7 + $0x38] sm:$0xff]
    %v2996 = vld [vmem:[#allocation7 + $0xd0] sm:$0xff]
    %v2997 = vld [vmem:[#allocation7 + $0xd8] sm:$0xff]
    %v2998 = vld [vmem:[#allocation7 + $0x170] sm:$0xff]
    %v2999 = vld [vmem:[#allocation7 + $0x178] sm:$0xff]
    %v3000 = vld [vmem:[#allocation7 + $0x210] sm:$0xff]
    %v3001 = vld [vmem:[#allocation7 + $0x218] sm:$0xff]
    %v3002 = vmul.f32 %v2994, %v1722
    %v3003 = vmul.f32 %v2995, %v1723
    %v3004 = vmul.f32 %v2996, %v1722
    %v3005 = vmul.f32 %v2997, %v1723
    %v3006 = vmul.f32 %v2998, %v1722
    %v3007 = vmul.f32 %v2999, %v1723
    %v3008 = vmul.f32 %v3000, %v1722
    %v3009 = vmul.f32 %v3001, %v1723
    %v3010 = vrot.slane %v3002, 4
    %v3011 = vadd.f32 %v3002, %v3010
    %v3012 = vrot.slane %v3011, 2
    %v3013 = vadd.f32 %v3011, %v3012
    %v3014 = vrot.slane %v3013, 1
    %v3015 = vadd.f32 %v3013, %v3014
    %v3016 = vrot.slane %v3003, 4
    %v3017 = vadd.f32 %v3003, %v3016
    %v3018 = vrot.slane %v3017, 2
    %v3019 = vadd.f32 %v3017, %v3018
    %v3020 = vrot.slane %v3019, 1
    %v3021 = vadd.f32 %v3019, %v3020
    %v3022 = vrot.slane %v3004, 4
    %v3023 = vadd.f32 %v3004, %v3022
    %v3024 = vrot.slane %v3023, 2
    %v3025 = vadd.f32 %v3023, %v3024
    %v3026 = vrot.slane %v3025, 1
    %v3027 = vadd.f32 %v3025, %v3026
    %v3028 = vrot.slane %v3005, 4
    %v3029 = vadd.f32 %v3005, %v3028
    %v3030 = vrot.slane %v3029, 2
    %v3031 = vadd.f32 %v3029, %v3030
    %v3032 = vrot.slane %v3031, 1
    %v3033 = vadd.f32 %v3031, %v3032
    %v3034 = vrot.slane %v3006, 4
    %v3035 = vadd.f32 %v3006, %v3034
    %v3036 = vrot.slane %v3035, 2
    %v3037 = vadd.f32 %v3035, %v3036
    %v3038 = vrot.slane %v3037, 1
    %v3039 = vadd.f32 %v3037, %v3038
    %v3040 = vrot.slane %v3007, 4
    %v3041 = vadd.f32 %v3007, %v3040
    %v3042 = vrot.slane %v3041, 2
    %v3043 = vadd.f32 %v3041, %v3042
    %v3044 = vrot.slane %v3043, 1
    %v3045 = vadd.f32 %v3043, %v3044
    %v3046 = vrot.slane %v3008, 4
    %v3047 = vadd.f32 %v3008, %v3046
    %v3048 = vrot.slane %v3047, 2
    %v3049 = vadd.f32 %v3047, %v3048
    %v3050 = vrot.slane %v3049, 1
    %v3051 = vadd.f32 %v3049, %v3050
    %v3052 = vrot.slane %v3009, 4
    %v3053 = vadd.f32 %v3009, %v3052
    %v3054 = vrot.slane %v3053, 2
    %v3055 = vadd.f32 %v3053, %v3054
    %v3056 = vrot.slane %v3055, 1
    %v3057 = vadd.f32 %v3055, %v3056
    %v3058 = vadd.f32 %v2922, %v3015
    %v3059 = vadd.f32 %v2923, %v3021
    %v3060 = vadd.f32 %v2924, %v3027
    %v3061 = vadd.f32 %v2925, %v3033
    %v3062 = vadd.f32 %v2926, %v3039
    %v3063 = vadd.f32 %v2927, %v3045
    %v3064 = vadd.f32 %v2928, %v3051
    %v3065 = vadd.f32 %v2929, %v3057
    %v3066 = vmul.f32 %v2994, %v1724
    %v3067 = vmul.f32 %v2995, %v1725
    %v3068 = vmul.f32 %v2996, %v1724
    %v3069 = vmul.f32 %v2997, %v1725
    %v3070 = vmul.f32 %v2998, %v1724
    %v3071 = vmul.f32 %v2999, %v1725
    %v3072 = vmul.f32 %v3000, %v1724
    %v3073 = vmul.f32 %v3001, %v1725
    %v3074 = vrot.slane %v3066, 4
    %v3075 = vadd.f32 %v3066, %v3074
    %v3076 = vrot.slane %v3075, 2
    %v3077 = vadd.f32 %v3075, %v3076
    %v3078 = vrot.slane %v3077, 1
    %v3079 = vadd.f32 %v3077, %v3078
    %v3080 = vrot.slane %v3067, 4
    %v3081 = vadd.f32 %v3067, %v3080
    %v3082 = vrot.slane %v3081, 2
    %v3083 = vadd.f32 %v3081, %v3082
    %v3084 = vrot.slane %v3083, 1
    %v3085 = vadd.f32 %v3083, %v3084
    %v3086 = vrot.slane %v3068, 4
    %v3087 = vadd.f32 %v3068, %v3086
    %v3088 = vrot.slane %v3087, 2
    %v3089 = vadd.f32 %v3087, %v3088
    %v3090 = vrot.slane %v3089, 1
    %v3091 = vadd.f32 %v3089, %v3090
    %v3092 = vrot.slane %v3069, 4
    %v3093 = vadd.f32 %v3069, %v3092
    %v3094 = vrot.slane %v3093, 2
    %v3095 = vadd.f32 %v3093, %v3094
    %v3096 = vrot.slane %v3095, 1
    %v3097 = vadd.f32 %v3095, %v3096
    %v3098 = vrot.slane %v3070, 4
    %v3099 = vadd.f32 %v3070, %v3098
    %v3100 = vrot.slane %v3099, 2
    %v3101 = vadd.f32 %v3099, %v3100
    %v3102 = vrot.slane %v3101, 1
    %v3103 = vadd.f32 %v3101, %v3102
    %v3104 = vrot.slane %v3071, 4
    %v3105 = vadd.f32 %v3071, %v3104
    %v3106 = vrot.slane %v3105, 2
    %v3107 = vadd.f32 %v3105, %v3106
    %v3108 = vrot.slane %v3107, 1
    %v3109 = vadd.f32 %v3107, %v3108
    %v3110 = vrot.slane %v3072, 4
    %v3111 = vadd.f32 %v3072, %v3110
    %v3112 = vrot.slane %v3111, 2
    %v3113 = vadd.f32 %v3111, %v3112
    %v3114 = vrot.slane %v3113, 1
    %v3115 = vadd.f32 %v3113, %v3114
    %v3116 = vrot.slane %v3073, 4
    %v3117 = vadd.f32 %v3073, %v3116
    %v3118 = vrot.slane %v3117, 2
    %v3119 = vadd.f32 %v3117, %v3118
    %v3120 = vrot.slane %v3119, 1
    %v3121 = vadd.f32 %v3119, %v3120
    %v3122 = vadd.f32 %v2986, %v3079
    %v3123 = vadd.f32 %v2987, %v3085
    %v3124 = vadd.f32 %v2988, %v3091
    %v3125 = vadd.f32 %v2989, %v3097
    %v3126 = vadd.f32 %v2990, %v3103
    %v3127 = vadd.f32 %v2991, %v3109
    %v3128 = vadd.f32 %v2992, %v3115
    %v3129 = vadd.f32 %v2993, %v3121
    %v3130 = vld [vmem:[#allocation7 + $0x40] sm:$0xff]
    %v3131 = vld [vmem:[#allocation7 + $0x48] sm:$0xff]
    %v3132 = vld [vmem:[#allocation7 + $0xe0] sm:$0xff]
    %v3133 = vld [vmem:[#allocation7 + $0xe8] sm:$0xff]
    %v3134 = vld [vmem:[#allocation7 + $0x180] sm:$0xff]
    %v3135 = vld [vmem:[#allocation7 + $0x188] sm:$0xff]
    %v3136 = vld [vmem:[#allocation7 + $0x220] sm:$0xff]
    %v3137 = vld [vmem:[#allocation7 + $0x228] sm:$0xff]
    %v3138 = vmul.f32 %v3130, %v1726
    %v3139 = vmul.f32 %v3131, %v1727
    %v3140 = vmul.f32 %v3132, %v1726
    %v3141 = vmul.f32 %v3133, %v1727
    %v3142 = vmul.f32 %v3134, %v1726
    %v3143 = vmul.f32 %v3135, %v1727
    %v3144 = vmul.f32 %v3136, %v1726
    %v3145 = vmul.f32 %v3137, %v1727
    %v3146 = vrot.slane %v3138, 4
    %v3147 = vadd.f32 %v3138, %v3146
    %v3148 = vrot.slane %v3147, 2
    %v3149 = vadd.f32 %v3147, %v3148
    %v3150 = vrot.slane %v3149, 1
    %v3151 = vadd.f32 %v3149, %v3150
    %v3152 = vrot.slane %v3139, 4
    %v3153 = vadd.f32 %v3139, %v3152
    %v3154 = vrot.slane %v3153, 2
    %v3155 = vadd.f32 %v3153, %v3154
    %v3156 = vrot.slane %v3155, 1
    %v3157 = vadd.f32 %v3155, %v3156
    %v3158 = vrot.slane %v3140, 4
    %v3159 = vadd.f32 %v3140, %v3158
    %v3160 = vrot.slane %v3159, 2
    %v3161 = vadd.f32 %v3159, %v3160
    %v3162 = vrot.slane %v3161, 1
    %v3163 = vadd.f32 %v3161, %v3162
    %v3164 = vrot.slane %v3141, 4
    %v3165 = vadd.f32 %v3141, %v3164
    %v3166 = vrot.slane %v3165, 2
    %v3167 = vadd.f32 %v3165, %v3166
    %v3168 = vrot.slane %v3167, 1
    %v3169 = vadd.f32 %v3167, %v3168
    %v3170 = vrot.slane %v3142, 4
    %v3171 = vadd.f32 %v3142, %v3170
    %v3172 = vrot.slane %v3171, 2
    %v3173 = vadd.f32 %v3171, %v3172
    %v3174 = vrot.slane %v3173, 1
    %v3175 = vadd.f32 %v3173, %v3174
    %v3176 = vrot.slane %v3143, 4
    %v3177 = vadd.f32 %v3143, %v3176
    %v3178 = vrot.slane %v3177, 2
    %v3179 = vadd.f32 %v3177, %v3178
    %v3180 = vrot.slane %v3179, 1
    %v3181 = vadd.f32 %v3179, %v3180
    %v3182 = vrot.slane %v3144, 4
    %v3183 = vadd.f32 %v3144, %v3182
    %v3184 = vrot.slane %v3183, 2
    %v3185 = vadd.f32 %v3183, %v3184
    %v3186 = vrot.slane %v3185, 1
    %v3187 = vadd.f32 %v3185, %v3186
    %v3188 = vrot.slane %v3145, 4
    %v3189 = vadd.f32 %v3145, %v3188
    %v3190 = vrot.slane %v3189, 2
    %v3191 = vadd.f32 %v3189, %v3190
    %v3192 = vrot.slane %v3191, 1
    %v3193 = vadd.f32 %v3191, %v3192
    %v3194 = vadd.f32 %v3058, %v3151
    %v3195 = vadd.f32 %v3059, %v3157
    %v3196 = vadd.f32 %v3060, %v3163
    %v3197 = vadd.f32 %v3061, %v3169
    %v3198 = vadd.f32 %v3062, %v3175
    %v3199 = vadd.f32 %v3063, %v3181
    %v3200 = vadd.f32 %v3064, %v3187
    %v3201 = vadd.f32 %v3065, %v3193
    %v3202 = vmul.f32 %v3130, %v1728
    %v3203 = vmul.f32 %v3131, %v1729
    %v3204 = vmul.f32 %v3132, %v1728
    %v3205 = vmul.f32 %v3133, %v1729
    %v3206 = vmul.f32 %v3134, %v1728
    %v3207 = vmul.f32 %v3135, %v1729
    %v3208 = vmul.f32 %v3136, %v1728
    %v3209 = vmul.f32 %v3137, %v1729
    %v3210 = vrot.slane %v3202, 4
    %v3211 = vadd.f32 %v3202, %v3210
    %v3212 = vrot.slane %v3211, 2
    %v3213 = vadd.f32 %v3211, %v3212
    %v3214 = vrot.slane %v3213, 1
    %v3215 = vadd.f32 %v3213, %v3214
    %v3216 = vrot.slane %v3203, 4
    %v3217 = vadd.f32 %v3203, %v3216
    %v3218 = vrot.slane %v3217, 2
    %v3219 = vadd.f32 %v3217, %v3218
    %v3220 = vrot.slane %v3219, 1
    %v3221 = vadd.f32 %v3219, %v3220
    %v3222 = vrot.slane %v3204, 4
    %v3223 = vadd.f32 %v3204, %v3222
    %v3224 = vrot.slane %v3223, 2
    %v3225 = vadd.f32 %v3223, %v3224
    %v3226 = vrot.slane %v3225, 1
    %v3227 = vadd.f32 %v3225, %v3226
    %v3228 = vrot.slane %v3205, 4
    %v3229 = vadd.f32 %v3205, %v3228
    %v3230 = vrot.slane %v3229, 2
    %v3231 = vadd.f32 %v3229, %v3230
    %v3232 = vrot.slane %v3231, 1
    %v3233 = vadd.f32 %v3231, %v3232
    %v3234 = vrot.slane %v3206, 4
    %v3235 = vadd.f32 %v3206, %v3234
    %v3236 = vrot.slane %v3235, 2
    %v3237 = vadd.f32 %v3235, %v3236
    %v3238 = vrot.slane %v3237, 1
    %v3239 = vadd.f32 %v3237, %v3238
    %v3240 = vrot.slane %v3207, 4
    %v3241 = vadd.f32 %v3207, %v3240
    %v3242 = vrot.slane %v3241, 2
    %v3243 = vadd.f32 %v3241, %v3242
    %v3244 = vrot.slane %v3243, 1
    %v3245 = vadd.f32 %v3243, %v3244
    %v3246 = vrot.slane %v3208, 4
    %v3247 = vadd.f32 %v3208, %v3246
    %v3248 = vrot.slane %v3247, 2
    %v3249 = vadd.f32 %v3247, %v3248
    %v3250 = vrot.slane %v3249, 1
    %v3251 = vadd.f32 %v3249, %v3250
    %v3252 = vrot.slane %v3209, 4
    %v3253 = vadd.f32 %v3209, %v3252
    %v3254 = vrot.slane %v3253, 2
    %v3255 = vadd.f32 %v3253, %v3254
    %v3256 = vrot.slane %v3255, 1
    %v3257 = vadd.f32 %v3255, %v3256
    %v3258 = vadd.f32 %v3122, %v3215
    %v3259 = vadd.f32 %v3123, %v3221
    %v3260 = vadd.f32 %v3124, %v3227
    %v3261 = vadd.f32 %v3125, %v3233
    %v3262 = vadd.f32 %v3126, %v3239
    %v3263 = vadd.f32 %v3127, %v3245
    %v3264 = vadd.f32 %v3128, %v3251
    %v3265 = vadd.f32 %v3129, %v3257
    %v3266 = vld [vmem:[#allocation7 + $0x50] sm:$0xff]
    %v3267 = vld [vmem:[#allocation7 + $0x58] sm:$0xff]
    %v3268 = vld [vmem:[#allocation7 + $0xf0] sm:$0xff]
    %v3269 = vld [vmem:[#allocation7 + $0xf8] sm:$0xff]
    %v3270 = vld [vmem:[#allocation7 + $0x190] sm:$0xff]
    %v3271 = vld [vmem:[#allocation7 + $0x198] sm:$0xff]
    %v3272 = vld [vmem:[#allocation7 + $0x230] sm:$0xff]
    %v3273 = vld [vmem:[#allocation7 + $0x238] sm:$0xff]
    %v3274 = vmul.f32 %v3266, %v2566
    %v3275 = vmul.f32 %v3267, %v2567
    %v3276 = vmul.f32 %v3268, %v2566
    %v3277 = vmul.f32 %v3269, %v2567
    %v3278 = vmul.f32 %v3270, %v2566
    %v3279 = vmul.f32 %v3271, %v2567
    %v3280 = vmul.f32 %v3272, %v2566
    %v3281 = vmul.f32 %v3273, %v2567
    %v3282 = vrot.slane %v3274, 4
    %v3283 = vadd.f32 %v3274, %v3282
    %v3284 = vrot.slane %v3283, 2
    %v3285 = vadd.f32 %v3283, %v3284
    %v3286 = vrot.slane %v3285, 1
    %v3287 = vadd.f32 %v3285, %v3286
    %v3288 = vrot.slane %v3275, 4
    %v3289 = vadd.f32 %v3275, %v3288
    %v3290 = vrot.slane %v3289, 2
    %v3291 = vadd.f32 %v3289, %v3290
    %v3292 = vrot.slane %v3291, 1
    %v3293 = vadd.f32 %v3291, %v3292
    %v3294 = vrot.slane %v3276, 4
    %v3295 = vadd.f32 %v3276, %v3294
    %v3296 = vrot.slane %v3295, 2
    %v3297 = vadd.f32 %v3295, %v3296
    %v3298 = vrot.slane %v3297, 1
    %v3299 = vadd.f32 %v3297, %v3298
    %v3300 = vrot.slane %v3277, 4
    %v3301 = vadd.f32 %v3277, %v3300
    %v3302 = vrot.slane %v3301, 2
    %v3303 = vadd.f32 %v3301, %v3302
    %v3304 = vrot.slane %v3303, 1
    %v3305 = vadd.f32 %v3303, %v3304
    %v3306 = vrot.slane %v3278, 4
    %v3307 = vadd.f32 %v3278, %v3306
    %v3308 = vrot.slane %v3307, 2
    %v3309 = vadd.f32 %v3307, %v3308
    %v3310 = vrot.slane %v3309, 1
    %v3311 = vadd.f32 %v3309, %v3310
    %v3312 = vrot.slane %v3279, 4
    %v3313 = vadd.f32 %v3279, %v3312
    %v3314 = vrot.slane %v3313, 2
    %v3315 = vadd.f32 %v3313, %v3314
    %v3316 = vrot.slane %v3315, 1
    %v3317 = vadd.f32 %v3315, %v3316
    %v3318 = vrot.slane %v3280, 4
    %v3319 = vadd.f32 %v3280, %v3318
    %v3320 = vrot.slane %v3319, 2
    %v3321 = vadd.f32 %v3319, %v3320
    %v3322 = vrot.slane %v3321, 1
    %v3323 = vadd.f32 %v3321, %v3322
    %v3324 = vrot.slane %v3281, 4
    %v3325 = vadd.f32 %v3281, %v3324
    %v3326 = vrot.slane %v3325, 2
    %v3327 = vadd.f32 %v3325, %v3326
    %v3328 = vrot.slane %v3327, 1
    %v3329 = vadd.f32 %v3327, %v3328
    %v3330 = vadd.f32 %v3194, %v3287
    %v3331 = vadd.f32 %v3195, %v3293
    %v3332 = vadd.f32 %v3196, %v3299
    %v3333 = vadd.f32 %v3197, %v3305
    %v3334 = vadd.f32 %v3198, %v3311
    %v3335 = vadd.f32 %v3199, %v3317
    %v3336 = vadd.f32 %v3200, %v3323
    %v3337 = vadd.f32 %v3201, %v3329
    %v3338 = vmul.f32 %v3266, %v2568
    %v3339 = vmul.f32 %v3267, %v2569
    %v3340 = vmul.f32 %v3268, %v2568
    %v3341 = vmul.f32 %v3269, %v2569
    %v3342 = vmul.f32 %v3270, %v2568
    %v3343 = vmul.f32 %v3271, %v2569
    %v3344 = vmul.f32 %v3272, %v2568
    %v3345 = vmul.f32 %v3273, %v2569
    %v3346 = vrot.slane %v3338, 4
    %v3347 = vadd.f32 %v3338, %v3346
    %v3348 = vrot.slane %v3347, 2
    %v3349 = vadd.f32 %v3347, %v3348
    %v3350 = vrot.slane %v3349, 1
    %v3351 = vadd.f32 %v3349, %v3350
    %v3352 = vrot.slane %v3339, 4
    %v3353 = vadd.f32 %v3339, %v3352
    %v3354 = vrot.slane %v3353, 2
    %v3355 = vadd.f32 %v3353, %v3354
    %v3356 = vrot.slane %v3355, 1
    %v3357 = vadd.f32 %v3355, %v3356
    %v3358 = vrot.slane %v3340, 4
    %v3359 = vadd.f32 %v3340, %v3358
    %v3360 = vrot.slane %v3359, 2
    %v3361 = vadd.f32 %v3359, %v3360
    %v3362 = vrot.slane %v3361, 1
    %v3363 = vadd.f32 %v3361, %v3362
    %v3364 = vrot.slane %v3341, 4
    %v3365 = vadd.f32 %v3341, %v3364
    %v3366 = vrot.slane %v3365, 2
    %v3367 = vadd.f32 %v3365, %v3366
    %v3368 = vrot.slane %v3367, 1
    %v3369 = vadd.f32 %v3367, %v3368
    %v3370 = vrot.slane %v3342, 4
    %v3371 = vadd.f32 %v3342, %v3370
    %v3372 = vrot.slane %v3371, 2
    %v3373 = vadd.f32 %v3371, %v3372
    %v3374 = vrot.slane %v3373, 1
    %v3375 = vadd.f32 %v3373, %v3374
    %v3376 = vrot.slane %v3343, 4
    %v3377 = vadd.f32 %v3343, %v3376
    %v3378 = vrot.slane %v3377, 2
    %v3379 = vadd.f32 %v3377, %v3378
    %v3380 = vrot.slane %v3379, 1
    %v3381 = vadd.f32 %v3379, %v3380
    %v3382 = vrot.slane %v3344, 4
    %v3383 = vadd.f32 %v3344, %v3382
    %v3384 = vrot.slane %v3383, 2
    %v3385 = vadd.f32 %v3383, %v3384
    %v3386 = vrot.slane %v3385, 1
    %v3387 = vadd.f32 %v3385, %v3386
    %v3388 = vrot.slane %v3345, 4
    %v3389 = vadd.f32 %v3345, %v3388
    %v3390 = vrot.slane %v3389, 2
    %v3391 = vadd.f32 %v3389, %v3390
    %v3392 = vrot.slane %v3391, 1
    %v3393 = vadd.f32 %v3391, %v3392
    %v3394 = vadd.f32 %v3258, %v3351
    %v3395 = vadd.f32 %v3259, %v3357
    %v3396 = vadd.f32 %v3260, %v3363
    %v3397 = vadd.f32 %v3261, %v3369
    %v3398 = vadd.f32 %v3262, %v3375
    %v3399 = vadd.f32 %v3263, %v3381
    %v3400 = vadd.f32 %v3264, %v3387
    %v3401 = vadd.f32 %v3265, %v3393
    %v3402 = vld [vmem:[#allocation7 + $0x60] sm:$0xff]
    %v3403 = vld [vmem:[#allocation7 + $0x68] sm:$0xff]
    %v3404 = vld [vmem:[#allocation7 + $0x100] sm:$0xff]
    %v3405 = vld [vmem:[#allocation7 + $0x108] sm:$0xff]
    %v3406 = vld [vmem:[#allocation7 + $0x1a0] sm:$0xff]
    %v3407 = vld [vmem:[#allocation7 + $0x1a8] sm:$0xff]
    %v3408 = vld [vmem:[#allocation7 + $0x240] sm:$0xff]
    %v3409 = vld [vmem:[#allocation7 + $0x248] sm:$0xff]
    %v3410 = vmul.f32 %v3402, %v2570
    %v3411 = vmul.f32 %v3403, %v2571
    %v3412 = vmul.f32 %v3404, %v2570
    %v3413 = vmul.f32 %v3405, %v2571
    %v3414 = vmul.f32 %v3406, %v2570
    %v3415 = vmul.f32 %v3407, %v2571
    %v3416 = vmul.f32 %v3408, %v2570
    %v3417 = vmul.f32 %v3409, %v2571
    %v3418 = vrot.slane %v3410, 4
    %v3419 = vadd.f32 %v3410, %v3418
    %v3420 = vrot.slane %v3419, 2
    %v3421 = vadd.f32 %v3419, %v3420
    %v3422 = vrot.slane %v3421, 1
    %v3423 = vadd.f32 %v3421, %v3422
    %v3424 = vrot.slane %v3411, 4
    %v3425 = vadd.f32 %v3411, %v3424
    %v3426 = vrot.slane %v3425, 2
    %v3427 = vadd.f32 %v3425, %v3426
    %v3428 = vrot.slane %v3427, 1
    %v3429 = vadd.f32 %v3427, %v3428
    %v3430 = vrot.slane %v3412, 4
    %v3431 = vadd.f32 %v3412, %v3430
    %v3432 = vrot.slane %v3431, 2
    %v3433 = vadd.f32 %v3431, %v3432
    %v3434 = vrot.slane %v3433, 1
    %v3435 = vadd.f32 %v3433, %v3434
    %v3436 = vrot.slane %v3413, 4
    %v3437 = vadd.f32 %v3413, %v3436
    %v3438 = vrot.slane %v3437, 2
    %v3439 = vadd.f32 %v3437, %v3438
    %v3440 = vrot.slane %v3439, 1
    %v3441 = vadd.f32 %v3439, %v3440
    %v3442 = vrot.slane %v3414, 4
    %v3443 = vadd.f32 %v3414, %v3442
    %v3444 = vrot.slane %v3443, 2
    %v3445 = vadd.f32 %v3443, %v3444
    %v3446 = vrot.slane %v3445, 1
    %v3447 = vadd.f32 %v3445, %v3446
    %v3448 = vrot.slane %v3415, 4
    %v3449 = vadd.f32 %v3415, %v3448
    %v3450 = vrot.slane %v3449, 2
    %v3451 = vadd.f32 %v3449, %v3450
    %v3452 = vrot.slane %v3451, 1
    %v3453 = vadd.f32 %v3451, %v3452
    %v3454 = vrot.slane %v3416, 4
    %v3455 = vadd.f32 %v3416, %v3454
    %v3456 = vrot.slane %v3455, 2
    %v3457 = vadd.f32 %v3455, %v3456
    %v3458 = vrot.slane %v3457, 1
    %v3459 = vadd.f32 %v3457, %v3458
    %v3460 = vrot.slane %v3417, 4
    %v3461 = vadd.f32 %v3417, %v3460
    %v3462 = vrot.slane %v3461, 2
    %v3463 = vadd.f32 %v3461, %v3462
    %v3464 = vrot.slane %v3463, 1
    %v3465 = vadd.f32 %v3463, %v3464
    %v3466 = vadd.f32 %v3330, %v3423
    %v3467 = vadd.f32 %v3331, %v3429
    %v3468 = vadd.f32 %v3332, %v3435
    %v3469 = vadd.f32 %v3333, %v3441
    %v3470 = vadd.f32 %v3334, %v3447
    %v3471 = vadd.f32 %v3335, %v3453
    %v3472 = vadd.f32 %v3336, %v3459
    %v3473 = vadd.f32 %v3337, %v3465
    %v3474 = vmul.f32 %v3402, %v2572
    %v3475 = vmul.f32 %v3403, %v2573
    %v3476 = vmul.f32 %v3404, %v2572
    %v3477 = vmul.f32 %v3405, %v2573
    %v3478 = vmul.f32 %v3406, %v2572
    %v3479 = vmul.f32 %v3407, %v2573
    %v3480 = vmul.f32 %v3408, %v2572
    %v3481 = vmul.f32 %v3409, %v2573
    %v3482 = vrot.slane %v3474, 4
    %v3483 = vadd.f32 %v3474, %v3482
    %v3484 = vrot.slane %v3483, 2
    %v3485 = vadd.f32 %v3483, %v3484
    %v3486 = vrot.slane %v3485, 1
    %v3487 = vadd.f32 %v3485, %v3486
    %v3488 = vrot.slane %v3475, 4
    %v3489 = vadd.f32 %v3475, %v3488
    %v3490 = vrot.slane %v3489, 2
    %v3491 = vadd.f32 %v3489, %v3490
    %v3492 = vrot.slane %v3491, 1
    %v3493 = vadd.f32 %v3491, %v3492
    %v3494 = vrot.slane %v3476, 4
    %v3495 = vadd.f32 %v3476, %v3494
    %v3496 = vrot.slane %v3495, 2
    %v3497 = vadd.f32 %v3495, %v3496
    %v3498 = vrot.slane %v3497, 1
    %v3499 = vadd.f32 %v3497, %v3498
    %v3500 = vrot.slane %v3477, 4
    %v3501 = vadd.f32 %v3477, %v3500
    %v3502 = vrot.slane %v3501, 2
    %v3503 = vadd.f32 %v3501, %v3502
    %v3504 = vrot.slane %v3503, 1
    %v3505 = vadd.f32 %v3503, %v3504
    %v3506 = vrot.slane %v3478, 4
    %v3507 = vadd.f32 %v3478, %v3506
    %v3508 = vrot.slane %v3507, 2
    %v3509 = vadd.f32 %v3507, %v3508
    %v3510 = vrot.slane %v3509, 1
    %v3511 = vadd.f32 %v3509, %v3510
    %v3512 = vrot.slane %v3479, 4
    %v3513 = vadd.f32 %v3479, %v3512
    %v3514 = vrot.slane %v3513, 2
    %v3515 = vadd.f32 %v3513, %v3514
    %v3516 = vrot.slane %v3515, 1
    %v3517 = vadd.f32 %v3515, %v3516
    %v3518 = vrot.slane %v3480, 4
    %v3519 = vadd.f32 %v3480, %v3518
    %v3520 = vrot.slane %v3519, 2
    %v3521 = vadd.f32 %v3519, %v3520
    %v3522 = vrot.slane %v3521, 1
    %v3523 = vadd.f32 %v3521, %v3522
    %v3524 = vrot.slane %v3481, 4
    %v3525 = vadd.f32 %v3481, %v3524
    %v3526 = vrot.slane %v3525, 2
    %v3527 = vadd.f32 %v3525, %v3526
    %v3528 = vrot.slane %v3527, 1
    %v3529 = vadd.f32 %v3527, %v3528
    %v3530 = vadd.f32 %v3394, %v3487
    %v3531 = vadd.f32 %v3395, %v3493
    %v3532 = vadd.f32 %v3396, %v3499
    %v3533 = vadd.f32 %v3397, %v3505
    %v3534 = vadd.f32 %v3398, %v3511
    %v3535 = vadd.f32 %v3399, %v3517
    %v3536 = vadd.f32 %v3400, %v3523
    %v3537 = vadd.f32 %v3401, %v3529
    %v3538 = vld [vmem:[#allocation7 + $0x70] sm:$0xff]
    %v3539 = vld [vmem:[#allocation7 + $0x78] sm:$0xff]
    %v3540 = vld [vmem:[#allocation7 + $0x110] sm:$0xff]
    %v3541 = vld [vmem:[#allocation7 + $0x118] sm:$0xff]
    %v3542 = vld [vmem:[#allocation7 + $0x1b0] sm:$0xff]
    %v3543 = vld [vmem:[#allocation7 + $0x1b8] sm:$0xff]
    %v3544 = vld [vmem:[#allocation7 + $0x250] sm:$0xff]
    %v3545 = vld [vmem:[#allocation7 + $0x258] sm:$0xff]
    %v3546 = vmul.f32 %v3538, %v2574
    %v3547 = vmul.f32 %v3539, %v2575
    %v3548 = vmul.f32 %v3540, %v2574
    %v3549 = vmul.f32 %v3541, %v2575
    %v3550 = vmul.f32 %v3542, %v2574
    %v3551 = vmul.f32 %v3543, %v2575
    %v3552 = vmul.f32 %v3544, %v2574
    %v3553 = vmul.f32 %v3545, %v2575
    %v3554 = vrot.slane %v3546, 4
    %v3555 = vadd.f32 %v3546, %v3554
    %v3556 = vrot.slane %v3555, 2
    %v3557 = vadd.f32 %v3555, %v3556
    %v3558 = vrot.slane %v3557, 1
    %v3559 = vadd.f32 %v3557, %v3558
    %v3560 = vrot.slane %v3547, 4
    %v3561 = vadd.f32 %v3547, %v3560
    %v3562 = vrot.slane %v3561, 2
    %v3563 = vadd.f32 %v3561, %v3562
    %v3564 = vrot.slane %v3563, 1
    %v3565 = vadd.f32 %v3563, %v3564
    %v3566 = vrot.slane %v3548, 4
    %v3567 = vadd.f32 %v3548, %v3566
    %v3568 = vrot.slane %v3567, 2
    %v3569 = vadd.f32 %v3567, %v3568
    %v3570 = vrot.slane %v3569, 1
    %v3571 = vadd.f32 %v3569, %v3570
    %v3572 = vrot.slane %v3549, 4
    %v3573 = vadd.f32 %v3549, %v3572
    %v3574 = vrot.slane %v3573, 2
    %v3575 = vadd.f32 %v3573, %v3574
    %v3576 = vrot.slane %v3575, 1
    %v3577 = vadd.f32 %v3575, %v3576
    %v3578 = vrot.slane %v3550, 4
    %v3579 = vadd.f32 %v3550, %v3578
    %v3580 = vrot.slane %v3579, 2
    %v3581 = vadd.f32 %v3579, %v3580
    %v3582 = vrot.slane %v3581, 1
    %v3583 = vadd.f32 %v3581, %v3582
    %v3584 = vrot.slane %v3551, 4
    %v3585 = vadd.f32 %v3551, %v3584
    %v3586 = vrot.slane %v3585, 2
    %v3587 = vadd.f32 %v3585, %v3586
    %v3588 = vrot.slane %v3587, 1
    %v3589 = vadd.f32 %v3587, %v3588
    %v3590 = vrot.slane %v3552, 4
    %v3591 = vadd.f32 %v3552, %v3590
    %v3592 = vrot.slane %v3591, 2
    %v3593 = vadd.f32 %v3591, %v3592
    %v3594 = vrot.slane %v3593, 1
    %v3595 = vadd.f32 %v3593, %v3594
    %v3596 = vrot.slane %v3553, 4
    %v3597 = vadd.f32 %v3553, %v3596
    %v3598 = vrot.slane %v3597, 2
    %v3599 = vadd.f32 %v3597, %v3598
    %v3600 = vrot.slane %v3599, 1
    %v3601 = vadd.f32 %v3599, %v3600
    %v3602 = vadd.f32 %v3466, %v3559
    %v3603 = vadd.f32 %v3467, %v3565
    %v3604 = vadd.f32 %v3468, %v3571
    %v3605 = vadd.f32 %v3469, %v3577
    %v3606 = vadd.f32 %v3470, %v3583
    %v3607 = vadd.f32 %v3471, %v3589
    %v3608 = vadd.f32 %v3472, %v3595
    %v3609 = vadd.f32 %v3473, %v3601
    %v3610 = vmul.f32 %v3538, %v2576
    %v3611 = vmul.f32 %v3539, %v2577
    %v3612 = vmul.f32 %v3540, %v2576
    %v3613 = vmul.f32 %v3541, %v2577
    %v3614 = vmul.f32 %v3542, %v2576
    %v3615 = vmul.f32 %v3543, %v2577
    %v3616 = vmul.f32 %v3544, %v2576
    %v3617 = vmul.f32 %v3545, %v2577
    %v3618 = vrot.slane %v3610, 4
    %v3619 = vadd.f32 %v3610, %v3618
    %v3620 = vrot.slane %v3619, 2
    %v3621 = vadd.f32 %v3619, %v3620
    %v3622 = vrot.slane %v3621, 1
    %v3623 = vadd.f32 %v3621, %v3622
    %v3624 = vrot.slane %v3611, 4
    %v3625 = vadd.f32 %v3611, %v3624
    %v3626 = vrot.slane %v3625, 2
    %v3627 = vadd.f32 %v3625, %v3626
    %v3628 = vrot.slane %v3627, 1
    %v3629 = vadd.f32 %v3627, %v3628
    %v3630 = vrot.slane %v3612, 4
    %v3631 = vadd.f32 %v3612, %v3630
    %v3632 = vrot.slane %v3631, 2
    %v3633 = vadd.f32 %v3631, %v3632
    %v3634 = vrot.slane %v3633, 1
    %v3635 = vadd.f32 %v3633, %v3634
    %v3636 = vrot.slane %v3613, 4
    %v3637 = vadd.f32 %v3613, %v3636
    %v3638 = vrot.slane %v3637, 2
    %v3639 = vadd.f32 %v3637, %v3638
    %v3640 = vrot.slane %v3639, 1
    %v3641 = vadd.f32 %v3639, %v3640
    %v3642 = vrot.slane %v3614, 4
    %v3643 = vadd.f32 %v3614, %v3642
    %v3644 = vrot.slane %v3643, 2
    %v3645 = vadd.f32 %v3643, %v3644
    %v3646 = vrot.slane %v3645, 1
    %v3647 = vadd.f32 %v3645, %v3646
    %v3648 = vrot.slane %v3615, 4
    %v3649 = vadd.f32 %v3615, %v3648
    %v3650 = vrot.slane %v3649, 2
    %v3651 = vadd.f32 %v3649, %v3650
    %v3652 = vrot.slane %v3651, 1
    %v3653 = vadd.f32 %v3651, %v3652
    %v3654 = vrot.slane %v3616, 4
    %v3655 = vadd.f32 %v3616, %v3654
    %v3656 = vrot.slane %v3655, 2
    %v3657 = vadd.f32 %v3655, %v3656
    %v3658 = vrot.slane %v3657, 1
    %v3659 = vadd.f32 %v3657, %v3658
    %v3660 = vrot.slane %v3617, 4
    %v3661 = vadd.f32 %v3617, %v3660
    %v3662 = vrot.slane %v3661, 2
    %v3663 = vadd.f32 %v3661, %v3662
    %v3664 = vrot.slane %v3663, 1
    %v3665 = vadd.f32 %v3663, %v3664
    %v3666 = vadd.f32 %v3530, %v3623
    %v3667 = vadd.f32 %v3531, %v3629
    %v3668 = vadd.f32 %v3532, %v3635
    %v3669 = vadd.f32 %v3533, %v3641
    %v3670 = vadd.f32 %v3534, %v3647
    %v3671 = vadd.f32 %v3535, %v3653
    %v3672 = vadd.f32 %v3536, %v3659
    %v3673 = vadd.f32 %v3537, %v3665
    %v3674 = vld [vmem:[#allocation7 + $0x80] sm:$0xff]
    %v3675 = vld [vmem:[#allocation7 + $0x88] sm:$0xff]
    %v3676 = vld [vmem:[#allocation7 + $0x120] sm:$0xff]
    %v3677 = vld [vmem:[#allocation7 + $0x128] sm:$0xff]
    %v3678 = vld [vmem:[#allocation7 + $0x1c0] sm:$0xff]
    %v3679 = vld [vmem:[#allocation7 + $0x1c8] sm:$0xff]
    %v3680 = vld [vmem:[#allocation7 + $0x260] sm:$0xff]
    %v3681 = vld [vmem:[#allocation7 + $0x268] sm:$0xff]
    %v3682 = vmul.f32 %v3674, %v2578
    %v3683 = vmul.f32 %v3675, %v2579
    %v3684 = vmul.f32 %v3676, %v2578
    %v3685 = vmul.f32 %v3677, %v2579
    %v3686 = vmul.f32 %v3678, %v2578
    %v3687 = vmul.f32 %v3679, %v2579
    %v3688 = vmul.f32 %v3680, %v2578
    %v3689 = vmul.f32 %v3681, %v2579
    %v3690 = vrot.slane %v3682, 4
    %v3691 = vadd.f32 %v3682, %v3690
    %v3692 = vrot.slane %v3691, 2
    %v3693 = vadd.f32 %v3691, %v3692
    %v3694 = vrot.slane %v3693, 1
    %v3695 = vadd.f32 %v3693, %v3694
    %v3696 = vrot.slane %v3683, 4
    %v3697 = vadd.f32 %v3683, %v3696
    %v3698 = vrot.slane %v3697, 2
    %v3699 = vadd.f32 %v3697, %v3698
    %v3700 = vrot.slane %v3699, 1
    %v3701 = vadd.f32 %v3699, %v3700
    %v3702 = vrot.slane %v3684, 4
    %v3703 = vadd.f32 %v3684, %v3702
    %v3704 = vrot.slane %v3703, 2
    %v3705 = vadd.f32 %v3703, %v3704
    %v3706 = vrot.slane %v3705, 1
    %v3707 = vadd.f32 %v3705, %v3706
    %v3708 = vrot.slane %v3685, 4
    %v3709 = vadd.f32 %v3685, %v3708
    %v3710 = vrot.slane %v3709, 2
    %v3711 = vadd.f32 %v3709, %v3710
    %v3712 = vrot.slane %v3711, 1
    %v3713 = vadd.f32 %v3711, %v3712
    %v3714 = vrot.slane %v3686, 4
    %v3715 = vadd.f32 %v3686, %v3714
    %v3716 = vrot.slane %v3715, 2
    %v3717 = vadd.f32 %v3715, %v3716
    %v3718 = vrot.slane %v3717, 1
    %v3719 = vadd.f32 %v3717, %v3718
    %v3720 = vrot.slane %v3687, 4
    %v3721 = vadd.f32 %v3687, %v3720
    %v3722 = vrot.slane %v3721, 2
    %v3723 = vadd.f32 %v3721, %v3722
    %v3724 = vrot.slane %v3723, 1
    %v3725 = vadd.f32 %v3723, %v3724
    %v3726 = vrot.slane %v3688, 4
    %v3727 = vadd.f32 %v3688, %v3726
    %v3728 = vrot.slane %v3727, 2
    %v3729 = vadd.f32 %v3727, %v3728
    %v3730 = vrot.slane %v3729, 1
    %v3731 = vadd.f32 %v3729, %v3730
    %v3732 = vrot.slane %v3689, 4
    %v3733 = vadd.f32 %v3689, %v3732
    %v3734 = vrot.slane %v3733, 2
    %v3735 = vadd.f32 %v3733, %v3734
    %v3736 = vrot.slane %v3735, 1
    %v3737 = vadd.f32 %v3735, %v3736
    %v3738 = vadd.f32 %v3602, %v3695
    %v3739 = vadd.f32 %v3603, %v3701
    %v3740 = vadd.f32 %v3604, %v3707
    %v3741 = vadd.f32 %v3605, %v3713
    %v3742 = vadd.f32 %v3606, %v3719
    %v3743 = vadd.f32 %v3607, %v3725
    %v3744 = vadd.f32 %v3608, %v3731
    %v3745 = vadd.f32 %v3609, %v3737
    %v3746 = vmul.f32 %v3674, %v2580
    %v3747 = vmul.f32 %v3675, %v2581
    %v3748 = vmul.f32 %v3676, %v2580
    %v3749 = vmul.f32 %v3677, %v2581
    %v3750 = vmul.f32 %v3678, %v2580
    %v3751 = vmul.f32 %v3679, %v2581
    %v3752 = vmul.f32 %v3680, %v2580
    %v3753 = vmul.f32 %v3681, %v2581
    %v3754 = vrot.slane %v3746, 4
    %v3755 = vadd.f32 %v3746, %v3754
    %v3756 = vrot.slane %v3755, 2
    %v3757 = vadd.f32 %v3755, %v3756
    %v3758 = vrot.slane %v3757, 1
    %v3759 = vadd.f32 %v3757, %v3758
    %v3760 = vrot.slane %v3747, 4
    %v3761 = vadd.f32 %v3747, %v3760
    %v3762 = vrot.slane %v3761, 2
    %v3763 = vadd.f32 %v3761, %v3762
    %v3764 = vrot.slane %v3763, 1
    %v3765 = vadd.f32 %v3763, %v3764
    %v3766 = vrot.slane %v3748, 4
    %v3767 = vadd.f32 %v3748, %v3766
    %v3768 = vrot.slane %v3767, 2
    %v3769 = vadd.f32 %v3767, %v3768
    %v3770 = vrot.slane %v3769, 1
    %v3771 = vadd.f32 %v3769, %v3770
    %v3772 = vrot.slane %v3749, 4
    %v3773 = vadd.f32 %v3749, %v3772
    %v3774 = vrot.slane %v3773, 2
    %v3775 = vadd.f32 %v3773, %v3774
    %v3776 = vrot.slane %v3775, 1
    %v3777 = vadd.f32 %v3775, %v3776
    %v3778 = vrot.slane %v3750, 4
    %v3779 = vadd.f32 %v3750, %v3778
    %v3780 = vrot.slane %v3779, 2
    %v3781 = vadd.f32 %v3779, %v3780
    %v3782 = vrot.slane %v3781, 1
    %v3783 = vadd.f32 %v3781, %v3782
    %v3784 = vrot.slane %v3751, 4
    %v3785 = vadd.f32 %v3751, %v3784
    %v3786 = vrot.slane %v3785, 2
    %v3787 = vadd.f32 %v3785, %v3786
    %v3788 = vrot.slane %v3787, 1
    %v3789 = vadd.f32 %v3787, %v3788
    %v3790 = vrot.slane %v3752, 4
    %v3791 = vadd.f32 %v3752, %v3790
    %v3792 = vrot.slane %v3791, 2
    %v3793 = vadd.f32 %v3791, %v3792
    %v3794 = vrot.slane %v3793, 1
    %v3795 = vadd.f32 %v3793, %v3794
    %v3796 = vrot.slane %v3753, 4
    %v3797 = vadd.f32 %v3753, %v3796
    %v3798 = vrot.slane %v3797, 2
    %v3799 = vadd.f32 %v3797, %v3798
    %v3800 = vrot.slane %v3799, 1
    %v3801 = vadd.f32 %v3799, %v3800
    %v3802 = vadd.f32 %v3666, %v3759
    %v3803 = vadd.f32 %v3667, %v3765
    %v3804 = vadd.f32 %v3668, %v3771
    %v3805 = vadd.f32 %v3669, %v3777
    %v3806 = vadd.f32 %v3670, %v3783
    %v3807 = vadd.f32 %v3671, %v3789
    %v3808 = vadd.f32 %v3672, %v3795
    %v3809 = vadd.f32 %v3673, %v3801
    %v3810 = vld [vmem:[#allocation7 + $0x90] sm:$0xff]
    %v3811 = vld [vmem:[#allocation7 + $0x98] sm:$0xff]
    %v3812 = vld [vmem:[#allocation7 + $0x130] sm:$0xff]
    %v3813 = vld [vmem:[#allocation7 + $0x138] sm:$0xff]
    %v3814 = vld [vmem:[#allocation7 + $0x1d0] sm:$0xff]
    %v3815 = vld [vmem:[#allocation7 + $0x1d8] sm:$0xff]
    %v3816 = vld [vmem:[#allocation7 + $0x270] sm:$0xff]
    %v3817 = vld [vmem:[#allocation7 + $0x278] sm:$0xff]
    %v3818 = vmul.f32 %v3810, %v2582
    %v3819 = vmul.f32 %v3811, %v2583
    %v3820 = vmul.f32 %v3812, %v2582
    %v3821 = vmul.f32 %v3813, %v2583
    %v3822 = vmul.f32 %v3814, %v2582
    %v3823 = vmul.f32 %v3815, %v2583
    %v3824 = vmul.f32 %v3816, %v2582
    %v3825 = vmul.f32 %v3817, %v2583
    %v3826 = vrot.slane %v3818, 4
    %v3827 = vadd.f32 %v3818, %v3826
    %v3828 = vrot.slane %v3827, 2
    %v3829 = vadd.f32 %v3827, %v3828
    %v3830 = vrot.slane %v3829, 1
    %v3831 = vadd.f32 %v3829, %v3830
    %v3832 = vrot.slane %v3819, 4
    %v3833 = vadd.f32 %v3819, %v3832
    %v3834 = vrot.slane %v3833, 2
    %v3835 = vadd.f32 %v3833, %v3834
    %v3836 = vrot.slane %v3835, 1
    %v3837 = vadd.f32 %v3835, %v3836
    %v3838 = vrot.slane %v3820, 4
    %v3839 = vadd.f32 %v3820, %v3838
    %v3840 = vrot.slane %v3839, 2
    %v3841 = vadd.f32 %v3839, %v3840
    %v3842 = vrot.slane %v3841, 1
    %v3843 = vadd.f32 %v3841, %v3842
    %v3844 = vrot.slane %v3821, 4
    %v3845 = vadd.f32 %v3821, %v3844
    %v3846 = vrot.slane %v3845, 2
    %v3847 = vadd.f32 %v3845, %v3846
    %v3848 = vrot.slane %v3847, 1
    %v3849 = vadd.f32 %v3847, %v3848
    %v3850 = vrot.slane %v3822, 4
    %v3851 = vadd.f32 %v3822, %v3850
    %v3852 = vrot.slane %v3851, 2
    %v3853 = vadd.f32 %v3851, %v3852
    %v3854 = vrot.slane %v3853, 1
    %v3855 = vadd.f32 %v3853, %v3854
    %v3856 = vrot.slane %v3823, 4
    %v3857 = vadd.f32 %v3823, %v3856
    %v3858 = vrot.slane %v3857, 2
    %v3859 = vadd.f32 %v3857, %v3858
    %v3860 = vrot.slane %v3859, 1
    %v3861 = vadd.f32 %v3859, %v3860
    %v3862 = vrot.slane %v3824, 4
    %v3863 = vadd.f32 %v3824, %v3862
    %v3864 = vrot.slane %v3863, 2
    %v3865 = vadd.f32 %v3863, %v3864
    %v3866 = vrot.slane %v3865, 1
    %v3867 = vadd.f32 %v3865, %v3866
    %v3868 = vrot.slane %v3825, 4
    %v3869 = vadd.f32 %v3825, %v3868
    %v3870 = vrot.slane %v3869, 2
    %v3871 = vadd.f32 %v3869, %v3870
    %v3872 = vrot.slane %v3871, 1
    %v3873 = vadd.f32 %v3871, %v3872
    %v3874 = vadd.f32 %v3738, %v3831
    %v3875 = vadd.f32 %v3739, %v3837
    %v3876 = vadd.f32 %v3740, %v3843
    %v3877 = vadd.f32 %v3741, %v3849
    %v3878 = vadd.f32 %v3742, %v3855
    %v3879 = vadd.f32 %v3743, %v3861
    %v3880 = vadd.f32 %v3744, %v3867
    %v3881 = vadd.f32 %v3745, %v3873
    %v3882 = vmul.f32 %v3810, %v2584
    %v3883 = vmul.f32 %v3811, %v2585
    %v3884 = vmul.f32 %v3812, %v2584
    %v3885 = vmul.f32 %v3813, %v2585
    %v3886 = vmul.f32 %v3814, %v2584
    %v3887 = vmul.f32 %v3815, %v2585
    %v3888 = vmul.f32 %v3816, %v2584
    %v3889 = vmul.f32 %v3817, %v2585
    %v3890 = vrot.slane %v3882, 4
    %v3891 = vadd.f32 %v3882, %v3890
    %v3892 = vrot.slane %v3891, 2
    %v3893 = vadd.f32 %v3891, %v3892
    %v3894 = vrot.slane %v3893, 1
    %v3895 = vadd.f32 %v3893, %v3894
    %v3896 = vrot.slane %v3883, 4
    %v3897 = vadd.f32 %v3883, %v3896
    %v3898 = vrot.slane %v3897, 2
    %v3899 = vadd.f32 %v3897, %v3898
    %v3900 = vrot.slane %v3899, 1
    %v3901 = vadd.f32 %v3899, %v3900
    %v3902 = vrot.slane %v3884, 4
    %v3903 = vadd.f32 %v3884, %v3902
    %v3904 = vrot.slane %v3903, 2
    %v3905 = vadd.f32 %v3903, %v3904
    %v3906 = vrot.slane %v3905, 1
    %v3907 = vadd.f32 %v3905, %v3906
    %v3908 = vrot.slane %v3885, 4
    %v3909 = vadd.f32 %v3885, %v3908
    %v3910 = vrot.slane %v3909, 2
    %v3911 = vadd.f32 %v3909, %v3910
    %v3912 = vrot.slane %v3911, 1
    %v3913 = vadd.f32 %v3911, %v3912
    %v3914 = vrot.slane %v3886, 4
    %v3915 = vadd.f32 %v3886, %v3914
    %v3916 = vrot.slane %v3915, 2
    %v3917 = vadd.f32 %v3915, %v3916
    %v3918 = vrot.slane %v3917, 1
    %v3919 = vadd.f32 %v3917, %v3918
    %v3920 = vrot.slane %v3887, 4
    %v3921 = vadd.f32 %v3887, %v3920
    %v3922 = vrot.slane %v3921, 2
    %v3923 = vadd.f32 %v3921, %v3922
    %v3924 = vrot.slane %v3923, 1
    %v3925 = vadd.f32 %v3923, %v3924
    %v3926 = vrot.slane %v3888, 4
    %v3927 = vadd.f32 %v3888, %v3926
    %v3928 = vrot.slane %v3927, 2
    %v3929 = vadd.f32 %v3927, %v3928
    %v3930 = vrot.slane %v3929, 1
    %v3931 = vadd.f32 %v3929, %v3930
    %v3932 = vrot.slane %v3889, 4
    %v3933 = vadd.f32 %v3889, %v3932
    %v3934 = vrot.slane %v3933, 2
    %v3935 = vadd.f32 %v3933, %v3934
    %v3936 = vrot.slane %v3935, 1
    %v3937 = vadd.f32 %v3935, %v3936
    %v3938 = vadd.f32 %v3802, %v3895
    %v3939 = vadd.f32 %v3803, %v3901
    %v3940 = vadd.f32 %v3804, %v3907
    %v3941 = vadd.f32 %v3805, %v3913
    %v3942 = vadd.f32 %v3806, %v3919
    %v3943 = vadd.f32 %v3807, %v3925
    %v3944 = vadd.f32 %v3808, %v3931
    %v3945 = vadd.f32 %v3809, %v3937
    %vm3954 = vcmask 1041409
    %v3955 = vsel %vm3954, %v3876, %v3874
    %vm3956 = vcmask 1042434
    %v3957 = vsel %vm3956, %v3878, %v3955
    %vm3958 = vcmask 1043459
    %v3959 = vsel %vm3958, %v3880, %v3957
    %v3960 = vsel %vm3954, %v3877, %v3875
    %v3961 = vsel %vm3956, %v3879, %v3960
    %v3962 = vsel %vm3958, %v3881, %v3961
    %vm3965 = vcmask 1043456
    %v3966 = vsel %vm3965, %v3959, 0.0
    %v3967 = vsel %vm3965, %v3962, 0.0
    %v3968 = vadd.f32 %v3966, %v3967
    %3969 = vadd.xlane.f32.xlu0 %v3968
    %v3970 = vpop.xlane.xlu0 %3969
    %v3979 = vsel %vm3954, %v3940, %v3938
    %v3980 = vsel %vm3956, %v3942, %v3979
    %v3981 = vsel %vm3958, %v3944, %v3980
    %v3982 = vsel %vm3954, %v3941, %v3939
    %v3983 = vsel %vm3956, %v3943, %v3982
    %v3984 = vsel %vm3958, %v3945, %v3983
    %v3987 = vsel %vm3965, %v3981, 0.0
    %v3988 = vsel %vm3965, %v3984, 0.0
    %v3989 = vadd.f32 %v3987, %v3988
    %3990 = vadd.xlane.f32.xlu0 %v3989
    %v3991 = vpop.xlane.xlu0 %3990
    %vm3992 = vcmask 7168
    %v3993 = vsel %vm3992, %v3970, %v3991
    %v3994 = vld [vmem:[%s3] sm:$0xf]
    %3996 = vset.pattern.permute.xlu0 6
    %3997 = vperm.xlu0 %3996, %v3994
    %v3998 = vpop.permute.xlu0 %3997
    %v4000 = vadd.f32 %v3993, %v3998
    %vm4001 = vcmask 11264
    %v4002 = vsel %vm4001, %v4000, -inf
    %v4003 = vrot.slane %v4002, 4
    %v4004 = vmax.f32 %v4002, %v4003
    %v4005 = vrot.slane %v4004, 2
    %v4006 = vmax.f32 %v4004, %v4005
    %v4007 = vrot.slane %v4006, 1
    %v4008 = vmax.f32 %v4006, %v4007
    %v4009 = vsub.f32 %v4000, %v4008
    %v4010 = vmul.f32 %v4009, 1.442695
    %v4011 = vpow.pop %v4010
    %v4012 = vsel %vm4001, %v4011, 0.0
    %v4013 = vrot.slane %v4012, 4
    %v4014 = vadd.f32 %v4012, %v4013
    %v4015 = vrot.slane %v4014, 2
    %v4016 = vadd.f32 %v4014, %v4015
    %v4017 = vrot.slane %v4016, 1
    %v4018 = vadd.f32 %v4016, %v4017
    %v4019 = vrcp.pop %v4018
    %v4020 = vmul.f32 %v4011, %v4019
    %4021 = vst.msk [vmem:[%s5] sm:$0xf] %vm4001, %v4020
    // Predicated region
    $region34: #{_lambda_.1} parent=1 // pred_check
      _
    $region35: #{_lambda_.1} parent=1 // pred_check_branch
      %4023 = sbr.rel (0) target = $region37
    $region36: #{_lambda_.1} parent=1 // pred_region
      _
    $region37: #{_lambda_.1} parent=1 // pred_fallthru
      _
    // Predicated region
    $region38: #{_lambda_.1} parent=1 // pred_check
      _
    $region39: #{_lambda_.1} parent=1 // pred_check_branch
      %4025 = sbr.rel (0) target = $region41
    $region40: #{_lambda_.1} parent=1 // pred_region
      _
    $region41: #{_lambda_.1} parent=1 // pred_fallthru
      _
    %4026 = vsyncpa [#allocation4], 1
    %4027 = vsyncpa [#allocation8], 1
    %4028 = vsyncpa [#allocation5], 1

</llo_original>
